<compile_context>
chip_gen: v6e
topology: v6e:2x2x1
jax: 0.10.0
libtpu: 0.0.40
codegen_flags: <defaults>
</compile_context>

<pallas_src>
import numpy as np

import jax
import jax.numpy as jnp
from jax.experimental import pallas as pl
from jax.experimental.pallas import tpu as pltpu

LN_EPS = 1e-5                       # torch.nn.LayerNorm default eps
_VMEM_BUDGET = 40 * 1024 * 1024     # conservative tile budget (fits v7x 64 MiB)


def _gelu_tanh(x):
    # tanh-approximate GELU (EUP transcendental); ~1e-3 max deviation from the
    # exact erf-based torch.nn.GELU().
    c = 0.7978845608028654  # sqrt(2/pi)
    return 0.5 * x * (1.0 + jnp.tanh(c * (x + 0.044715 * (x * x * x))))


def _layernorm_rows(x, gamma, beta):
    # LayerNorm over the last (lane) axis of a 2-D (rows, C) slab, f32.
    mu = jnp.mean(x, axis=-1, keepdims=True)
    xc = x - mu
    var = jnp.mean(xc * xc, axis=-1, keepdims=True)   # biased var, as in torch
    return xc * jax.lax.rsqrt(var + LN_EPS) * gamma + beta


def _text_attend_kernel(te_ref, x_ref,
                        wp_ref, bp_ref, gtok_ref, btok_ref,
                        wq_ref, bq_ref, wkv_ref, bkv_ref,
                        wo_ref, bo_ref, gn_ref, bn_ref,
                        w1_ref, b1_ref, w2_ref, b2_ref,
                        out_ref):
    Bt, N, F = te_ref.shape
    _, C, L = x_ref.shape

    # ---- project_layer (Linear + GELU) + norm_tokens, batch folded into M ----
    te = te_ref[...].reshape(Bt * N, F)                                # bf16
    t = jnp.dot(te, wp_ref[...], preferred_element_type=jnp.float32) + bp_ref[...]
    t = _gelu_tanh(t)
    t = _layernorm_rows(t, gtok_ref[...], btok_ref[...])               # (Bt*N, C) f32

    # ---- norm_x (affine folded into wkv/bkv), token-major via in-VMEM transpose ----
    xt = jnp.transpose(x_ref[...].astype(jnp.float32), (0, 2, 1)).reshape(Bt * L, C)
    mu = jnp.mean(xt, axis=-1, keepdims=True)
    xc = xt - mu
    var = jnp.mean(xc * xc, axis=-1, keepdims=True)
    xn = (xc * jax.lax.rsqrt(var + LN_EPS)).astype(jnp.bfloat16)        # (Bt*L, C)

    # ---- fused k|v projection: one 2-D MXU matmul with M = Bt*L ----
    kv = jnp.dot(xn, wkv_ref[...], preferred_element_type=jnp.float32) + bkv_ref[...]
    k3 = kv[:, :C].astype(jnp.bfloat16).reshape(Bt, L, C)
    v3 = kv[:, C:].astype(jnp.bfloat16).reshape(Bt, L, C)

    # ---- q projection (attention scale already folded into wq/bq) ----
    q = jnp.dot(t.astype(jnp.bfloat16), wq_ref[...],
                preferred_element_type=jnp.float32) + bq_ref[...]
    q3 = q.astype(jnp.bfloat16).reshape(Bt, N, C)

    # ---- raw attention logits: (Bt,N,C) x (Bt,L,C)^T -> (Bt,N,L) ----
    raw = jnp.einsum('bnc,blc->bnl', q3, k3, preferred_element_type=jnp.float32)

    # ---- hard_softmax over the group axis (axis=1) ----
    # Forward value of (y_hard - y_soft.detach() + y_soft) is exactly y_hard,
    # i.e. the one-hot (first-)argmax; the softmax work is skipped.
    m = jnp.max(raw, axis=1, keepdims=True)
    row_id = jax.lax.broadcasted_iota(jnp.int32, raw.shape, 1)
    masked = jnp.where(raw == m, row_id, N)
    first = jnp.min(masked, axis=1, keepdims=True)          # torch first-max tie-break
    hard = row_id == first                                  # one-hot over groups
    attn = hard.astype(jnp.bfloat16)

    # ---- attn @ v (unnormalized), then sum_assign=False scaling (eps=1.0) ----
    o3 = jnp.einsum('bnl,blc->bnc', attn, v3, preferred_element_type=jnp.float32)
    s = jnp.sum(hard.astype(jnp.float32), axis=-1, keepdims=True)       # (Bt,N,1)
    o3 = o3 * pl.reciprocal(s + 1.0, approx=True)

    # ---- output projection + residual ----
    o = jnp.dot(o3.reshape(Bt * N, C).astype(jnp.bfloat16), wo_ref[...],
                preferred_element_type=jnp.float32) + bo_ref[...]
    task_out = o + t

    # ---- reduction == nn.Identity() (out_dim == dim) + Mlp(norm_new_x(.)) ----
    h = _layernorm_rows(task_out, gn_ref[...], bn_ref[...])
    h = jnp.dot(h.astype(jnp.bfloat16), w1_ref[...],
                preferred_element_type=jnp.float32) + b1_ref[...]
    h = _gelu_tanh(h)
    h = jnp.dot(h.astype(jnp.bfloat16), w2_ref[...],
                preferred_element_type=jnp.float32) + b2_ref[...]

    # Lane-dense 2-D store, no in-kernel reshape.
    out_ref[...] = (task_out + h).astype(out_ref.dtype)


def _per_batch_vmem_bytes(N, F, C, L, hidden):
    """Rough per-batch-element VMEM footprint (double-buffered tiles + live slabs)."""
    bf2, f4 = 2, 4
    io = 2 * (N * F * bf2 + C * L * bf2 + N * C * f4)       # pipelined blocks (2 bufs)
    inter = L * C * (3 * f4 + 3 * bf2)                      # xt, kv, xn, k3, v3
    inter += N * L * (2 * f4 + bf2)                         # raw, argmax mask, attn
    inter += N * (6 * C + hidden) * f4 + N * F * bf2        # token-side slabs
    return io + inter


def _pick_batch_tile(B, N, per_batch_bytes, weight_bytes, budget, mxu_rows=256):
    """VMEM-aware batch tile: fill >=256 MXU rows if possible, keep grid >= 2."""
    def fits(d):
        return 2 * weight_bytes + d * per_batch_bytes <= budget

    def ok_shape(d):     # out block (d*N, C): d*N must be 8-aligned or full
        return d == B or (d * N) % 8 == 0

    cands = [d for d in range(1, B + 1) if B % d == 0 and ok_shape(d) and fits(d)]
    if not cands:
        cands = [1] if ok_shape(1) else [B]
    choice = next((d for d in cands if d * N >= mxu_rows), cands[-1])
    # keep >= 2 grid steps when possible so v7x's two TensorCores both get work
    if choice == B and B > 1:
        smaller = [d for d in cands if d < B]
        if smaller:
            choice = smaller[-1]
    return choice


def text_attend_forward(x, task_embs, params, b_tile=None):
    """x: [B, C, D1, D2, D3] f32; task_embs: [B, N, F] f32 -> [B, N, C] f32."""
    B, C = x.shape[0], x.shape[1]
    L = int(np.prod(x.shape[2:]))
    N, F = task_embs.shape[1], task_embs.shape[2]
    hidden = params["w1"].shape[1]
    scale = float(C) ** -0.5                   # num_heads=1 -> head_dim=C

    # ---- one-time host-side weight prep (tiny tensors) ----
    # Fold the attention scale into the q projection; fold the norm_x affine
    # (gx, bx) into the fused token-major k|v projection; cast MXU weights bf16.
    wq_s = (params["wq"] * scale).astype(jnp.bfloat16)
    bq_s = params["bq"] * scale
    wkv = jnp.concatenate([params["wk"], params["wv"]], axis=1)         # (C, 2C)
    bkv = jnp.concatenate([params["bk"], params["bv"]], axis=1)         # (1, 2C)
    bkv_f = params["bx"] @ wkv + bkv                                    # fold +bx
    wkv_f = (params["gx"].T * wkv).astype(jnp.bfloat16)                 # fold *gx

    plist = [
        params["wp"].astype(jnp.bfloat16), params["bp"],
        params["gt"], params["bt"],
        wq_s, bq_s, wkv_f, bkv_f,
        params["wo"].astype(jnp.bfloat16), params["bo"],
        params["gn"], params["bn"],
        params["w1"].astype(jnp.bfloat16), params["b1"],
        params["w2"].astype(jnp.bfloat16), params["b2"],
    ]

    # bf16 inputs for the MXU; x stays in its native [B, C, L] layout (pure
    # reshape of the 5-D input) -- the token-major transpose happens in-VMEM.
    x3 = x.reshape(B, C, L).astype(jnp.bfloat16)
    te = task_embs.astype(jnp.bfloat16)

    weight_bytes = sum(int(p.size) * p.dtype.itemsize for p in plist)
    per_b = _per_batch_vmem_bytes(N, F, C, L, hidden)
    if b_tile is None:
        b_tile = _pick_batch_tile(B, N, per_b, weight_bytes, _VMEM_BUDGET)
    est = 2 * weight_bytes + b_tile * per_b
    vmem_limit = int(min(64 * 2**20, max(32 * 2**20, 2 * est)))

    te_spec = pl.BlockSpec((b_tile, N, F), lambda i: (i, 0, 0))
    x_spec = pl.BlockSpec((b_tile, C, L), lambda i: (i, 0, 0))
    out_spec = pl.BlockSpec((b_tile * N, C), lambda i: (i, 0))

    def _call(buffered_weights):
        if buffered_weights:
            # Grid-invariant weights never need double buffering.
            w_specs = [pl.BlockSpec(p.shape, lambda i: (0, 0),
                                    pipeline_mode=pl.Buffered(1)) for p in plist]
        else:
            w_specs = [pl.BlockSpec(p.shape, lambda i: (0, 0)) for p in plist]
        grid_spec = pltpu.PrefetchScalarGridSpec(
            num_scalar_prefetch=0,
            grid=(B // b_tile,),
            in_specs=[te_spec, x_spec] + w_specs,
            out_specs=out_spec,
        )
        return pl.pallas_call(
            _text_attend_kernel,
            out_shape=jax.ShapeDtypeStruct((B * N, C), jnp.float32),
            grid_spec=grid_spec,
            compiler_params=pltpu.CompilerParams(
                dimension_semantics=("parallel",),
                vmem_limit_bytes=vmem_limit),
        )(te, x3, *plist)

    try:
        out2d = _call(True)       # single-buffered grid-invariant weights
    except Exception:
        out2d = _call(False)      # fallback: default double-buffering

    return out2d.reshape(B, N, C)


def init_params(key, C, F, hidden):
    """Deterministic synthetic parameters (same shapes as the torch module)."""
    ks = jax.random.split(key, 14)

    def w(k, shape, s=0.1):
        return jax.random.normal(k, shape, jnp.float32) * s

    ones = lambda n: jnp.ones((1, n), jnp.float32)
    zeros = lambda n: jnp.zeros((1, n), jnp.float32)
    return {
        # project_layer.0 : Linear(F, C)   (stored transposed: (in, out))
        "wp": w(ks[0], (F, C)), "bp": w(ks[1], (1, C), 0.02),
        # norm_tokens / norm_x : LayerNorm(C)
        "gt": ones(C), "bt": zeros(C),
        "gx": ones(C), "bx": zeros(C),
        # assign.{q,k,v}_proj : Linear(C, C, bias=True)
        "wq": w(ks[2], (C, C)), "bq": w(ks[3], (1, C), 0.02),
        "wk": w(ks[4], (C, C)), "bk": w(ks[5], (1, C), 0.02),
        "wv": w(ks[6], (C, C)), "bv": w(ks[7], (1, C), 0.02),
        # assign.proj : Linear(C, C)
        "wo": w(ks[8], (C, C)), "bo": w(ks[9], (1, C), 0.02),
        # norm_new_x : LayerNorm(C)
        "gn": ones(C), "bn": zeros(C),
        # mlp_channels : Linear(C, 4C) -> GELU -> Linear(4C, out_dim=C)
        "w1": w(ks[10], (C, hidden)), "b1": w(ks[11], (1, hidden), 0.02),
        "w2": w(ks[12], (hidden, C)), "b2": w(ks[13], (1, C), 0.02),
    }


if __name__ == "__main__":
    key = jax.random.PRNGKey(0)
    B, C, D1, D2, D3 = 2, 32, 4, 4, 4       # dim = out_dim = 32 -> reduction = Identity
    N, F = 8, 64                             # num task embeddings, in_features
    HIDDEN = 4 * C                           # mlp_ratio = 4

    k_x, k_t, k_p = jax.random.split(key, 3)
    x = jax.random.normal(k_x, (B, C, D1, D2, D3), jnp.float32)
    task_embs = jax.random.normal(k_t, (B, N, F), jnp.float32)
    params = init_params(k_p, C, F, HIDDEN)

    out = text_attend_forward(x, task_embs, params)
    out = jax.block_until_ready(out)

    assert out.shape == (B, N, C), out.shape
    assert bool(jnp.all(jnp.isfinite(out)))
    print("KERNEL_OK")
</pallas_src>

<mosaic_0001>
module attributes {stable_mosaic.version = 11 : i64} {
  func.func @_text_attend_kernel(%arg0: i32, %arg1: memref<1x8x64xbf16, #tpu.memory_space<vmem>>, %arg2: memref<1x32x64xbf16, #tpu.memory_space<vmem>>, %arg3: memref<64x32xbf16, #tpu.memory_space<vmem>>, %arg4: memref<1x32xf32, #tpu.memory_space<vmem>>, %arg5: memref<1x32xf32, #tpu.memory_space<vmem>>, %arg6: memref<1x32xf32, #tpu.memory_space<vmem>>, %arg7: memref<32x32xbf16, #tpu.memory_space<vmem>>, %arg8: memref<1x32xf32, #tpu.memory_space<vmem>>, %arg9: memref<32x64xbf16, #tpu.memory_space<vmem>>, %arg10: memref<1x64xf32, #tpu.memory_space<vmem>>, %arg11: memref<32x32xbf16, #tpu.memory_space<vmem>>, %arg12: memref<1x32xf32, #tpu.memory_space<vmem>>, %arg13: memref<1x32xf32, #tpu.memory_space<vmem>>, %arg14: memref<1x32xf32, #tpu.memory_space<vmem>>, %arg15: memref<32x128xbf16, #tpu.memory_space<vmem>>, %arg16: memref<1x128xf32, #tpu.memory_space<vmem>>, %arg17: memref<128x32xbf16, #tpu.memory_space<vmem>>, %arg18: memref<1x32xf32, #tpu.memory_space<vmem>>, %arg19: memref<8x32xf32, #tpu.memory_space<vmem>>) attributes {dimension_semantics = [#tpu.dimension_semantics<parallel>], iteration_bounds = array<i64: 2>, scalar_prefetch = 0 : i64, scratch_operands = 0 : i64, tpu.core_type = #tpu.core_type<tc>, window_params = [{transform_indices = @transform_0, window_bounds = array<i64: 1, 8, 64>}, {transform_indices = @transform_1, window_bounds = array<i64: 1, 32, 64>}, {pipeline_mode = #tpu.pipeline_mode<synchronous>, transform_indices = @transform_2, window_bounds = array<i64: 64, 32>}, {pipeline_mode = #tpu.pipeline_mode<synchronous>, transform_indices = @transform_3, window_bounds = array<i64: 1, 32>}, {pipeline_mode = #tpu.pipeline_mode<synchronous>, transform_indices = @transform_4, window_bounds = array<i64: 1, 32>}, {pipeline_mode = #tpu.pipeline_mode<synchronous>, transform_indices = @transform_5, window_bounds = array<i64: 1, 32>}, {pipeline_mode = #tpu.pipeline_mode<synchronous>, transform_indices = @transform_6, window_bounds = array<i64: 32, 32>}, {pipeline_mode = #tpu.pipeline_mode<synchronous>, transform_indices = @transform_7, window_bounds = array<i64: 1, 32>}, {pipeline_mode = #tpu.pipeline_mode<synchronous>, transform_indices = @transform_8, window_bounds = array<i64: 32, 64>}, {pipeline_mode = #tpu.pipeline_mode<synchronous>, transform_indices = @transform_9, window_bounds = array<i64: 1, 64>}, {pipeline_mode = #tpu.pipeline_mode<synchronous>, transform_indices = @transform_10, window_bounds = array<i64: 32, 32>}, {pipeline_mode = #tpu.pipeline_mode<synchronous>, transform_indices = @transform_11, window_bounds = array<i64: 1, 32>}, {pipeline_mode = #tpu.pipeline_mode<synchronous>, transform_indices = @transform_12, window_bounds = array<i64: 1, 32>}, {pipeline_mode = #tpu.pipeline_mode<synchronous>, transform_indices = @transform_13, window_bounds = array<i64: 1, 32>}, {pipeline_mode = #tpu.pipeline_mode<synchronous>, transform_indices = @transform_14, window_bounds = array<i64: 32, 128>}, {pipeline_mode = #tpu.pipeline_mode<synchronous>, transform_indices = @transform_15, window_bounds = array<i64: 1, 128>}, {pipeline_mode = #tpu.pipeline_mode<synchronous>, transform_indices = @transform_16, window_bounds = array<i64: 128, 32>}, {pipeline_mode = #tpu.pipeline_mode<synchronous>, transform_indices = @transform_17, window_bounds = array<i64: 1, 32>}, {transform_indices = @transform_18, window_bounds = array<i64: 8, 32>}]} {
    %c0 = arith.constant 0 : index
    %c0_0 = arith.constant 0 : index
    %c0_1 = arith.constant 0 : index
    %0 = vector.load %arg1[%c0, %c0_0, %c0_1] : memref<1x8x64xbf16, #tpu.memory_space<vmem>>, vector<1x8x64xbf16>
    %1 = vector.shape_cast %0 : vector<1x8x64xbf16> to vector<8x64xbf16>
    %c0_2 = arith.constant 0 : index
    %c0_3 = arith.constant 0 : index
    %2 = vector.load %arg3[%c0_2, %c0_3] : memref<64x32xbf16, #tpu.memory_space<vmem>>, vector<64x32xbf16>
    %cst = arith.constant dense<0.000000e+00> : vector<8x32xf32>
    %3 = tpu.matmul %1, %2, %cst {dimension_numbers = #tpu.dot_dimension_numbers<[1], [0], [0], [1], [0, 0, 1, 1], [], []>} : vector<8x64xbf16>, vector<64x32xbf16>, vector<8x32xf32> -> vector<8x32xf32>
    %c0_4 = arith.constant 0 : index
    %c0_5 = arith.constant 0 : index
    %4 = vector.load %arg4[%c0_4, %c0_5] : memref<1x32xf32, #tpu.memory_space<vmem>>, vector<1x32xf32>
    %5 = vector.broadcast %4 : vector<1x32xf32> to vector<8x32xf32>
    %6 = arith.addf %3, %5 : vector<8x32xf32>
    %cst_6 = arith.constant 5.000000e-01 : f32
    %7 = vector.broadcast %cst_6 : f32 to vector<8x32xf32>
    %8 = arith.mulf %7, %6 : vector<8x32xf32>
    %9 = arith.mulf %6, %6 : vector<8x32xf32>
    %10 = arith.mulf %9, %6 : vector<8x32xf32>
    %cst_7 = arith.constant 4.471500e-02 : f32
    %11 = vector.broadcast %cst_7 : f32 to vector<8x32xf32>
    %12 = arith.mulf %11, %10 : vector<8x32xf32>
    %13 = arith.addf %6, %12 : vector<8x32xf32>
    %cst_8 = arith.constant 0.797884583 : f32
    %14 = vector.broadcast %cst_8 : f32 to vector<8x32xf32>
    %15 = arith.mulf %14, %13 : vector<8x32xf32>
    %16 = math.tanh %15 : vector<8x32xf32>
    %cst_9 = arith.constant 1.000000e+00 : f32
    %17 = vector.broadcast %cst_9 : f32 to vector<8x32xf32>
    %18 = arith.addf %17, %16 : vector<8x32xf32>
    %19 = arith.mulf %8, %18 : vector<8x32xf32>
    %c0_10 = arith.constant 0 : index
    %c0_11 = arith.constant 0 : index
    %20 = vector.load %arg5[%c0_10, %c0_11] : memref<1x32xf32, #tpu.memory_space<vmem>>, vector<1x32xf32>
    %c0_12 = arith.constant 0 : index
    %c0_13 = arith.constant 0 : index
    %21 = vector.load %arg6[%c0_12, %c0_13] : memref<1x32xf32, #tpu.memory_space<vmem>>, vector<1x32xf32>
    %cst_14 = arith.constant dense<0.000000e+00> : vector<8xf32>
    %22 = vector.multi_reduction <add>, %19, %cst_14 [1] : vector<8x32xf32> to vector<8xf32>
    %23 = vector.shape_cast %22 : vector<8xf32> to vector<8x1xf32>
    %cst_15 = arith.constant 3.200000e+01 : f32
    %24 = vector.broadcast %cst_15 : f32 to vector<8x1xf32>
    %25 = arith.divf %23, %24 : vector<8x1xf32>
    %26 = vector.broadcast %25 : vector<8x1xf32> to vector<8x32xf32>
    %27 = arith.subf %19, %26 : vector<8x32xf32>
    %28 = arith.mulf %27, %27 : vector<8x32xf32>
    %cst_16 = arith.constant dense<0.000000e+00> : vector<8xf32>
    %29 = vector.multi_reduction <add>, %28, %cst_16 [1] : vector<8x32xf32> to vector<8xf32>
    %30 = vector.shape_cast %29 : vector<8xf32> to vector<8x1xf32>
    %cst_17 = arith.constant 3.200000e+01 : f32
    %31 = vector.broadcast %cst_17 : f32 to vector<8x1xf32>
    %32 = arith.divf %30, %31 : vector<8x1xf32>
    %cst_18 = arith.constant 9.99999974E-6 : f32
    %33 = vector.broadcast %cst_18 : f32 to vector<8x1xf32>
    %34 = arith.addf %32, %33 : vector<8x1xf32>
    %35 = math.rsqrt %34 : vector<8x1xf32>
    %36 = vector.broadcast %35 : vector<8x1xf32> to vector<8x32xf32>
    %37 = arith.mulf %27, %36 : vector<8x32xf32>
    %38 = vector.broadcast %20 : vector<1x32xf32> to vector<8x32xf32>
    %39 = arith.mulf %37, %38 : vector<8x32xf32>
    %40 = vector.broadcast %21 : vector<1x32xf32> to vector<8x32xf32>
    %41 = arith.addf %39, %40 : vector<8x32xf32>
    %c0_19 = arith.constant 0 : index
    %c0_20 = arith.constant 0 : index
    %c0_21 = arith.constant 0 : index
    %42 = vector.load %arg2[%c0_19, %c0_20, %c0_21] : memref<1x32x64xbf16, #tpu.memory_space<vmem>>, vector<1x32x64xbf16>
    %43 = arith.extf %42 : vector<1x32x64xbf16> to vector<1x32x64xf32>
    %44 = tpu.transpose %43, [0, 2, 1] : vector<1x32x64xf32> -> vector<1x64x32xf32>
    %45 = vector.shape_cast %44 : vector<1x64x32xf32> to vector<64x32xf32>
    %cst_22 = arith.constant dense<0.000000e+00> : vector<64xf32>
    %46 = vector.multi_reduction <add>, %45, %cst_22 [1] : vector<64x32xf32> to vector<64xf32>
    %47 = vector.shape_cast %46 : vector<64xf32> to vector<64x1xf32>
    %cst_23 = arith.constant 3.200000e+01 : f32
    %48 = vector.broadcast %cst_23 : f32 to vector<64x1xf32>
    %49 = arith.divf %47, %48 : vector<64x1xf32>
    %50 = vector.broadcast %49 : vector<64x1xf32> to vector<64x32xf32>
    %51 = arith.subf %45, %50 : vector<64x32xf32>
    %52 = arith.mulf %51, %51 : vector<64x32xf32>
    %cst_24 = arith.constant dense<0.000000e+00> : vector<64xf32>
    %53 = vector.multi_reduction <add>, %52, %cst_24 [1] : vector<64x32xf32> to vector<64xf32>
    %54 = vector.shape_cast %53 : vector<64xf32> to vector<64x1xf32>
    %cst_25 = arith.constant 3.200000e+01 : f32
    %55 = vector.broadcast %cst_25 : f32 to vector<64x1xf32>
    %56 = arith.divf %54, %55 : vector<64x1xf32>
    %cst_26 = arith.constant 9.99999974E-6 : f32
    %57 = vector.broadcast %cst_26 : f32 to vector<64x1xf32>
    %58 = arith.addf %56, %57 : vector<64x1xf32>
    %59 = math.rsqrt %58 : vector<64x1xf32>
    %60 = vector.broadcast %59 : vector<64x1xf32> to vector<64x32xf32>
    %61 = arith.mulf %51, %60 : vector<64x32xf32>
    %62 = arith.truncf %61 : vector<64x32xf32> to vector<64x32xbf16>
    %c0_27 = arith.constant 0 : index
    %c0_28 = arith.constant 0 : index
    %63 = vector.load %arg9[%c0_27, %c0_28] : memref<32x64xbf16, #tpu.memory_space<vmem>>, vector<32x64xbf16>
    %cst_29 = arith.constant dense<0.000000e+00> : vector<64x64xf32>
    %64 = tpu.matmul %62, %63, %cst_29 {dimension_numbers = #tpu.dot_dimension_numbers<[1], [0], [0], [1], [0, 0, 1, 1], [], []>} : vector<64x32xbf16>, vector<32x64xbf16>, vector<64x64xf32> -> vector<64x64xf32>
    %c0_30 = arith.constant 0 : index
    %c0_31 = arith.constant 0 : index
    %65 = vector.load %arg10[%c0_30, %c0_31] : memref<1x64xf32, #tpu.memory_space<vmem>>, vector<1x64xf32>
    %66 = vector.broadcast %65 : vector<1x64xf32> to vector<64x64xf32>
    %67 = arith.addf %64, %66 : vector<64x64xf32>
    %68 = vector.extract_strided_slice %67 {offsets = [0, 0], sizes = [64, 32], strides = [1, 1]} : vector<64x64xf32> to vector<64x32xf32>
    %69 = arith.truncf %68 : vector<64x32xf32> to vector<64x32xbf16>
    %70 = vector.shape_cast %69 : vector<64x32xbf16> to vector<1x64x32xbf16>
    %71 = vector.extract_strided_slice %67 {offsets = [0, 32], sizes = [64, 32], strides = [1, 1]} : vector<64x64xf32> to vector<64x32xf32>
    %72 = arith.truncf %71 : vector<64x32xf32> to vector<64x32xbf16>
    %73 = vector.shape_cast %72 : vector<64x32xbf16> to vector<1x64x32xbf16>
    %74 = arith.truncf %41 : vector<8x32xf32> to vector<8x32xbf16>
    %c0_32 = arith.constant 0 : index
    %c0_33 = arith.constant 0 : index
    %75 = vector.load %arg7[%c0_32, %c0_33] : memref<32x32xbf16, #tpu.memory_space<vmem>>, vector<32x32xbf16>
    %cst_34 = arith.constant dense<0.000000e+00> : vector<8x32xf32>
    %76 = tpu.matmul %74, %75, %cst_34 {dimension_numbers = #tpu.dot_dimension_numbers<[1], [0], [0], [1], [0, 0, 1, 1], [], []>} : vector<8x32xbf16>, vector<32x32xbf16>, vector<8x32xf32> -> vector<8x32xf32>
    %c0_35 = arith.constant 0 : index
    %c0_36 = arith.constant 0 : index
    %77 = vector.load %arg8[%c0_35, %c0_36] : memref<1x32xf32, #tpu.memory_space<vmem>>, vector<1x32xf32>
    %78 = vector.broadcast %77 : vector<1x32xf32> to vector<8x32xf32>
    %79 = arith.addf %76, %78 : vector<8x32xf32>
    %80 = arith.truncf %79 : vector<8x32xf32> to vector<8x32xbf16>
    %81 = vector.shape_cast %80 : vector<8x32xbf16> to vector<1x8x32xbf16>
    "tpu.trace_start"() <{level = 10 : i32, message = "bnc,blc->bnl"}> : () -> ()
    %cst_37 = arith.constant dense<0.000000e+00> : vector<1x8x64xf32>
    %82 = tpu.matmul %81, %70, %cst_37 {dimension_numbers = #tpu.dot_dimension_numbers<[2], [2], [1], [1], [0, 0, 0, 1, 1, 1], [0], [0]>} : vector<1x8x32xbf16>, vector<1x64x32xbf16>, vector<1x8x64xf32> -> vector<1x8x64xf32>
    "tpu.trace_stop"() : () -> ()
    %cst_38 = arith.constant dense<0xFF800000> : vector<1x64xf32>
    %83 = vector.multi_reduction <maximumf>, %82, %cst_38 [1] : vector<1x8x64xf32> to vector<1x64xf32>
    %84 = vector.shape_cast %83 : vector<1x64xf32> to vector<1x1x64xf32>
    %85 = tpu.iota {dimensions = array<i32: 1>} : vector<1x8x64xi32>
    %86 = vector.broadcast %84 : vector<1x1x64xf32> to vector<1x8x64xf32>
    %87 = arith.cmpf oeq, %82, %86 : vector<1x8x64xf32>
    %c8_i32 = arith.constant 8 : i32
    %88 = vector.broadcast %c8_i32 : i32 to vector<1x8x64xi32>
    %89 = arith.select %87, %85, %88 : vector<1x8x64xi1>, vector<1x8x64xi32>
    %cst_39 = arith.constant dense<2147483647> : vector<1x64xi32>
    %90 = vector.multi_reduction <minsi>, %89, %cst_39 [1] : vector<1x8x64xi32> to vector<1x64xi32>
    %91 = vector.shape_cast %90 : vector<1x64xi32> to vector<1x1x64xi32>
    %92 = vector.broadcast %91 : vector<1x1x64xi32> to vector<1x8x64xi32>
    %93 = arith.cmpi eq, %85, %92 : vector<1x8x64xi32>
    %94 = arith.extui %93 : vector<1x8x64xi1> to vector<1x8x64xi32>
    %95 = arith.sitofp %94 : vector<1x8x64xi32> to vector<1x8x64xf32>
    %96 = arith.truncf %95 : vector<1x8x64xf32> to vector<1x8x64xbf16>
    "tpu.trace_start"() <{level = 10 : i32, message = "bnl,blc->bnc"}> : () -> ()
    %cst_40 = arith.constant dense<0.000000e+00> : vector<1x8x32xf32>
    %97 = tpu.matmul %96, %73, %cst_40 {dimension_numbers = #tpu.dot_dimension_numbers<[2], [1], [1], [2], [0, 0, 0, 1, 1, 2], [0], [0]>} : vector<1x8x64xbf16>, vector<1x64x32xbf16>, vector<1x8x32xf32> -> vector<1x8x32xf32>
    "tpu.trace_stop"() : () -> ()
    %98 = arith.extui %93 : vector<1x8x64xi1> to vector<1x8x64xi32>
    %99 = arith.sitofp %98 : vector<1x8x64xi32> to vector<1x8x64xf32>
    %cst_41 = arith.constant dense<0.000000e+00> : vector<1x8xf32>
    %100 = vector.multi_reduction <add>, %99, %cst_41 [2] : vector<1x8x64xf32> to vector<1x8xf32>
    %101 = vector.shape_cast %100 : vector<1x8xf32> to vector<1x8x1xf32>
    %cst_42 = arith.constant 1.000000e+00 : f32
    %102 = vector.broadcast %cst_42 : f32 to vector<1x8x1xf32>
    %103 = arith.addf %101, %102 : vector<1x8x1xf32>
    %104 = tpu.reciprocal %103 {approx = true} : vector<1x8x1xf32> -> vector<1x8x1xf32>
    %105 = vector.broadcast %104 : vector<1x8x1xf32> to vector<1x8x32xf32>
    %106 = arith.mulf %97, %105 : vector<1x8x32xf32>
    %107 = vector.shape_cast %106 : vector<1x8x32xf32> to vector<8x32xf32>
    %108 = arith.truncf %107 : vector<8x32xf32> to vector<8x32xbf16>
    %c0_43 = arith.constant 0 : index
    %c0_44 = arith.constant 0 : index
    %109 = vector.load %arg11[%c0_43, %c0_44] : memref<32x32xbf16, #tpu.memory_space<vmem>>, vector<32x32xbf16>
    %cst_45 = arith.constant dense<0.000000e+00> : vector<8x32xf32>
    %110 = tpu.matmul %108, %109, %cst_45 {dimension_numbers = #tpu.dot_dimension_numbers<[1], [0], [0], [1], [0, 0, 1, 1], [], []>} : vector<8x32xbf16>, vector<32x32xbf16>, vector<8x32xf32> -> vector<8x32xf32>
    %c0_46 = arith.constant 0 : index
    %c0_47 = arith.constant 0 : index
    %111 = vector.load %arg12[%c0_46, %c0_47] : memref<1x32xf32, #tpu.memory_space<vmem>>, vector<1x32xf32>
    %112 = vector.broadcast %111 : vector<1x32xf32> to vector<8x32xf32>
    %113 = arith.addf %110, %112 : vector<8x32xf32>
    %114 = arith.addf %113, %41 : vector<8x32xf32>
    %c0_48 = arith.constant 0 : index
    %c0_49 = arith.constant 0 : index
    %115 = vector.load %arg13[%c0_48, %c0_49] : memref<1x32xf32, #tpu.memory_space<vmem>>, vector<1x32xf32>
    %c0_50 = arith.constant 0 : index
    %c0_51 = arith.constant 0 : index
    %116 = vector.load %arg14[%c0_50, %c0_51] : memref<1x32xf32, #tpu.memory_space<vmem>>, vector<1x32xf32>
    %cst_52 = arith.constant dense<0.000000e+00> : vector<8xf32>
    %117 = vector.multi_reduction <add>, %114, %cst_52 [1] : vector<8x32xf32> to vector<8xf32>
    %118 = vector.shape_cast %117 : vector<8xf32> to vector<8x1xf32>
    %cst_53 = arith.constant 3.200000e+01 : f32
    %119 = vector.broadcast %cst_53 : f32 to vector<8x1xf32>
    %120 = arith.divf %118, %119 : vector<8x1xf32>
    %121 = vector.broadcast %120 : vector<8x1xf32> to vector<8x32xf32>
    %122 = arith.subf %114, %121 : vector<8x32xf32>
    %123 = arith.mulf %122, %122 : vector<8x32xf32>
    %cst_54 = arith.constant dense<0.000000e+00> : vector<8xf32>
    %124 = vector.multi_reduction <add>, %123, %cst_54 [1] : vector<8x32xf32> to vector<8xf32>
    %125 = vector.shape_cast %124 : vector<8xf32> to vector<8x1xf32>
    %cst_55 = arith.constant 3.200000e+01 : f32
    %126 = vector.broadcast %cst_55 : f32 to vector<8x1xf32>
    %127 = arith.divf %125, %126 : vector<8x1xf32>
    %cst_56 = arith.constant 9.99999974E-6 : f32
    %128 = vector.broadcast %cst_56 : f32 to vector<8x1xf32>
    %129 = arith.addf %127, %128 : vector<8x1xf32>
    %130 = math.rsqrt %129 : vector<8x1xf32>
    %131 = vector.broadcast %130 : vector<8x1xf32> to vector<8x32xf32>
    %132 = arith.mulf %122, %131 : vector<8x32xf32>
    %133 = vector.broadcast %115 : vector<1x32xf32> to vector<8x32xf32>
    %134 = arith.mulf %132, %133 : vector<8x32xf32>
    %135 = vector.broadcast %116 : vector<1x32xf32> to vector<8x32xf32>
    %136 = arith.addf %134, %135 : vector<8x32xf32>
    %137 = arith.truncf %136 : vector<8x32xf32> to vector<8x32xbf16>
    %c0_57 = arith.constant 0 : index
    %c0_58 = arith.constant 0 : index
    %138 = vector.load %arg15[%c0_57, %c0_58] : memref<32x128xbf16, #tpu.memory_space<vmem>>, vector<32x128xbf16>
    %cst_59 = arith.constant dense<0.000000e+00> : vector<8x128xf32>
    %139 = tpu.matmul %137, %138, %cst_59 {dimension_numbers = #tpu.dot_dimension_numbers<[1], [0], [0], [1], [0, 0, 1, 1], [], []>} : vector<8x32xbf16>, vector<32x128xbf16>, vector<8x128xf32> -> vector<8x128xf32>
    %c0_60 = arith.constant 0 : index
    %c0_61 = arith.constant 0 : index
    %140 = vector.load %arg16[%c0_60, %c0_61] : memref<1x128xf32, #tpu.memory_space<vmem>>, vector<1x128xf32>
    %141 = vector.broadcast %140 : vector<1x128xf32> to vector<8x128xf32>
    %142 = arith.addf %139, %141 : vector<8x128xf32>
    %cst_62 = arith.constant 5.000000e-01 : f32
    %143 = vector.broadcast %cst_62 : f32 to vector<8x128xf32>
    %144 = arith.mulf %143, %142 : vector<8x128xf32>
    %145 = arith.mulf %142, %142 : vector<8x128xf32>
    %146 = arith.mulf %145, %142 : vector<8x128xf32>
    %cst_63 = arith.constant 4.471500e-02 : f32
    %147 = vector.broadcast %cst_63 : f32 to vector<8x128xf32>
    %148 = arith.mulf %147, %146 : vector<8x128xf32>
    %149 = arith.addf %142, %148 : vector<8x128xf32>
    %cst_64 = arith.constant 0.797884583 : f32
    %150 = vector.broadcast %cst_64 : f32 to vector<8x128xf32>
    %151 = arith.mulf %150, %149 : vector<8x128xf32>
    %152 = math.tanh %151 : vector<8x128xf32>
    %cst_65 = arith.constant 1.000000e+00 : f32
    %153 = vector.broadcast %cst_65 : f32 to vector<8x128xf32>
    %154 = arith.addf %153, %152 : vector<8x128xf32>
    %155 = arith.mulf %144, %154 : vector<8x128xf32>
    %156 = arith.truncf %155 : vector<8x128xf32> to vector<8x128xbf16>
    %c0_66 = arith.constant 0 : index
    %c0_67 = arith.constant 0 : index
    %157 = vector.load %arg17[%c0_66, %c0_67] : memref<128x32xbf16, #tpu.memory_space<vmem>>, vector<128x32xbf16>
    %cst_68 = arith.constant dense<0.000000e+00> : vector<8x32xf32>
    %158 = tpu.matmul %156, %157, %cst_68 {dimension_numbers = #tpu.dot_dimension_numbers<[1], [0], [0], [1], [0, 0, 1, 1], [], []>} : vector<8x128xbf16>, vector<128x32xbf16>, vector<8x32xf32> -> vector<8x32xf32>
    %c0_69 = arith.constant 0 : index
    %c0_70 = arith.constant 0 : index
    %159 = vector.load %arg18[%c0_69, %c0_70] : memref<1x32xf32, #tpu.memory_space<vmem>>, vector<1x32xf32>
    %160 = vector.broadcast %159 : vector<1x32xf32> to vector<8x32xf32>
    %161 = arith.addf %158, %160 : vector<8x32xf32>
    %162 = arith.addf %114, %161 : vector<8x32xf32>
    %c0_71 = arith.constant 0 : index
    %c0_72 = arith.constant 0 : index
    %163 = vector.load %arg19[%c0_71, %c0_72] : memref<8x32xf32, #tpu.memory_space<vmem>>, vector<8x32xf32>
    tpu.vector_store %arg19[%c0_71, %c0_72], %162 {strides = array<i32>} : memref<8x32xf32, #tpu.memory_space<vmem>>, vector<8x32xf32>,
    return
  }
  func.func @transform_0(%arg0: i32) -> (i32, i32, i32) {
    %c0_i32 = arith.constant 0 : i32
    %c0_i32_0 = arith.constant 0 : i32
    %c0_i32_1 = arith.constant 0 : i32
    return %arg0, %c0_i32, %c0_i32_0 : i32, i32, i32
  }
  func.func @transform_1(%arg0: i32) -> (i32, i32, i32) {
    %c0_i32 = arith.constant 0 : i32
    %c0_i32_0 = arith.constant 0 : i32
    %c0_i32_1 = arith.constant 0 : i32
    return %arg0, %c0_i32, %c0_i32_0 : i32, i32, i32
  }
  func.func @transform_2(%arg0: i32) -> (i32, i32) {
    %c0_i32 = arith.constant 0 : i32
    %c0_i32_0 = arith.constant 0 : i32
    %c0_i32_1 = arith.constant 0 : i32
    return %c0_i32, %c0_i32_0 : i32, i32
  }
  func.func @transform_3(%arg0: i32) -> (i32, i32) {
    %c0_i32 = arith.constant 0 : i32
    %c0_i32_0 = arith.constant 0 : i32
    %c0_i32_1 = arith.constant 0 : i32
    return %c0_i32, %c0_i32_0 : i32, i32
  }
  func.func @transform_4(%arg0: i32) -> (i32, i32) {
    %c0_i32 = arith.constant 0 : i32
    %c0_i32_0 = arith.constant 0 : i32
    %c0_i32_1 = arith.constant 0 : i32
    return %c0_i32, %c0_i32_0 : i32, i32
  }
  func.func @transform_5(%arg0: i32) -> (i32, i32) {
    %c0_i32 = arith.constant 0 : i32
    %c0_i32_0 = arith.constant 0 : i32
    %c0_i32_1 = arith.constant 0 : i32
    return %c0_i32, %c0_i32_0 : i32, i32
  }
  func.func @transform_6(%arg0: i32) -> (i32, i32) {
    %c0_i32 = arith.constant 0 : i32
    %c0_i32_0 = arith.constant 0 : i32
    %c0_i32_1 = arith.constant 0 : i32
    return %c0_i32, %c0_i32_0 : i32, i32
  }
  func.func @transform_7(%arg0: i32) -> (i32, i32) {
    %c0_i32 = arith.constant 0 : i32
    %c0_i32_0 = arith.constant 0 : i32
    %c0_i32_1 = arith.constant 0 : i32
    return %c0_i32, %c0_i32_0 : i32, i32
  }
  func.func @transform_8(%arg0: i32) -> (i32, i32) {
    %c0_i32 = arith.constant 0 : i32
    %c0_i32_0 = arith.constant 0 : i32
    %c0_i32_1 = arith.constant 0 : i32
    return %c0_i32, %c0_i32_0 : i32, i32
  }
  func.func @transform_9(%arg0: i32) -> (i32, i32) {
    %c0_i32 = arith.constant 0 : i32
    %c0_i32_0 = arith.constant 0 : i32
    %c0_i32_1 = arith.constant 0 : i32
    return %c0_i32, %c0_i32_0 : i32, i32
  }
  func.func @transform_10(%arg0: i32) -> (i32, i32) {
    %c0_i32 = arith.constant 0 : i32
    %c0_i32_0 = arith.constant 0 : i32
    %c0_i32_1 = arith.constant 0 : i32
    return %c0_i32, %c0_i32_0 : i32, i32
  }
  func.func @transform_11(%arg0: i32) -> (i32, i32) {
    %c0_i32 = arith.constant 0 : i32
    %c0_i32_0 = arith.constant 0 : i32
    %c0_i32_1 = arith.constant 0 : i32
    return %c0_i32, %c0_i32_0 : i32, i32
  }
  func.func @transform_12(%arg0: i32) -> (i32, i32) {
    %c0_i32 = arith.constant 0 : i32
    %c0_i32_0 = arith.constant 0 : i32
    %c0_i32_1 = arith.constant 0 : i32
    return %c0_i32, %c0_i32_0 : i32, i32
  }
  func.func @transform_13(%arg0: i32) -> (i32, i32) {
    %c0_i32 = arith.constant 0 : i32
    %c0_i32_0 = arith.constant 0 : i32
    %c0_i32_1 = arith.constant 0 : i32
    return %c0_i32, %c0_i32_0 : i32, i32
  }
  func.func @transform_14(%arg0: i32) -> (i32, i32) {
    %c0_i32 = arith.constant 0 : i32
    %c0_i32_0 = arith.constant 0 : i32
    %c0_i32_1 = arith.constant 0 : i32
    return %c0_i32, %c0_i32_0 : i32, i32
  }
  func.func @transform_15(%arg0: i32) -> (i32, i32) {
    %c0_i32 = arith.constant 0 : i32
    %c0_i32_0 = arith.constant 0 : i32
    %c0_i32_1 = arith.constant 0 : i32
    return %c0_i32, %c0_i32_0 : i32, i32
  }
  func.func @transform_16(%arg0: i32) -> (i32, i32) {
    %c0_i32 = arith.constant 0 : i32
    %c0_i32_0 = arith.constant 0 : i32
    %c0_i32_1 = arith.constant 0 : i32
    return %c0_i32, %c0_i32_0 : i32, i32
  }
  func.func @transform_17(%arg0: i32) -> (i32, i32) {
    %c0_i32 = arith.constant 0 : i32
    %c0_i32_0 = arith.constant 0 : i32
    %c0_i32_1 = arith.constant 0 : i32
    return %c0_i32, %c0_i32_0 : i32, i32
  }
  func.func @transform_18(%arg0: i32) -> (i32, i32) {
    %c0_i32 = arith.constant 0 : i32
    %c0_i32_0 = arith.constant 0 : i32
    return %arg0, %c0_i32 : i32, i32
  }
}

module attributes {stable_mosaic.version = 11 : i64} {
  func.func @_text_attend_kernel(%arg0: i32, %arg1: memref<1x8x64xbf16, #tpu.memory_space<vmem>>, %arg2: memref<1x32x64xbf16, #tpu.memory_space<vmem>>, %arg3: memref<64x32xbf16, #tpu.memory_space<vmem>>, %arg4: memref<1x32xf32, #tpu.memory_space<vmem>>, %arg5: memref<1x32xf32, #tpu.memory_space<vmem>>, %arg6: memref<1x32xf32, #tpu.memory_space<vmem>>, %arg7: memref<32x32xbf16, #tpu.memory_space<vmem>>, %arg8: memref<1x32xf32, #tpu.memory_space<vmem>>, %arg9: memref<32x64xbf16, #tpu.memory_space<vmem>>, %arg10: memref<1x64xf32, #tpu.memory_space<vmem>>, %arg11: memref<32x32xbf16, #tpu.memory_space<vmem>>, %arg12: memref<1x32xf32, #tpu.memory_space<vmem>>, %arg13: memref<1x32xf32, #tpu.memory_space<vmem>>, %arg14: memref<1x32xf32, #tpu.memory_space<vmem>>, %arg15: memref<32x128xbf16, #tpu.memory_space<vmem>>, %arg16: memref<1x128xf32, #tpu.memory_space<vmem>>, %arg17: memref<128x32xbf16, #tpu.memory_space<vmem>>, %arg18: memref<1x32xf32, #tpu.memory_space<vmem>>, %arg19: memref<8x32xf32, #tpu.memory_space<vmem>>) attributes {dimension_semantics = [#tpu.dimension_semantics<parallel>], iteration_bounds = array<i64: 2>, scalar_prefetch = 0 : i64, scratch_operands = 0 : i64, tpu.core_type = #tpu.core_type<tc>, window_params = [{transform_indices = @transform_0, window_bounds = array<i64: 1, 8, 64>}, {transform_indices = @transform_1, window_bounds = array<i64: 1, 32, 64>}, {pipeline_mode = #tpu.pipeline_mode<synchronous>, transform_indices = @transform_2, window_bounds = array<i64: 64, 32>}, {pipeline_mode = #tpu.pipeline_mode<synchronous>, transform_indices = @transform_3, window_bounds = array<i64: 1, 32>}, {pipeline_mode = #tpu.pipeline_mode<synchronous>, transform_indices = @transform_4, window_bounds = array<i64: 1, 32>}, {pipeline_mode = #tpu.pipeline_mode<synchronous>, transform_indices = @transform_5, window_bounds = array<i64: 1, 32>}, {pipeline_mode = #tpu.pipeline_mode<synchronous>, transform_indices = @transform_6, window_bounds = array<i64: 32, 32>}, {pipeline_mode = #tpu.pipeline_mode<synchronous>, transform_indices = @transform_7, window_bounds = array<i64: 1, 32>}, {pipeline_mode = #tpu.pipeline_mode<synchronous>, transform_indices = @transform_8, window_bounds = array<i64: 32, 64>}, {pipeline_mode = #tpu.pipeline_mode<synchronous>, transform_indices = @transform_9, window_bounds = array<i64: 1, 64>}, {pipeline_mode = #tpu.pipeline_mode<synchronous>, transform_indices = @transform_10, window_bounds = array<i64: 32, 32>}, {pipeline_mode = #tpu.pipeline_mode<synchronous>, transform_indices = @transform_11, window_bounds = array<i64: 1, 32>}, {pipeline_mode = #tpu.pipeline_mode<synchronous>, transform_indices = @transform_12, window_bounds = array<i64: 1, 32>}, {pipeline_mode = #tpu.pipeline_mode<synchronous>, transform_indices = @transform_13, window_bounds = array<i64: 1, 32>}, {pipeline_mode = #tpu.pipeline_mode<synchronous>, transform_indices = @transform_14, window_bounds = array<i64: 32, 128>}, {pipeline_mode = #tpu.pipeline_mode<synchronous>, transform_indices = @transform_15, window_bounds = array<i64: 1, 128>}, {pipeline_mode = #tpu.pipeline_mode<synchronous>, transform_indices = @transform_16, window_bounds = array<i64: 128, 32>}, {pipeline_mode = #tpu.pipeline_mode<synchronous>, transform_indices = @transform_17, window_bounds = array<i64: 1, 32>}, {transform_indices = @transform_18, window_bounds = array<i64: 8, 32>}]} {
    %c0 = arith.constant 0 : index
    %c0_0 = arith.constant 0 : index
    %c0_1 = arith.constant 0 : index
    %0 = vector.load %arg1[%c0, %c0_0, %c0_1] : memref<1x8x64xbf16, #tpu.memory_space<vmem>>, vector<1x8x64xbf16>
    %1 = vector.shape_cast %0 : vector<1x8x64xbf16> to vector<8x64xbf16>
    %c0_2 = arith.constant 0 : index
    %c0_3 = arith.constant 0 : index
    %2 = vector.load %arg3[%c0_2, %c0_3] : memref<64x32xbf16, #tpu.memory_space<vmem>>, vector<64x32xbf16>
    %cst = arith.constant dense<0.000000e+00> : vector<8x32xf32>
    %3 = tpu.matmul %1, %2, %cst {dimension_numbers = #tpu.dot_dimension_numbers<[1], [0], [0], [1], [0, 0, 1, 1], [], []>} : vector<8x64xbf16>, vector<64x32xbf16>, vector<8x32xf32> -> vector<8x32xf32>
    %c0_4 = arith.constant 0 : index
    %c0_5 = arith.constant 0 : index
    %4 = vector.load %arg4[%c0_4, %c0_5] : memref<1x32xf32, #tpu.memory_space<vmem>>, vector<1x32xf32>
    %5 = vector.broadcast %4 : vector<1x32xf32> to vector<8x32xf32>
    %6 = arith.addf %3, %5 : vector<8x32xf32>
    %cst_6 = arith.constant 5.000000e-01 : f32
    %7 = vector.broadcast %cst_6 : f32 to vector<8x32xf32>
    %8 = arith.mulf %7, %6 : vector<8x32xf32>
    %9 = arith.mulf %6, %6 : vector<8x32xf32>
    %10 = arith.mulf %9, %6 : vector<8x32xf32>
    %cst_7 = arith.constant 4.471500e-02 : f32
    %11 = vector.broadcast %cst_7 : f32 to vector<8x32xf32>
    %12 = arith.mulf %11, %10 : vector<8x32xf32>
    %13 = arith.addf %6, %12 : vector<8x32xf32>
    %cst_8 = arith.constant 0.797884583 : f32
    %14 = vector.broadcast %cst_8 : f32 to vector<8x32xf32>
    %15 = arith.mulf %14, %13 : vector<8x32xf32>
    %16 = math.tanh %15 : vector<8x32xf32>
    %cst_9 = arith.constant 1.000000e+00 : f32
    %17 = vector.broadcast %cst_9 : f32 to vector<8x32xf32>
    %18 = arith.addf %17, %16 : vector<8x32xf32>
    %19 = arith.mulf %8, %18 : vector<8x32xf32>
    %c0_10 = arith.constant 0 : index
    %c0_11 = arith.constant 0 : index
    %20 = vector.load %arg5[%c0_10, %c0_11] : memref<1x32xf32, #tpu.memory_space<vmem>>, vector<1x32xf32>
    %c0_12 = arith.constant 0 : index
    %c0_13 = arith.constant 0 : index
    %21 = vector.load %arg6[%c0_12, %c0_13] : memref<1x32xf32, #tpu.memory_space<vmem>>, vector<1x32xf32>
    %cst_14 = arith.constant dense<0.000000e+00> : vector<8xf32>
    %22 = vector.multi_reduction <add>, %19, %cst_14 [1] : vector<8x32xf32> to vector<8xf32>
    %23 = vector.shape_cast %22 : vector<8xf32> to vector<8x1xf32>
    %cst_15 = arith.constant 3.200000e+01 : f32
    %24 = vector.broadcast %cst_15 : f32 to vector<8x1xf32>
    %25 = arith.divf %23, %24 : vector<8x1xf32>
    %26 = vector.broadcast %25 : vector<8x1xf32> to vector<8x32xf32>
    %27 = arith.subf %19, %26 : vector<8x32xf32>
    %28 = arith.mulf %27, %27 : vector<8x32xf32>
    %cst_16 = arith.constant dense<0.000000e+00> : vector<8xf32>
    %29 = vector.multi_reduction <add>, %28, %cst_16 [1] : vector<8x32xf32> to vector<8xf32>
    %30 = vector.shape_cast %29 : vector<8xf32> to vector<8x1xf32>
    %cst_17 = arith.constant 3.200000e+01 : f32
    %31 = vector.broadcast %cst_17 : f32 to vector<8x1xf32>
    %32 = arith.divf %30, %31 : vector<8x1xf32>
    %cst_18 = arith.constant 9.99999974E-6 : f32
    %33 = vector.broadcast %cst_18 : f32 to vector<8x1xf32>
    %34 = arith.addf %32, %33 : vector<8x1xf32>
    %35 = math.rsqrt %34 : vector<8x1xf32>
    %36 = vector.broadcast %35 : vector<8x1xf32> to vector<8x32xf32>
    %37 = arith.mulf %27, %36 : vector<8x32xf32>
    %38 = vector.broadcast %20 : vector<1x32xf32> to vector<8x32xf32>
    %39 = arith.mulf %37, %38 : vector<8x32xf32>
    %40 = vector.broadcast %21 : vector<1x32xf32> to vector<8x32xf32>
    %41 = arith.addf %39, %40 : vector<8x32xf32>
    %c0_19 = arith.constant 0 : index
    %c0_20 = arith.constant 0 : index
    %c0_21 = arith.constant 0 : index
    %42 = vector.load %arg2[%c0_19, %c0_20, %c0_21] : memref<1x32x64xbf16, #tpu.memory_space<vmem>>, vector<1x32x64xbf16>
    %43 = arith.extf %42 : vector<1x32x64xbf16> to vector<1x32x64xf32>
    %44 = tpu.transpose %43, [0, 2, 1] : vector<1x32x64xf32> -> vector<1x64x32xf32>
    %45 = vector.shape_cast %44 : vector<1x64x32xf32> to vector<64x32xf32>
    %cst_22 = arith.constant dense<0.000000e+00> : vector<64xf32>
    %46 = vector.multi_reduction <add>, %45, %cst_22 [1] : vector<64x32xf32> to vector<64xf32>
    %47 = vector.shape_cast %46 : vector<64xf32> to vector<64x1xf32>
    %cst_23 = arith.constant 3.200000e+01 : f32
    %48 = vector.broadcast %cst_23 : f32 to vector<64x1xf32>
    %49 = arith.divf %47, %48 : vector<64x1xf32>
    %50 = vector.broadcast %49 : vector<64x1xf32> to vector<64x32xf32>
    %51 = arith.subf %45, %50 : vector<64x32xf32>
    %52 = arith.mulf %51, %51 : vector<64x32xf32>
    %cst_24 = arith.constant dense<0.000000e+00> : vector<64xf32>
    %53 = vector.multi_reduction <add>, %52, %cst_24 [1] : vector<64x32xf32> to vector<64xf32>
    %54 = vector.shape_cast %53 : vector<64xf32> to vector<64x1xf32>
    %cst_25 = arith.constant 3.200000e+01 : f32
    %55 = vector.broadcast %cst_25 : f32 to vector<64x1xf32>
    %56 = arith.divf %54, %55 : vector<64x1xf32>
    %cst_26 = arith.constant 9.99999974E-6 : f32
    %57 = vector.broadcast %cst_26 : f32 to vector<64x1xf32>
    %58 = arith.addf %56, %57 : vector<64x1xf32>
    %59 = math.rsqrt %58 : vector<64x1xf32>
    %60 = vector.broadcast %59 : vector<64x1xf32> to vector<64x32xf32>
    %61 = arith.mulf %51, %60 : vector<64x32xf32>
    %62 = arith.truncf %61 : vector<64x32xf32> to vector<64x32xbf16>
    %c0_27 = arith.constant 0 : index
    %c0_28 = arith.constant 0 : index
    %63 = vector.load %arg9[%c0_27, %c0_28] : memref<32x64xbf16, #tpu.memory_space<vmem>>, vector<32x64xbf16>
    %cst_29 = arith.constant dense<0.000000e+00> : vector<64x64xf32>
    %64 = tpu.matmul %62, %63, %cst_29 {dimension_numbers = #tpu.dot_dimension_numbers<[1], [0], [0], [1], [0, 0, 1, 1], [], []>} : vector<64x32xbf16>, vector<32x64xbf16>, vector<64x64xf32> -> vector<64x64xf32>
    %c0_30 = arith.constant 0 : index
    %c0_31 = arith.constant 0 : index
    %65 = vector.load %arg10[%c0_30, %c0_31] : memref<1x64xf32, #tpu.memory_space<vmem>>, vector<1x64xf32>
    %66 = vector.broadcast %65 : vector<1x64xf32> to vector<64x64xf32>
    %67 = arith.addf %64, %66 : vector<64x64xf32>
    %68 = vector.extract_strided_slice %67 {offsets = [0, 0], sizes = [64, 32], strides = [1, 1]} : vector<64x64xf32> to vector<64x32xf32>
    %69 = arith.truncf %68 : vector<64x32xf32> to vector<64x32xbf16>
    %70 = vector.shape_cast %69 : vector<64x32xbf16> to vector<1x64x32xbf16>
    %71 = vector.extract_strided_slice %67 {offsets = [0, 32], sizes = [64, 32], strides = [1, 1]} : vector<64x64xf32> to vector<64x32xf32>
    %72 = arith.truncf %71 : vector<64x32xf32> to vector<64x32xbf16>
    %73 = vector.shape_cast %72 : vector<64x32xbf16> to vector<1x64x32xbf16>
    %74 = arith.truncf %41 : vector<8x32xf32> to vector<8x32xbf16>
    %c0_32 = arith.constant 0 : index
    %c0_33 = arith.constant 0 : index
    %75 = vector.load %arg7[%c0_32, %c0_33] : memref<32x32xbf16, #tpu.memory_space<vmem>>, vector<32x32xbf16>
    %cst_34 = arith.constant dense<0.000000e+00> : vector<8x32xf32>
    %76 = tpu.matmul %74, %75, %cst_34 {dimension_numbers = #tpu.dot_dimension_numbers<[1], [0], [0], [1], [0, 0, 1, 1], [], []>} : vector<8x32xbf16>, vector<32x32xbf16>, vector<8x32xf32> -> vector<8x32xf32>
    %c0_35 = arith.constant 0 : index
    %c0_36 = arith.constant 0 : index
    %77 = vector.load %arg8[%c0_35, %c0_36] : memref<1x32xf32, #tpu.memory_space<vmem>>, vector<1x32xf32>
    %78 = vector.broadcast %77 : vector<1x32xf32> to vector<8x32xf32>
    %79 = arith.addf %76, %78 : vector<8x32xf32>
    %80 = arith.truncf %79 : vector<8x32xf32> to vector<8x32xbf16>
    %81 = vector.shape_cast %80 : vector<8x32xbf16> to vector<1x8x32xbf16>
    "tpu.trace_start"() <{level = 10 : i32, message = "bnc,blc->bnl"}> : () -> ()
    %cst_37 = arith.constant dense<0.000000e+00> : vector<1x8x64xf32>
    %82 = tpu.matmul %81, %70, %cst_37 {dimension_numbers = #tpu.dot_dimension_numbers<[2], [2], [1], [1], [0, 0, 0, 1, 1, 1], [0], [0]>} : vector<1x8x32xbf16>, vector<1x64x32xbf16>, vector<1x8x64xf32> -> vector<1x8x64xf32>
    "tpu.trace_stop"() : () -> ()
    %cst_38 = arith.constant dense<0xFF800000> : vector<1x64xf32>
    %83 = vector.multi_reduction <maximumf>, %82, %cst_38 [1] : vector<1x8x64xf32> to vector<1x64xf32>
    %84 = vector.shape_cast %83 : vector<1x64xf32> to vector<1x1x64xf32>
    %85 = tpu.iota {dimensions = array<i32: 1>} : vector<1x8x64xi32>
    %86 = vector.broadcast %84 : vector<1x1x64xf32> to vector<1x8x64xf32>
    %87 = arith.cmpf oeq, %82, %86 : vector<1x8x64xf32>
    %c8_i32 = arith.constant 8 : i32
    %88 = vector.broadcast %c8_i32 : i32 to vector<1x8x64xi32>
    %89 = arith.select %87, %85, %88 : vector<1x8x64xi1>, vector<1x8x64xi32>
    %cst_39 = arith.constant dense<2147483647> : vector<1x64xi32>
    %90 = vector.multi_reduction <minsi>, %89, %cst_39 [1] : vector<1x8x64xi32> to vector<1x64xi32>
    %91 = vector.shape_cast %90 : vector<1x64xi32> to vector<1x1x64xi32>
    %92 = vector.broadcast %91 : vector<1x1x64xi32> to vector<1x8x64xi32>
    %93 = arith.cmpi eq, %85, %92 : vector<1x8x64xi32>
    %94 = arith.extui %93 : vector<1x8x64xi1> to vector<1x8x64xi32>
    %95 = arith.sitofp %94 : vector<1x8x64xi32> to vector<1x8x64xf32>
    %96 = arith.truncf %95 : vector<1x8x64xf32> to vector<1x8x64xbf16>
    "tpu.trace_start"() <{level = 10 : i32, message = "bnl,blc->bnc"}> : () -> ()
    %cst_40 = arith.constant dense<0.000000e+00> : vector<1x8x32xf32>
    %97 = tpu.matmul %96, %73, %cst_40 {dimension_numbers = #tpu.dot_dimension_numbers<[2], [1], [1], [2], [0, 0, 0, 1, 1, 2], [0], [0]>} : vector<1x8x64xbf16>, vector<1x64x32xbf16>, vector<1x8x32xf32> -> vector<1x8x32xf32>
    "tpu.trace_stop"() : () -> ()
    %98 = arith.extui %93 : vector<1x8x64xi1> to vector<1x8x64xi32>
    %99 = arith.sitofp %98 : vector<1x8x64xi32> to vector<1x8x64xf32>
    %cst_41 = arith.constant dense<0.000000e+00> : vector<1x8xf32>
    %100 = vector.multi_reduction <add>, %99, %cst_41 [2] : vector<1x8x64xf32> to vector<1x8xf32>
    %101 = vector.shape_cast %100 : vector<1x8xf32> to vector<1x8x1xf32>
    %cst_42 = arith.constant 1.000000e+00 : f32
    %102 = vector.broadcast %cst_42 : f32 to vector<1x8x1xf32>
    %103 = arith.addf %101, %102 : vector<1x8x1xf32>
    %104 = tpu.reciprocal %103 {approx = true} : vector<1x8x1xf32> -> vector<1x8x1xf32>
    %105 = vector.broadcast %104 : vector<1x8x1xf32> to vector<1x8x32xf32>
    %106 = arith.mulf %97, %105 : vector<1x8x32xf32>
    %107 = vector.shape_cast %106 : vector<1x8x32xf32> to vector<8x32xf32>
    %108 = arith.truncf %107 : vector<8x32xf32> to vector<8x32xbf16>
    %c0_43 = arith.constant 0 : index
    %c0_44 = arith.constant 0 : index
    %109 = vector.load %arg11[%c0_43, %c0_44] : memref<32x32xbf16, #tpu.memory_space<vmem>>, vector<32x32xbf16>
    %cst_45 = arith.constant dense<0.000000e+00> : vector<8x32xf32>
    %110 = tpu.matmul %108, %109, %cst_45 {dimension_numbers = #tpu.dot_dimension_numbers<[1], [0], [0], [1], [0, 0, 1, 1], [], []>} : vector<8x32xbf16>, vector<32x32xbf16>, vector<8x32xf32> -> vector<8x32xf32>
    %c0_46 = arith.constant 0 : index
    %c0_47 = arith.constant 0 : index
    %111 = vector.load %arg12[%c0_46, %c0_47] : memref<1x32xf32, #tpu.memory_space<vmem>>, vector<1x32xf32>
    %112 = vector.broadcast %111 : vector<1x32xf32> to vector<8x32xf32>
    %113 = arith.addf %110, %112 : vector<8x32xf32>
    %114 = arith.addf %113, %41 : vector<8x32xf32>
    %c0_48 = arith.constant 0 : index
    %c0_49 = arith.constant 0 : index
    %115 = vector.load %arg13[%c0_48, %c0_49] : memref<1x32xf32, #tpu.memory_space<vmem>>, vector<1x32xf32>
    %c0_50 = arith.constant 0 : index
    %c0_51 = arith.constant 0 : index
    %116 = vector.load %arg14[%c0_50, %c0_51] : memref<1x32xf32, #tpu.memory_space<vmem>>, vector<1x32xf32>
    %cst_52 = arith.constant dense<0.000000e+00> : vector<8xf32>
    %117 = vector.multi_reduction <add>, %114, %cst_52 [1] : vector<8x32xf32> to vector<8xf32>
    %118 = vector.shape_cast %117 : vector<8xf32> to vector<8x1xf32>
    %cst_53 = arith.constant 3.200000e+01 : f32
    %119 = vector.broadcast %cst_53 : f32 to vector<8x1xf32>
    %120 = arith.divf %118, %119 : vector<8x1xf32>
    %121 = vector.broadcast %120 : vector<8x1xf32> to vector<8x32xf32>
    %122 = arith.subf %114, %121 : vector<8x32xf32>
    %123 = arith.mulf %122, %122 : vector<8x32xf32>
    %cst_54 = arith.constant dense<0.000000e+00> : vector<8xf32>
    %124 = vector.multi_reduction <add>, %123, %cst_54 [1] : vector<8x32xf32> to vector<8xf32>
    %125 = vector.shape_cast %124 : vector<8xf32> to vector<8x1xf32>
    %cst_55 = arith.constant 3.200000e+01 : f32
    %126 = vector.broadcast %cst_55 : f32 to vector<8x1xf32>
    %127 = arith.divf %125, %126 : vector<8x1xf32>
    %cst_56 = arith.constant 9.99999974E-6 : f32
    %128 = vector.broadcast %cst_56 : f32 to vector<8x1xf32>
    %129 = arith.addf %127, %128 : vector<8x1xf32>
    %130 = math.rsqrt %129 : vector<8x1xf32>
    %131 = vector.broadcast %130 : vector<8x1xf32> to vector<8x32xf32>
    %132 = arith.mulf %122, %131 : vector<8x32xf32>
    %133 = vector.broadcast %115 : vector<1x32xf32> to vector<8x32xf32>
    %134 = arith.mulf %132, %133 : vector<8x32xf32>
    %135 = vector.broadcast %116 : vector<1x32xf32> to vector<8x32xf32>
    %136 = arith.addf %134, %135 : vector<8x32xf32>
    %137 = arith.truncf %136 : vector<8x32xf32> to vector<8x32xbf16>
    %c0_57 = arith.constant 0 : index
    %c0_58 = arith.constant 0 : index
    %138 = vector.load %arg15[%c0_57, %c0_58] : memref<32x128xbf16, #tpu.memory_space<vmem>>, vector<32x128xbf16>
    %cst_59 = arith.constant dense<0.000000e+00> : vector<8x128xf32>
    %139 = tpu.matmul %137, %138, %cst_59 {dimension_numbers = #tpu.dot_dimension_numbers<[1], [0], [0], [1], [0, 0, 1, 1], [], []>} : vector<8x32xbf16>, vector<32x128xbf16>, vector<8x128xf32> -> vector<8x128xf32>
    %c0_60 = arith.constant 0 : index
    %c0_61 = arith.constant 0 : index
    %140 = vector.load %arg16[%c0_60, %c0_61] : memref<1x128xf32, #tpu.memory_space<vmem>>, vector<1x128xf32>
    %141 = vector.broadcast %140 : vector<1x128xf32> to vector<8x128xf32>
    %142 = arith.addf %139, %141 : vector<8x128xf32>
    %cst_62 = arith.constant 5.000000e-01 : f32
    %143 = vector.broadcast %cst_62 : f32 to vector<8x128xf32>
    %144 = arith.mulf %143, %142 : vector<8x128xf32>
    %145 = arith.mulf %142, %142 : vector<8x128xf32>
    %146 = arith.mulf %145, %142 : vector<8x128xf32>
    %cst_63 = arith.constant 4.471500e-02 : f32
    %147 = vector.broadcast %cst_63 : f32 to vector<8x128xf32>
    %148 = arith.mulf %147, %146 : vector<8x128xf32>
    %149 = arith.addf %142, %148 : vector<8x128xf32>
    %cst_64 = arith.constant 0.797884583 : f32
    %150 = vector.broadcast %cst_64 : f32 to vector<8x128xf32>
    %151 = arith.mulf %150, %149 : vector<8x128xf32>
    %152 = math.tanh %151 : vector<8x128xf32>
    %cst_65 = arith.constant 1.000000e+00 : f32
    %153 = vector.broadcast %cst_65 : f32 to vector<8x128xf32>
    %154 = arith.addf %153, %152 : vector<8x128xf32>
    %155 = arith.mulf %144, %154 : vector<8x128xf32>
    %156 = arith.truncf %155 : vector<8x128xf32> to vector<8x128xbf16>
    %c0_66 = arith.constant 0 : index
    %c0_67 = arith.constant 0 : index
    %157 = vector.load %arg17[%c0_66, %c0_67] : memref<128x32xbf16, #tpu.memory_space<vmem>>, vector<128x32xbf16>
    %cst_68 = arith.constant dense<0.000000e+00> : vector<8x32xf32>
    %158 = tpu.matmul %156, %157, %cst_68 {dimension_numbers = #tpu.dot_dimension_numbers<[1], [0], [0], [1], [0, 0, 1, 1], [], []>} : vector<8x128xbf16>, vector<128x32xbf16>, vector<8x32xf32> -> vector<8x32xf32>
    %c0_69 = arith.constant 0 : index
    %c0_70 = arith.constant 0 : index
    %159 = vector.load %arg18[%c0_69, %c0_70] : memref<1x32xf32, #tpu.memory_space<vmem>>, vector<1x32xf32>
    %160 = vector.broadcast %159 : vector<1x32xf32> to vector<8x32xf32>
    %161 = arith.addf %158, %160 : vector<8x32xf32>
    %162 = arith.addf %114, %161 : vector<8x32xf32>
    %c0_71 = arith.constant 0 : index
    %c0_72 = arith.constant 0 : index
    %163 = vector.load %arg19[%c0_71, %c0_72] : memref<8x32xf32, #tpu.memory_space<vmem>>, vector<8x32xf32>
    tpu.vector_store %arg19[%c0_71, %c0_72], %162 {strides = array<i32>} : memref<8x32xf32, #tpu.memory_space<vmem>>, vector<8x32xf32>,
    return
  }
  func.func @transform_0(%arg0: i32) -> (i32, i32, i32) {
    %c0_i32 = arith.constant 0 : i32
    %c0_i32_0 = arith.constant 0 : i32
    %c0_i32_1 = arith.constant 0 : i32
    return %arg0, %c0_i32, %c0_i32_0 : i32, i32, i32
  }
  func.func @transform_1(%arg0: i32) -> (i32, i32, i32) {
    %c0_i32 = arith.constant 0 : i32
    %c0_i32_0 = arith.constant 0 : i32
    %c0_i32_1 = arith.constant 0 : i32
    return %arg0, %c0_i32, %c0_i32_0 : i32, i32, i32
  }
  func.func @transform_2(%arg0: i32) -> (i32, i32) {
    %c0_i32 = arith.constant 0 : i32
    %c0_i32_0 = arith.constant 0 : i32
    %c0_i32_1 = arith.constant 0 : i32
    return %c0_i32, %c0_i32_0 : i32, i32
  }
  func.func @transform_3(%arg0: i32) -> (i32, i32) {
    %c0_i32 = arith.constant 0 : i32
    %c0_i32_0 = arith.constant 0 : i32
    %c0_i32_1 = arith.constant 0 : i32
    return %c0_i32, %c0_i32_0 : i32, i32
  }
  func.func @transform_4(%arg0: i32) -> (i32, i32) {
    %c0_i32 = arith.constant 0 : i32
    %c0_i32_0 = arith.constant 0 : i32
    %c0_i32_1 = arith.constant 0 : i32
    return %c0_i32, %c0_i32_0 : i32, i32
  }
  func.func @transform_5(%arg0: i32) -> (i32, i32) {
    %c0_i32 = arith.constant 0 : i32
    %c0_i32_0 = arith.constant 0 : i32
    %c0_i32_1 = arith.constant 0 : i32
    return %c0_i32, %c0_i32_0 : i32, i32
  }
  func.func @transform_6(%arg0: i32) -> (i32, i32) {
    %c0_i32 = arith.constant 0 : i32
    %c0_i32_0 = arith.constant 0 : i32
    %c0_i32_1 = arith.constant 0 : i32
    return %c0_i32, %c0_i32_0 : i32, i32
  }
  func.func @transform_7(%arg0: i32) -> (i32, i32) {
    %c0_i32 = arith.constant 0 : i32
    %c0_i32_0 = arith.constant 0 : i32
    %c0_i32_1 = arith.constant 0 : i32
    return %c0_i32, %c0_i32_0 : i32, i32
  }
  func.func @transform_8(%arg0: i32) -> (i32, i32) {
    %c0_i32 = arith.constant 0 : i32
    %c0_i32_0 = arith.constant 0 : i32
    %c0_i32_1 = arith.constant 0 : i32
    return %c0_i32, %c0_i32_0 : i32, i32
  }
  func.func @transform_9(%arg0: i32) -> (i32, i32) {
    %c0_i32 = arith.constant 0 : i32
    %c0_i32_0 = arith.constant 0 : i32
    %c0_i32_1 = arith.constant 0 : i32
    return %c0_i32, %c0_i32_0 : i32, i32
  }
  func.func @transform_10(%arg0: i32) -> (i32, i32) {
    %c0_i32 = arith.constant 0 : i32
    %c0_i32_0 = arith.constant 0 : i32
    %c0_i32_1 = arith.constant 0 : i32
    return %c0_i32, %c0_i32_0 : i32, i32
  }
  func.func @transform_11(%arg0: i32) -> (i32, i32) {
    %c0_i32 = arith.constant 0 : i32
    %c0_i32_0 = arith.constant 0 : i32
    %c0_i32_1 = arith.constant 0 : i32
    return %c0_i32, %c0_i32_0 : i32, i32
  }
  func.func @transform_12(%arg0: i32) -> (i32, i32) {
    %c0_i32 = arith.constant 0 : i32
    %c0_i32_0 = arith.constant 0 : i32
    %c0_i32_1 = arith.constant 0 : i32
    return %c0_i32, %c0_i32_0 : i32, i32
  }
  func.func @transform_13(%arg0: i32) -> (i32, i32) {
    %c0_i32 = arith.constant 0 : i32
    %c0_i32_0 = arith.constant 0 : i32
    %c0_i32_1 = arith.constant 0 : i32
    return %c0_i32, %c0_i32_0 : i32, i32
  }
  func.func @transform_14(%arg0: i32) -> (i32, i32) {
    %c0_i32 = arith.constant 0 : i32
    %c0_i32_0 = arith.constant 0 : i32
    %c0_i32_1 = arith.constant 0 : i32
    return %c0_i32, %c0_i32_0 : i32, i32
  }
  func.func @transform_15(%arg0: i32) -> (i32, i32) {
    %c0_i32 = arith.constant 0 : i32
    %c0_i32_0 = arith.constant 0 : i32
    %c0_i32_1 = arith.constant 0 : i32
    return %c0_i32, %c0_i32_0 : i32, i32
  }
  func.func @transform_16(%arg0: i32) -> (i32, i32) {
    %c0_i32 = arith.constant 0 : i32
    %c0_i32_0 = arith.constant 0 : i32
    %c0_i32_1 = arith.constant 0 : i32
    return %c0_i32, %c0_i32_0 : i32, i32
  }
  func.func @transform_17(%arg0: i32) -> (i32, i32) {
    %c0_i32 = arith.constant 0 : i32
    %c0_i32_0 = arith.constant 0 : i32
    %c0_i32_1 = arith.constant 0 : i32
    return %c0_i32, %c0_i32_0 : i32, i32
  }
  func.func @transform_18(%arg0: i32) -> (i32, i32) {
    %c0_i32 = arith.constant 0 : i32
    %c0_i32_0 = arith.constant 0 : i32
    return %arg0, %c0_i32 : i32, i32
  }
}

</mosaic_0001>

<llo_original>
// kernel: tpu_custom_call.1
$region0: #{tpu_custom_call.1}
  #allocation0 [shape = 'u32[]', space=smem, size = 0x4, offset = 0x4, fixed_abs, tag = 'smem constant byte address 0x4 - core index']
  #allocation1 [shape = 'u32[144,128]{1,0:T(1,128)}', space=vmem, size = 0x12000, scoped, tag = 'internal scratch']
  %s0 = inlined_call_operand.vmem [shape: bf16[2,8,64], index: 0, kind: input, shape index: {}]
  %s1 = inlined_call_operand.vmem [shape: bf16[2,32,64], index: 1, kind: input, shape index: {}]
  %s2 = inlined_call_operand.vmem [shape: bf16[64,32], index: 2, kind: input, shape index: {}]
  %s3 = inlined_call_operand.vmem [shape: f32[1,32], index: 3, kind: input, shape index: {}]
  %s4 = inlined_call_operand.vmem [shape: f32[1,32], index: 4, kind: input, shape index: {}]
  %s5 = inlined_call_operand.vmem [shape: f32[1,32], index: 5, kind: input, shape index: {}]
  %s6 = inlined_call_operand.vmem [shape: bf16[32,32], index: 6, kind: input, shape index: {}]
  %s7 = inlined_call_operand.vmem [shape: f32[1,32], index: 7, kind: input, shape index: {}]
  %s8 = inlined_call_operand.vmem [shape: bf16[32,64], index: 8, kind: input, shape index: {}]
  %s9 = inlined_call_operand.vmem [shape: f32[1,64], index: 9, kind: input, shape index: {}]
  %s10 = inlined_call_operand.vmem [shape: bf16[32,32], index: 10, kind: input, shape index: {}]
  %s11 = inlined_call_operand.vmem [shape: f32[1,32], index: 11, kind: input, shape index: {}]
  %s12 = inlined_call_operand.vmem [shape: f32[1,32], index: 12, kind: input, shape index: {}]
  %s13 = inlined_call_operand.vmem [shape: f32[1,32], index: 13, kind: input, shape index: {}]
  %s14 = inlined_call_operand.vmem [shape: bf16[32,128], index: 14, kind: input, shape index: {}]
  %s15 = inlined_call_operand.vmem [shape: f32[1,128], index: 15, kind: input, shape index: {}]
  %s16 = inlined_call_operand.vmem [shape: bf16[128,32], index: 16, kind: input, shape index: {}]
  %s17 = inlined_call_operand.vmem [shape: f32[1,32], index: 17, kind: input, shape index: {}]
  %s18 = inlined_call_operand.hbm [shape: f32[16,32], index: 18, kind: output, shape index: {}]
  %s19 = sld [smem:[#allocation0]]
  $region105: #{tpu_custom_call.1} parent=0
    _
  %s21 = ssub.s32 1, %s19
  %s22 = scalar_select 0, %s21, %s19
  $region1: #{tpu_custom_call.1} parent=0
    #allocation2 [shape = 'u8[8192]{0}', space=vmem, size = 0x2000, scoped, tag = 'output window, operand 0']
    #allocation3 [shape = 's32[2]{0}', space=sflag, size = 0x8, scoped, tag = 'scoped memory for tpu_custom_call.1']
    %23 = vsyncpa [#allocation3], 0
    %s24 = scalar_lea.sflag [#allocation3], 1
    %25 = vsyncpa %s24, 0
    loop: start=0, step=1, limit=4
    $region2: #{tpu_custom_call.1} parent=1 // loop_pre_header
      _
    $region3: #{tpu_custom_call.1} parent=1 // loop_header
      %s27 = sphi 0, %s31
      %p28 = scmp.ge.s32.totalorder %s27, 4
      %s37 = sphi 0, %s39
      %s40 = sphi 0, %s37
      %s41 = sphi 0, %s40
      %s57 = sphi 0, %s41
      %s63 = sphi 0, %s65
      %s66 = sphi 0, %s63
      %s67 = sphi 0, %s66
      %s83 = sphi 0, %s67
      %s87 = sphi 0, %s87
      %s89 = sphi 0, %s87
      %s90 = sphi 0, %s89
      %s104 = sphi 0, %s90
      %s108 = sphi 0, %s108
      %s110 = sphi 0, %s108
      %s111 = sphi 0, %s110
      %s125 = sphi 0, %s111
      %s129 = sphi 0, %s129
      %s131 = sphi 0, %s129
      %s132 = sphi 0, %s131
      %s146 = sphi 0, %s132
      %s150 = sphi 0, %s150
      %s152 = sphi 0, %s150
      %s153 = sphi 0, %s152
      %s167 = sphi 0, %s153
      %s171 = sphi 0, %s171
      %s173 = sphi 0, %s171
      %s174 = sphi 0, %s173
      %s188 = sphi 0, %s174
      %s192 = sphi 0, %s192
      %s194 = sphi 0, %s192
      %s195 = sphi 0, %s194
      %s209 = sphi 0, %s195
      %s213 = sphi 0, %s213
      %s215 = sphi 0, %s213
      %s216 = sphi 0, %s215
      %s230 = sphi 0, %s216
      %s234 = sphi 0, %s234
      %s236 = sphi 0, %s234
      %s237 = sphi 0, %s236
      %s251 = sphi 0, %s237
      %s255 = sphi 0, %s255
      %s257 = sphi 0, %s255
      %s258 = sphi 0, %s257
      %s272 = sphi 0, %s258
      %s276 = sphi 0, %s276
      %s278 = sphi 0, %s276
      %s279 = sphi 0, %s278
      %s293 = sphi 0, %s279
      %s297 = sphi 0, %s297
      %s299 = sphi 0, %s297
      %s300 = sphi 0, %s299
      %s314 = sphi 0, %s300
      %s318 = sphi 0, %s318
      %s320 = sphi 0, %s318
      %s321 = sphi 0, %s320
      %s335 = sphi 0, %s321
      %s339 = sphi 0, %s339
      %s341 = sphi 0, %s339
      %s342 = sphi 0, %s341
      %s356 = sphi 0, %s342
      %s360 = sphi 0, %s360
      %s362 = sphi 0, %s360
      %s363 = sphi 0, %s362
      %s377 = sphi 0, %s363
      %s381 = sphi 0, %s381
      %s383 = sphi 0, %s381
      %s384 = sphi 0, %s383
      %s398 = sphi 0, %s384
      %s402 = sphi 0, %s402
      %s404 = sphi 0, %s402
      %s405 = sphi 0, %s404
      %s419 = sphi 0, %s405
      %s425 = sphi 0, %s427
      %s428 = sphi 0, %s425
      %s429 = sphi 0, %s428
      %s445 = sphi 0, %s429
    $region4: #{tpu_custom_call.1} parent=1 // loop_header_branch
      %30 = sbr.rel (%p28) target = $region8
    $region5: #{tpu_custom_call.1} parent=1 // loop_body
      %s32 = ssub.s32 %s27, 1
      %s33 = ssub.s32 %s27, 2
      %s34 = sadd.s32 %s27, 1
      %s35 = ssub.s32 %s27, %s34
      %p36 = scmp.eq.s32.totalorder %s35, 0
      %s38 = sadd.s32 %s37, 1
      %s39 = scalar_select %p36, %s37, %s38
      %p42 = pneg %p36
      %p43 = scmp.eq.s32.totalorder %s27, 1
      %p44 = por %p42, %p43
      %p45 = scmp.ne.s32.totalorder %s37, %s40
      %p46 = scmp.eq.s32.totalorder %s27, 0
      %p47 = por %p45, %p46
      %p48 = scmp.ne.s32.totalorder %s37, %s40
      %p49 = scmp.eq.s32.totalorder %s32, 1
      %p50 = por %p48, %p49
      %p51 = scmp.ne.s32.totalorder %s40, %s41
      %p52 = scmp.eq.s32.totalorder %s32, 0
      %p53 = por %p51, %p52
      %p54 = scmp.ne.s32.totalorder %s40, %s41
      %p55 = scmp.eq.s32.totalorder %s33, 1
      %p56 = por %p54, %p55
      %p58 = scmp.ne.s32.totalorder %s41, %s57
      %p59 = scmp.eq.s32.totalorder %s33, 0
      %p60 = por %p58, %p59
      %s61 = ssub.s32 %s27, %s34
      %p62 = scmp.eq.s32.totalorder %s61, 0
      %s64 = sadd.s32 %s63, 1
      %s65 = scalar_select %p62, %s63, %s64
      %p68 = pneg %p62
      %p69 = scmp.eq.s32.totalorder %s27, 1
      %p70 = por %p68, %p69
      %p71 = scmp.ne.s32.totalorder %s63, %s66
      %p72 = scmp.eq.s32.totalorder %s27, 0
      %p73 = por %p71, %p72
      %p74 = scmp.ne.s32.totalorder %s63, %s66
      %p75 = scmp.eq.s32.totalorder %s32, 1
      %p76 = por %p74, %p75
      %p77 = scmp.ne.s32.totalorder %s66, %s67
      %p78 = scmp.eq.s32.totalorder %s32, 0
      %p79 = por %p77, %p78
      %p80 = scmp.ne.s32.totalorder %s66, %s67
      %p81 = scmp.eq.s32.totalorder %s33, 1
      %p82 = por %p80, %p81
      %p84 = scmp.ne.s32.totalorder %s67, %s83
      %p85 = scmp.eq.s32.totalorder %s33, 0
      %p86 = por %p84, %p85
      %s88 = sadd.s32 %s87, 1
      %p91 = scmp.eq.s32.totalorder %s27, 1
      %p92 = scmp.ne.s32.totalorder %s87, %s89
      %p93 = scmp.eq.s32.totalorder %s27, 0
      %p94 = por %p92, %p93
      %p95 = scmp.ne.s32.totalorder %s87, %s89
      %p96 = scmp.eq.s32.totalorder %s32, 1
      %p97 = por %p95, %p96
      %p98 = scmp.ne.s32.totalorder %s89, %s90
      %p99 = scmp.eq.s32.totalorder %s32, 0
      %p100 = por %p98, %p99
      %p101 = scmp.ne.s32.totalorder %s89, %s90
      %p102 = scmp.eq.s32.totalorder %s33, 1
      %p103 = por %p101, %p102
      %p105 = scmp.ne.s32.totalorder %s90, %s104
      %p106 = scmp.eq.s32.totalorder %s33, 0
      %p107 = por %p105, %p106
      %s109 = sadd.s32 %s108, 1
      %p112 = scmp.eq.s32.totalorder %s27, 1
      %p113 = scmp.ne.s32.totalorder %s108, %s110
      %p114 = scmp.eq.s32.totalorder %s27, 0
      %p115 = por %p113, %p114
      %p116 = scmp.ne.s32.totalorder %s108, %s110
      %p117 = scmp.eq.s32.totalorder %s32, 1
      %p118 = por %p116, %p117
      %p119 = scmp.ne.s32.totalorder %s110, %s111
      %p120 = scmp.eq.s32.totalorder %s32, 0
      %p121 = por %p119, %p120
      %p122 = scmp.ne.s32.totalorder %s110, %s111
      %p123 = scmp.eq.s32.totalorder %s33, 1
      %p124 = por %p122, %p123
      %p126 = scmp.ne.s32.totalorder %s111, %s125
      %p127 = scmp.eq.s32.totalorder %s33, 0
      %p128 = por %p126, %p127
      %s130 = sadd.s32 %s129, 1
      %p133 = scmp.eq.s32.totalorder %s27, 1
      %p134 = scmp.ne.s32.totalorder %s129, %s131
      %p135 = scmp.eq.s32.totalorder %s27, 0
      %p136 = por %p134, %p135
      %p137 = scmp.ne.s32.totalorder %s129, %s131
      %p138 = scmp.eq.s32.totalorder %s32, 1
      %p139 = por %p137, %p138
      %p140 = scmp.ne.s32.totalorder %s131, %s132
      %p141 = scmp.eq.s32.totalorder %s32, 0
      %p142 = por %p140, %p141
      %p143 = scmp.ne.s32.totalorder %s131, %s132
      %p144 = scmp.eq.s32.totalorder %s33, 1
      %p145 = por %p143, %p144
      %p147 = scmp.ne.s32.totalorder %s132, %s146
      %p148 = scmp.eq.s32.totalorder %s33, 0
      %p149 = por %p147, %p148
      %s151 = sadd.s32 %s150, 1
      %p154 = scmp.eq.s32.totalorder %s27, 1
      %p155 = scmp.ne.s32.totalorder %s150, %s152
      %p156 = scmp.eq.s32.totalorder %s27, 0
      %p157 = por %p155, %p156
      %p158 = scmp.ne.s32.totalorder %s150, %s152
      %p159 = scmp.eq.s32.totalorder %s32, 1
      %p160 = por %p158, %p159
      %p161 = scmp.ne.s32.totalorder %s152, %s153
      %p162 = scmp.eq.s32.totalorder %s32, 0
      %p163 = por %p161, %p162
      %p164 = scmp.ne.s32.totalorder %s152, %s153
      %p165 = scmp.eq.s32.totalorder %s33, 1
      %p166 = por %p164, %p165
      %p168 = scmp.ne.s32.totalorder %s153, %s167
      %p169 = scmp.eq.s32.totalorder %s33, 0
      %p170 = por %p168, %p169
      %s172 = sadd.s32 %s171, 1
      %p175 = scmp.eq.s32.totalorder %s27, 1
      %p176 = scmp.ne.s32.totalorder %s171, %s173
      %p177 = scmp.eq.s32.totalorder %s27, 0
      %p178 = por %p176, %p177
      %p179 = scmp.ne.s32.totalorder %s171, %s173
      %p180 = scmp.eq.s32.totalorder %s32, 1
      %p181 = por %p179, %p180
      %p182 = scmp.ne.s32.totalorder %s173, %s174
      %p183 = scmp.eq.s32.totalorder %s32, 0
      %p184 = por %p182, %p183
      %p185 = scmp.ne.s32.totalorder %s173, %s174
      %p186 = scmp.eq.s32.totalorder %s33, 1
      %p187 = por %p185, %p186
      %p189 = scmp.ne.s32.totalorder %s174, %s188
      %p190 = scmp.eq.s32.totalorder %s33, 0
      %p191 = por %p189, %p190
      %s193 = sadd.s32 %s192, 1
      %p196 = scmp.eq.s32.totalorder %s27, 1
      %p197 = scmp.ne.s32.totalorder %s192, %s194
      %p198 = scmp.eq.s32.totalorder %s27, 0
      %p199 = por %p197, %p198
      %p200 = scmp.ne.s32.totalorder %s192, %s194
      %p201 = scmp.eq.s32.totalorder %s32, 1
      %p202 = por %p200, %p201
      %p203 = scmp.ne.s32.totalorder %s194, %s195
      %p204 = scmp.eq.s32.totalorder %s32, 0
      %p205 = por %p203, %p204
      %p206 = scmp.ne.s32.totalorder %s194, %s195
      %p207 = scmp.eq.s32.totalorder %s33, 1
      %p208 = por %p206, %p207
      %p210 = scmp.ne.s32.totalorder %s195, %s209
      %p211 = scmp.eq.s32.totalorder %s33, 0
      %p212 = por %p210, %p211
      %s214 = sadd.s32 %s213, 1
      %p217 = scmp.eq.s32.totalorder %s27, 1
      %p218 = scmp.ne.s32.totalorder %s213, %s215
      %p219 = scmp.eq.s32.totalorder %s27, 0
      %p220 = por %p218, %p219
      %p221 = scmp.ne.s32.totalorder %s213, %s215
      %p222 = scmp.eq.s32.totalorder %s32, 1
      %p223 = por %p221, %p222
      %p224 = scmp.ne.s32.totalorder %s215, %s216
      %p225 = scmp.eq.s32.totalorder %s32, 0
      %p226 = por %p224, %p225
      %p227 = scmp.ne.s32.totalorder %s215, %s216
      %p228 = scmp.eq.s32.totalorder %s33, 1
      %p229 = por %p227, %p228
      %p231 = scmp.ne.s32.totalorder %s216, %s230
      %p232 = scmp.eq.s32.totalorder %s33, 0
      %p233 = por %p231, %p232
      %s235 = sadd.s32 %s234, 1
      %p238 = scmp.eq.s32.totalorder %s27, 1
      %p239 = scmp.ne.s32.totalorder %s234, %s236
      %p240 = scmp.eq.s32.totalorder %s27, 0
      %p241 = por %p239, %p240
      %p242 = scmp.ne.s32.totalorder %s234, %s236
      %p243 = scmp.eq.s32.totalorder %s32, 1
      %p244 = por %p242, %p243
      %p245 = scmp.ne.s32.totalorder %s236, %s237
      %p246 = scmp.eq.s32.totalorder %s32, 0
      %p247 = por %p245, %p246
      %p248 = scmp.ne.s32.totalorder %s236, %s237
      %p249 = scmp.eq.s32.totalorder %s33, 1
      %p250 = por %p248, %p249
      %p252 = scmp.ne.s32.totalorder %s237, %s251
      %p253 = scmp.eq.s32.totalorder %s33, 0
      %p254 = por %p252, %p253
      %s256 = sadd.s32 %s255, 1
      %p259 = scmp.eq.s32.totalorder %s27, 1
      %p260 = scmp.ne.s32.totalorder %s255, %s257
      %p261 = scmp.eq.s32.totalorder %s27, 0
      %p262 = por %p260, %p261
      %p263 = scmp.ne.s32.totalorder %s255, %s257
      %p264 = scmp.eq.s32.totalorder %s32, 1
      %p265 = por %p263, %p264
      %p266 = scmp.ne.s32.totalorder %s257, %s258
      %p267 = scmp.eq.s32.totalorder %s32, 0
      %p268 = por %p266, %p267
      %p269 = scmp.ne.s32.totalorder %s257, %s258
      %p270 = scmp.eq.s32.totalorder %s33, 1
      %p271 = por %p269, %p270
      %p273 = scmp.ne.s32.totalorder %s258, %s272
      %p274 = scmp.eq.s32.totalorder %s33, 0
      %p275 = por %p273, %p274
      %s277 = sadd.s32 %s276, 1
      %p280 = scmp.eq.s32.totalorder %s27, 1
      %p281 = scmp.ne.s32.totalorder %s276, %s278
      %p282 = scmp.eq.s32.totalorder %s27, 0
      %p283 = por %p281, %p282
      %p284 = scmp.ne.s32.totalorder %s276, %s278
      %p285 = scmp.eq.s32.totalorder %s32, 1
      %p286 = por %p284, %p285
      %p287 = scmp.ne.s32.totalorder %s278, %s279
      %p288 = scmp.eq.s32.totalorder %s32, 0
      %p289 = por %p287, %p288
      %p290 = scmp.ne.s32.totalorder %s278, %s279
      %p291 = scmp.eq.s32.totalorder %s33, 1
      %p292 = por %p290, %p291
      %p294 = scmp.ne.s32.totalorder %s279, %s293
      %p295 = scmp.eq.s32.totalorder %s33, 0
      %p296 = por %p294, %p295
      %s298 = sadd.s32 %s297, 1
      %p301 = scmp.eq.s32.totalorder %s27, 1
      %p302 = scmp.ne.s32.totalorder %s297, %s299
      %p303 = scmp.eq.s32.totalorder %s27, 0
      %p304 = por %p302, %p303
      %p305 = scmp.ne.s32.totalorder %s297, %s299
      %p306 = scmp.eq.s32.totalorder %s32, 1
      %p307 = por %p305, %p306
      %p308 = scmp.ne.s32.totalorder %s299, %s300
      %p309 = scmp.eq.s32.totalorder %s32, 0
      %p310 = por %p308, %p309
      %p311 = scmp.ne.s32.totalorder %s299, %s300
      %p312 = scmp.eq.s32.totalorder %s33, 1
      %p313 = por %p311, %p312
      %p315 = scmp.ne.s32.totalorder %s300, %s314
      %p316 = scmp.eq.s32.totalorder %s33, 0
      %p317 = por %p315, %p316
      %s319 = sadd.s32 %s318, 1
      %p322 = scmp.eq.s32.totalorder %s27, 1
      %p323 = scmp.ne.s32.totalorder %s318, %s320
      %p324 = scmp.eq.s32.totalorder %s27, 0
      %p325 = por %p323, %p324
      %p326 = scmp.ne.s32.totalorder %s318, %s320
      %p327 = scmp.eq.s32.totalorder %s32, 1
      %p328 = por %p326, %p327
      %p329 = scmp.ne.s32.totalorder %s320, %s321
      %p330 = scmp.eq.s32.totalorder %s32, 0
      %p331 = por %p329, %p330
      %p332 = scmp.ne.s32.totalorder %s320, %s321
      %p333 = scmp.eq.s32.totalorder %s33, 1
      %p334 = por %p332, %p333
      %p336 = scmp.ne.s32.totalorder %s321, %s335
      %p337 = scmp.eq.s32.totalorder %s33, 0
      %p338 = por %p336, %p337
      %s340 = sadd.s32 %s339, 1
      %p343 = scmp.eq.s32.totalorder %s27, 1
      %p344 = scmp.ne.s32.totalorder %s339, %s341
      %p345 = scmp.eq.s32.totalorder %s27, 0
      %p346 = por %p344, %p345
      %p347 = scmp.ne.s32.totalorder %s339, %s341
      %p348 = scmp.eq.s32.totalorder %s32, 1
      %p349 = por %p347, %p348
      %p350 = scmp.ne.s32.totalorder %s341, %s342
      %p351 = scmp.eq.s32.totalorder %s32, 0
      %p352 = por %p350, %p351
      %p353 = scmp.ne.s32.totalorder %s341, %s342
      %p354 = scmp.eq.s32.totalorder %s33, 1
      %p355 = por %p353, %p354
      %p357 = scmp.ne.s32.totalorder %s342, %s356
      %p358 = scmp.eq.s32.totalorder %s33, 0
      %p359 = por %p357, %p358
      %s361 = sadd.s32 %s360, 1
      %p364 = scmp.eq.s32.totalorder %s27, 1
      %p365 = scmp.ne.s32.totalorder %s360, %s362
      %p366 = scmp.eq.s32.totalorder %s27, 0
      %p367 = por %p365, %p366
      %p368 = scmp.ne.s32.totalorder %s360, %s362
      %p369 = scmp.eq.s32.totalorder %s32, 1
      %p370 = por %p368, %p369
      %p371 = scmp.ne.s32.totalorder %s362, %s363
      %p372 = scmp.eq.s32.totalorder %s32, 0
      %p373 = por %p371, %p372
      %p374 = scmp.ne.s32.totalorder %s362, %s363
      %p375 = scmp.eq.s32.totalorder %s33, 1
      %p376 = por %p374, %p375
      %p378 = scmp.ne.s32.totalorder %s363, %s377
      %p379 = scmp.eq.s32.totalorder %s33, 0
      %p380 = por %p378, %p379
      %s382 = sadd.s32 %s381, 1
      %p385 = scmp.eq.s32.totalorder %s27, 1
      %p386 = scmp.ne.s32.totalorder %s381, %s383
      %p387 = scmp.eq.s32.totalorder %s27, 0
      %p388 = por %p386, %p387
      %p389 = scmp.ne.s32.totalorder %s381, %s383
      %p390 = scmp.eq.s32.totalorder %s32, 1
      %p391 = por %p389, %p390
      %p392 = scmp.ne.s32.totalorder %s383, %s384
      %p393 = scmp.eq.s32.totalorder %s32, 0
      %p394 = por %p392, %p393
      %p395 = scmp.ne.s32.totalorder %s383, %s384
      %p396 = scmp.eq.s32.totalorder %s33, 1
      %p397 = por %p395, %p396
      %p399 = scmp.ne.s32.totalorder %s384, %s398
      %p400 = scmp.eq.s32.totalorder %s33, 0
      %p401 = por %p399, %p400
      %s403 = sadd.s32 %s402, 1
      %p406 = scmp.eq.s32.totalorder %s27, 1
      %p407 = scmp.ne.s32.totalorder %s402, %s404
      %p408 = scmp.eq.s32.totalorder %s27, 0
      %p409 = por %p407, %p408
      %p410 = scmp.ne.s32.totalorder %s402, %s404
      %p411 = scmp.eq.s32.totalorder %s32, 1
      %p412 = por %p410, %p411
      %p413 = scmp.ne.s32.totalorder %s404, %s405
      %p414 = scmp.eq.s32.totalorder %s32, 0
      %p415 = por %p413, %p414
      %p416 = scmp.ne.s32.totalorder %s404, %s405
      %p417 = scmp.eq.s32.totalorder %s33, 1
      %p418 = por %p416, %p417
      %p420 = scmp.ne.s32.totalorder %s405, %s419
      %p421 = scmp.eq.s32.totalorder %s33, 0
      %p422 = por %p420, %p421
      %s423 = ssub.s32 %s27, %s34
      %p424 = scmp.eq.s32.totalorder %s423, 0
      %s426 = sadd.s32 %s425, 1
      %s427 = scalar_select %p424, %s425, %s426
      %p430 = pneg %p424
      %p431 = scmp.eq.s32.totalorder %s27, 1
      %p432 = por %p430, %p431
      %p433 = scmp.ne.s32.totalorder %s425, %s428
      %p434 = scmp.eq.s32.totalorder %s27, 0
      %p435 = por %p433, %p434
      %p436 = scmp.ne.s32.totalorder %s425, %s428
      %p437 = scmp.eq.s32.totalorder %s32, 1
      %p438 = por %p436, %p437
      %p439 = scmp.ne.s32.totalorder %s428, %s429
      %p440 = scmp.eq.s32.totalorder %s32, 0
      %p441 = por %p439, %p440
      %p442 = scmp.ne.s32.totalorder %s428, %s429
      %p443 = scmp.eq.s32.totalorder %s33, 1
      %p444 = por %p442, %p443
      %p446 = scmp.ne.s32.totalorder %s429, %s445
      %p447 = scmp.eq.s32.totalorder %s33, 0
      %p448 = por %p446, %p447
      %p449 = scmp.le.s32.totalorder 1, %s27
      %p450 = scmp.lt.s32.totalorder %s27, 3
      %p451 = pnand %p449, %p450
      %p452 = pneg %p451
      // Predicated region
      $region9: #{tpu_custom_call.1} parent=5 // pred_check
        _
      $region10: #{tpu_custom_call.1} parent=5 // pred_check_branch
        %454 = sbr.rel (%p451) target = $region12
      $region11: #{tpu_custom_call.1} parent=5 // pred_region
        %s455 = ssub.s32 %s27, 1
        // Predicated region
        $region13: #{tpu_custom_call.1} parent=11 // pred_check
          %p456 = pneg %p100
        $region14: #{tpu_custom_call.1} parent=11 // pred_check_branch
          %458 = sbr.rel (%p456) target = $region16
        $region15: #{tpu_custom_call.1} parent=11 // pred_region
          _
        $region16: #{tpu_custom_call.1} parent=11 // pred_fallthru
          _
        // Predicated region
        $region17: #{tpu_custom_call.1} parent=11 // pred_check
          %p459 = pneg %p121
        $region18: #{tpu_custom_call.1} parent=11 // pred_check_branch
          %461 = sbr.rel (%p459) target = $region20
        $region19: #{tpu_custom_call.1} parent=11 // pred_region
          _
        $region20: #{tpu_custom_call.1} parent=11 // pred_fallthru
          _
        // Predicated region
        $region21: #{tpu_custom_call.1} parent=11 // pred_check
          %p462 = pneg %p142
        $region22: #{tpu_custom_call.1} parent=11 // pred_check_branch
          %464 = sbr.rel (%p462) target = $region24
        $region23: #{tpu_custom_call.1} parent=11 // pred_region
          _
        $region24: #{tpu_custom_call.1} parent=11 // pred_fallthru
          _
        // Predicated region
        $region25: #{tpu_custom_call.1} parent=11 // pred_check
          %p465 = pneg %p163
        $region26: #{tpu_custom_call.1} parent=11 // pred_check_branch
          %467 = sbr.rel (%p465) target = $region28
        $region27: #{tpu_custom_call.1} parent=11 // pred_region
          _
        $region28: #{tpu_custom_call.1} parent=11 // pred_fallthru
          _
        // Predicated region
        $region29: #{tpu_custom_call.1} parent=11 // pred_check
          %p468 = pneg %p184
        $region30: #{tpu_custom_call.1} parent=11 // pred_check_branch
          %470 = sbr.rel (%p468) target = $region32
        $region31: #{tpu_custom_call.1} parent=11 // pred_region
          _
        $region32: #{tpu_custom_call.1} parent=11 // pred_fallthru
          _
        // Predicated region
        $region33: #{tpu_custom_call.1} parent=11 // pred_check
          %p471 = pneg %p205
        $region34: #{tpu_custom_call.1} parent=11 // pred_check_branch
          %473 = sbr.rel (%p471) target = $region36
        $region35: #{tpu_custom_call.1} parent=11 // pred_region
          _
        $region36: #{tpu_custom_call.1} parent=11 // pred_fallthru
          _
        // Predicated region
        $region37: #{tpu_custom_call.1} parent=11 // pred_check
          %p474 = pneg %p226
        $region38: #{tpu_custom_call.1} parent=11 // pred_check_branch
          %476 = sbr.rel (%p474) target = $region40
        $region39: #{tpu_custom_call.1} parent=11 // pred_region
          _
        $region40: #{tpu_custom_call.1} parent=11 // pred_fallthru
          _
        // Predicated region
        $region41: #{tpu_custom_call.1} parent=11 // pred_check
          %p477 = pneg %p247
        $region42: #{tpu_custom_call.1} parent=11 // pred_check_branch
          %479 = sbr.rel (%p477) target = $region44
        $region43: #{tpu_custom_call.1} parent=11 // pred_region
          _
        $region44: #{tpu_custom_call.1} parent=11 // pred_fallthru
          _
        // Predicated region
        $region45: #{tpu_custom_call.1} parent=11 // pred_check
          %p480 = pneg %p268
        $region46: #{tpu_custom_call.1} parent=11 // pred_check_branch
          %482 = sbr.rel (%p480) target = $region48
        $region47: #{tpu_custom_call.1} parent=11 // pred_region
          _
        $region48: #{tpu_custom_call.1} parent=11 // pred_fallthru
          _
        // Predicated region
        $region49: #{tpu_custom_call.1} parent=11 // pred_check
          %p483 = pneg %p289
        $region50: #{tpu_custom_call.1} parent=11 // pred_check_branch
          %485 = sbr.rel (%p483) target = $region52
        $region51: #{tpu_custom_call.1} parent=11 // pred_region
          _
        $region52: #{tpu_custom_call.1} parent=11 // pred_fallthru
          _
        // Predicated region
        $region53: #{tpu_custom_call.1} parent=11 // pred_check
          %p486 = pneg %p310
        $region54: #{tpu_custom_call.1} parent=11 // pred_check_branch
          %488 = sbr.rel (%p486) target = $region56
        $region55: #{tpu_custom_call.1} parent=11 // pred_region
          _
        $region56: #{tpu_custom_call.1} parent=11 // pred_fallthru
          _
        // Predicated region
        $region57: #{tpu_custom_call.1} parent=11 // pred_check
          %p489 = pneg %p331
        $region58: #{tpu_custom_call.1} parent=11 // pred_check_branch
          %491 = sbr.rel (%p489) target = $region60
        $region59: #{tpu_custom_call.1} parent=11 // pred_region
          _
        $region60: #{tpu_custom_call.1} parent=11 // pred_fallthru
          _
        // Predicated region
        $region61: #{tpu_custom_call.1} parent=11 // pred_check
          %p492 = pneg %p352
        $region62: #{tpu_custom_call.1} parent=11 // pred_check_branch
          %494 = sbr.rel (%p492) target = $region64
        $region63: #{tpu_custom_call.1} parent=11 // pred_region
          _
        $region64: #{tpu_custom_call.1} parent=11 // pred_fallthru
          _
        // Predicated region
        $region65: #{tpu_custom_call.1} parent=11 // pred_check
          %p495 = pneg %p373
        $region66: #{tpu_custom_call.1} parent=11 // pred_check_branch
          %497 = sbr.rel (%p495) target = $region68
        $region67: #{tpu_custom_call.1} parent=11 // pred_region
          _
        $region68: #{tpu_custom_call.1} parent=11 // pred_fallthru
          _
        // Predicated region
        $region69: #{tpu_custom_call.1} parent=11 // pred_check
          %p498 = pneg %p394
        $region70: #{tpu_custom_call.1} parent=11 // pred_check_branch
          %500 = sbr.rel (%p498) target = $region72
        $region71: #{tpu_custom_call.1} parent=11 // pred_region
          _
        $region72: #{tpu_custom_call.1} parent=11 // pred_fallthru
          _
        // Predicated region
        $region73: #{tpu_custom_call.1} parent=11 // pred_check
          %p501 = pneg %p415
        $region74: #{tpu_custom_call.1} parent=11 // pred_check_branch
          %503 = sbr.rel (%p501) target = $region76
        $region75: #{tpu_custom_call.1} parent=11 // pred_region
          _
        $region76: #{tpu_custom_call.1} parent=11 // pred_fallthru
          _
      $region12: #{tpu_custom_call.1} parent=5 // pred_fallthru
        _
      %p504 = scmp.lt.s32.totalorder %s27, 2
      // Predicated region
      $region77: #{tpu_custom_call.1} parent=5 // pred_check
        %p505 = pneg %p504
      $region78: #{tpu_custom_call.1} parent=5 // pred_check_branch
        %507 = sbr.rel (%p505) target = $region80
      $region79: #{tpu_custom_call.1} parent=5 // pred_region
        // Predicated region
        $region81: #{tpu_custom_call.1} parent=79 // pred_check
          %p508 = pneg %p47
        $region82: #{tpu_custom_call.1} parent=79 // pred_check_branch
          %510 = sbr.rel (%p508) target = $region84
        $region83: #{tpu_custom_call.1} parent=79 // pred_region
          %p511 = scmp.lt.s32.totalorder %s27, 1
          %s512 = scalar_select %p511, %s27, 1
          %s513 = smul.addr %s512, 4
          %s514 = scalar_lea.vmem %s0, %s513
        $region84: #{tpu_custom_call.1} parent=79 // pred_fallthru
          _
        // Predicated region
        $region85: #{tpu_custom_call.1} parent=79 // pred_check
          %p515 = pneg %p73
        $region86: #{tpu_custom_call.1} parent=79 // pred_check_branch
          %517 = sbr.rel (%p515) target = $region88
        $region87: #{tpu_custom_call.1} parent=79 // pred_region
          %p518 = scmp.lt.s32.totalorder %s27, 1
          %s519 = scalar_select %p518, %s27, 1
          %s520 = smul.addr %s519, 4
          %s521 = smul.addr %s520, 4
          %s522 = scalar_lea.vmem %s1, %s521
        $region88: #{tpu_custom_call.1} parent=79 // pred_fallthru
          _
      $region80: #{tpu_custom_call.1} parent=5 // pred_fallthru
        _
      %p523 = scmp.le.s32.totalorder 1, %s27
      %p524 = scmp.lt.s32.totalorder %s27, 3
      %p525 = pnand %p523, %p524
      %p526 = pneg %p525
      // Predicated region
      $region89: #{tpu_custom_call.1} parent=5 // pred_check
        _
      $region90: #{tpu_custom_call.1} parent=5 // pred_check_branch
        %528 = sbr.rel (%p525) target = $region92
      $region91: #{tpu_custom_call.1} parent=5 // pred_region
        %s529 = ssub.s32 %s27, 1
        %p530 = scmp.lt.s32.totalorder %s32, 1
        %s531 = scalar_select %p530, %s32, 1
        %s532 = smul.addr %s531, 4
        %s533 = scalar_lea.vmem %s0, %s532
        %p534 = pneg %p53
        %p535 = pneg %p50
        %p536 = scmp.lt.s32.totalorder %s32, 1
        %s537 = scalar_select %p536, %s32, 1
        %s538 = smul.addr %s537, 4
        %s539 = smul.addr %s538, 4
        %s540 = scalar_lea.vmem %s1, %s539
        %p541 = pneg %p79
        %p542 = pneg %p76
        %p543 = pneg %p100
        %p544 = pneg %p97
        %p545 = pneg %p121
        %p546 = pneg %p118
        %p547 = pneg %p142
        %p548 = pneg %p139
        %p549 = pneg %p163
        %p550 = pneg %p160
        %p551 = pneg %p184
        %p552 = pneg %p181
        %p553 = pneg %p205
        %p554 = pneg %p202
        %p555 = pneg %p226
        %p556 = pneg %p223
        %p557 = pneg %p247
        %p558 = pneg %p244
        %p559 = pneg %p268
        %p560 = pneg %p265
        %p561 = pneg %p289
        %p562 = pneg %p286
        %p563 = pneg %p310
        %p564 = pneg %p307
        %p565 = pneg %p331
        %p566 = pneg %p328
        %p567 = pneg %p352
        %p568 = pneg %p349
        %p569 = pneg %p373
        %p570 = pneg %p370
        %p571 = pneg %p394
        %p572 = pneg %p391
        %p573 = pneg %p415
        %p574 = pneg %p412
        %p575 = pneg %p441
        %p576 = pneg %p438
        %s577 = sand.u32 %s428, 1
        %s578 = scalar_lea.sflag [#allocation3], %s577
        %s579 = sand.u32 %s428, 1
        %s580 = smul.addr %s579, 8
        %s581 = scalar_lea.vmem [#allocation2], %s580
        %p582 = scmp.lt.s32.totalorder %s32, 1
        %s583 = scalar_select %p582, %s32, 1
        %s584 = smul.addr %s583, 4
        %s585 = scalar_lea.vmem %s0, %s584
        %p586 = scmp.lt.s32.totalorder %s32, 1
        %s587 = scalar_select %p586, %s32, 1
        %s588 = smul.addr %s587, 4
        %s589 = smul.addr %s588, 4
        %s590 = scalar_lea.vmem %s1, %s589
        %v592 = vld [vmem:[%s585] sm:$0xf]
        %v593 = vld [vmem:[%s2] sm:$0xf]
        %v594 = vld [vmem:[%s2 + $0x4] sm:$0xf]
        %v595 = vld [vmem:[%s2 + $0x8] sm:$0xf]
        %v596 = vld [vmem:[%s2 + $0xc] sm:$0xf]
        %v597 = vld [vmem:[%s2 + $0x10] sm:$0xf]
        %v598 = vld [vmem:[%s2 + $0x14] sm:$0xf]
        %v599 = vld [vmem:[%s2 + $0x18] sm:$0xf]
        %v600 = vld [vmem:[%s2 + $0x1c] sm:$0xf]
        %v601 = vld [vmem:[%s3] sm:$0x1]
        %v603 = vlaneseq
        %v604 = vshrl.u32 %v603, 7
        %v605 = vsub.s32 0, %v604
        %v606 = vrot.slane %v601, %v605
        %v616 = vunpack.c.l.b16 %v593
        %v617 = vunpack.c.l.b16 %v594
        %v618 = vunpack.c.l.b16 %v595
        %v619 = vunpack.c.l.b16 %v596
        %v620 = vunpack.c.l.b16 %v597
        %v621 = vunpack.c.l.b16 %v598
        %v622 = vunpack.c.l.b16 %v599
        %v623 = vunpack.c.l.b16 %v600
        %v624 = vpack.c.b16 %v617, %v616
        %v625 = vpack.c.b16 %v619, %v618
        %v626 = vpack.c.b16 %v621, %v620
        %v627 = vpack.c.b16 %v623, %v622
        %vm632 = vcmask 523264
        %v634 = vsel %vm632, %v592, 0
        %636 = vmatprep.subr.bf16.mxu0 0
        %637 = vmatpush1.bf16.msra.mxu0 0
        %638 = vmatprep.subr.bf16.mxu0 0
        %639 = vmatpush1.bf16.msra.mxu0 0
        %640 = vmatprep.subr.bf16.mxu0 0
        %641 = vmatpush1.bf16.msra.mxu0 0
        %642 = vmatprep.subr.bf16.mxu0 0
        %643 = vmatpush1.bf16.msra.mxu0 0
        %644 = vmatprep.subr.bf16.mxu0 0
        %645 = vmatpush1.bf16.msra.mxu0 %v627
        %646 = vmatprep.subr.bf16.mxu0 0
        %647 = vmatpush1.bf16.msra.mxu0 %v626
        %648 = vmatprep.subr.bf16.mxu0 0
        %649 = vmatpush1.bf16.msra.mxu0 %v625
        %650 = vmatprep.subr.bf16.mxu0 0
        %651 = vmatpush1.bf16.msra.mxu0 %v624
        %652 = vmatprep.subr.bf16.mxu0 0
        %653 = vmatpush2.bf16.msra.mxu0 0
        %654 = vmatprep.subr.bf16.mxu0 0
        %655 = vmatpush2.bf16.msra.mxu0 0
        %656 = vmatprep.subr.bf16.mxu0 0
        %657 = vmatpush2.bf16.msra.mxu0 0
        %658 = vmatprep.subr.bf16.mxu0 0
        %659 = vmatpush2.bf16.msra.mxu0 0
        %660 = vmatprep.subr.bf16.mxu0 0
        %661 = vmatpush2.bf16.msra.mxu0 0
        %662 = vmatprep.subr.bf16.mxu0 0
        %663 = vmatpush2.bf16.msra.mxu0 0
        %664 = vmatprep.subr.bf16.mxu0 0
        %665 = vmatpush2.bf16.msra.mxu0 0
        %666 = vmatprep.subr.bf16.mxu0 0
        %667 = vmatpush2.bf16.msra.mxu0 0
        %668 = vmatprep.mubr.bf16.mxu0 0
        %669 = vmatmul.mubr.bf16.gmra.mxu0 %v634
        %v670 = vpop.f32.mrf.mxu0
        %v671 = vadd.f32 %v606, %v670
        %v672 = vpop.f32.mrf.mxu0
        %v673 = vpop.f32.mrf.mxu0
        %v674 = vpop.f32.mrf.mxu0
        %675 = vdwg.mxu0
        %v676 = vmul.f32 %v671, 0.5
        %v677 = vmul.f32 %v671, %v671
        %v678 = vmul.f32 %v677, %v671
        %v679 = vmul.f32 %v678, 0.044715
        %v680 = vadd.f32 %v671, %v679
        %v681 = vmul.f32 %v680, 0.7978846
        %v682 = vtanh.pop %v681
        %v683 = vadd.f32 %v682, 1.0
        %v684 = vmul.f32 %v676, %v683
        %v685 = vld [vmem:[%s4] sm:$0x1]
        %v686 = vld [vmem:[%s5] sm:$0x1]
        %vm687 = vcmask 261120
        %v688 = vsel %vm687, %v684, 0.0
        %689 = vadd.xlane.f32.xlu0 %v688
        %v690 = vpop.xlane.xlu0 %689
        %v691 = vrcp.pop 32.0
        %v692 = vmul.f32 %v690, %v691
        %v693 = vsub.f32 %v684, %v692
        %v694 = vmul.f32 %v693, %v693
        %v695 = vsel %vm687, %v694, 0.0
        %696 = vadd.xlane.f32.xlu0 %v695
        %v697 = vpop.xlane.xlu0 %696
        %v698 = vmul.f32 %v697, %v691
        %v699 = vadd.f32 %v698, 1e-05
        %v700 = vrsqrt.pop %v699
        %v701 = vmul.f32 %v693, %v700
        %v703 = vlaneseq
        %v704 = vshrl.u32 %v703, 7
        %v705 = vsub.s32 0, %v704
        %v706 = vrot.slane %v685, %v705
        %v708 = vmul.f32 %v701, %v706
        %v710 = vlaneseq
        %v711 = vshrl.u32 %v710, 7
        %v712 = vsub.s32 0, %v711
        %v713 = vrot.slane %v686, %v712
        %v715 = vadd.f32 %v708, %v713
        %v716 = vld [vmem:[%s590] sm:$0xf]
        %v717 = vld [vmem:[%s590 + $0x4] sm:$0xf]
        %v718 = vld [vmem:[%s590 + $0x8] sm:$0xf]
        %v719 = vld [vmem:[%s590 + $0xc] sm:$0xf]
        %v720 = vunpack.c.l.bf16 %v716
        %v721 = vunpack.c.l.bf16 %v717
        %v722 = vunpack.c.l.bf16 %v718
        %v723 = vunpack.c.l.bf16 %v719
        %724 = vxpose.xlu0.b32.start [1/16] %v720, 128
        %725 = vxpose.xlu0.b32.cont [2/16] %v721, 128
        %726 = vxpose.xlu0.b32.cont [3/16] %v722, 128
        %727 = vxpose.xlu0.b32.cont [4/16] %v723, 128
        %728 = vxpose.xlu0.b32.cont [5/16] 0.0, 128
        %729 = vxpose.xlu0.b32.cont [6/16] 0.0, 128
        %730 = vxpose.xlu0.b32.cont [7/16] 0.0, 128
        %731 = vxpose.xlu0.b32.cont [8/16] 0.0, 128
        %732 = vxpose.xlu0.b32.cont [9/16] 0.0, 128
        %733 = vxpose.xlu0.b32.cont [10/16] 0.0, 128
        %734 = vxpose.xlu0.b32.cont [11/16] 0.0, 128
        %735 = vxpose.xlu0.b32.cont [12/16] 0.0, 128
        %736 = vxpose.xlu0.b32.cont [13/16] 0.0, 128
        %737 = vxpose.xlu0.b32.cont [14/16] 0.0, 128
        %738 = vxpose.xlu0.b32.cont [15/16] 0.0, 128
        %739 = vxpose.xlu0.b32.end [16/16] 0.0, 128
        %v740 = vpop.trf.xlu0
        %v741 = vpop.trf.xlu0
        %v742 = vpop.trf.xlu0
        %v743 = vpop.trf.xlu0
        %v744 = vpop.trf.xlu0
        %v745 = vpop.trf.xlu0
        %v746 = vpop.trf.xlu0
        %v747 = vpop.trf.xlu0
        %v748 = vpop.trf.xlu0
        %v749 = vpop.trf.xlu0
        %v750 = vpop.trf.xlu0
        %v751 = vpop.trf.xlu0
        %v752 = vpop.trf.xlu0
        %v753 = vpop.trf.xlu0
        %v754 = vpop.trf.xlu0
        %v755 = vpop.trf.xlu0
        %v756 = vsel %vm687, %v740, 0.0
        %757 = vadd.xlane.f32.xlu0 %v756
        %v758 = vpop.xlane.xlu0 %757
        %v759 = vsel %vm687, %v741, 0.0
        %760 = vadd.xlane.f32.xlu0 %v759
        %v761 = vpop.xlane.xlu0 %760
        %v762 = vsel %vm687, %v742, 0.0
        %763 = vadd.xlane.f32.xlu0 %v762
        %v764 = vpop.xlane.xlu0 %763
        %v765 = vsel %vm687, %v743, 0.0
        %766 = vadd.xlane.f32.xlu0 %v765
        %v767 = vpop.xlane.xlu0 %766
        %v768 = vsel %vm687, %v744, 0.0
        %769 = vadd.xlane.f32.xlu0 %v768
        %v770 = vpop.xlane.xlu0 %769
        %v771 = vsel %vm687, %v745, 0.0
        %772 = vadd.xlane.f32.xlu0 %v771
        %v773 = vpop.xlane.xlu0 %772
        %v774 = vsel %vm687, %v746, 0.0
        %775 = vadd.xlane.f32.xlu0 %v774
        %v776 = vpop.xlane.xlu0 %775
        %v777 = vsel %vm687, %v747, 0.0
        %778 = vadd.xlane.f32.xlu0 %v777
        %v779 = vpop.xlane.xlu0 %778
        %v780 = vmul.f32 %v758, %v691
        %v781 = vmul.f32 %v761, %v691
        %v782 = vmul.f32 %v764, %v691
        %v783 = vmul.f32 %v767, %v691
        %v784 = vmul.f32 %v770, %v691
        %v785 = vmul.f32 %v773, %v691
        %v786 = vmul.f32 %v776, %v691
        %v787 = vmul.f32 %v779, %v691
        %v788 = vsub.f32 %v740, %v780
        %v789 = vsub.f32 %v741, %v781
        %v790 = vsub.f32 %v742, %v782
        %v791 = vsub.f32 %v743, %v783
        %v792 = vsub.f32 %v744, %v784
        %v793 = vsub.f32 %v745, %v785
        %v794 = vsub.f32 %v746, %v786
        %v795 = vsub.f32 %v747, %v787
        %v796 = vmul.f32 %v788, %v788
        %v797 = vmul.f32 %v789, %v789
        %v798 = vmul.f32 %v790, %v790
        %v799 = vmul.f32 %v791, %v791
        %v800 = vmul.f32 %v792, %v792
        %v801 = vmul.f32 %v793, %v793
        %v802 = vmul.f32 %v794, %v794
        %v803 = vmul.f32 %v795, %v795
        %v804 = vsel %vm687, %v796, 0.0
        %805 = vadd.xlane.f32.xlu0 %v804
        %v806 = vpop.xlane.xlu0 %805
        %v807 = vsel %vm687, %v797, 0.0
        %808 = vadd.xlane.f32.xlu0 %v807
        %v809 = vpop.xlane.xlu0 %808
        %v810 = vsel %vm687, %v798, 0.0
        %811 = vadd.xlane.f32.xlu0 %v810
        %v812 = vpop.xlane.xlu0 %811
        %v813 = vsel %vm687, %v799, 0.0
        %814 = vadd.xlane.f32.xlu0 %v813
        %v815 = vpop.xlane.xlu0 %814
        %v816 = vsel %vm687, %v800, 0.0
        %817 = vadd.xlane.f32.xlu0 %v816
        %v818 = vpop.xlane.xlu0 %817
        %v819 = vsel %vm687, %v801, 0.0
        %820 = vadd.xlane.f32.xlu0 %v819
        %v821 = vpop.xlane.xlu0 %820
        %v822 = vsel %vm687, %v802, 0.0
        %823 = vadd.xlane.f32.xlu0 %v822
        %v824 = vpop.xlane.xlu0 %823
        %v825 = vsel %vm687, %v803, 0.0
        %826 = vadd.xlane.f32.xlu0 %v825
        %v827 = vpop.xlane.xlu0 %826
        %v828 = vmul.f32 %v806, %v691
        %v829 = vmul.f32 %v809, %v691
        %v830 = vmul.f32 %v812, %v691
        %v831 = vmul.f32 %v815, %v691
        %v832 = vmul.f32 %v818, %v691
        %v833 = vmul.f32 %v821, %v691
        %v834 = vmul.f32 %v824, %v691
        %v835 = vmul.f32 %v827, %v691
        %v836 = vadd.f32 %v828, 1e-05
        %v837 = vadd.f32 %v829, 1e-05
        %v838 = vadd.f32 %v830, 1e-05
        %v839 = vadd.f32 %v831, 1e-05
        %v840 = vadd.f32 %v832, 1e-05
        %v841 = vadd.f32 %v833, 1e-05
        %v842 = vadd.f32 %v834, 1e-05
        %v843 = vadd.f32 %v835, 1e-05
        %v844 = vrsqrt.pop %v836
        %v845 = vrsqrt.pop %v837
        %v846 = vrsqrt.pop %v838
        %v847 = vrsqrt.pop %v839
        %v848 = vrsqrt.pop %v840
        %v849 = vrsqrt.pop %v841
        %v850 = vrsqrt.pop %v842
        %v851 = vrsqrt.pop %v843
        %v852 = vmul.f32 %v788, %v844
        %v853 = vmul.f32 %v789, %v845
        %v854 = vmul.f32 %v790, %v846
        %v855 = vmul.f32 %v791, %v847
        %v856 = vmul.f32 %v792, %v848
        %v857 = vmul.f32 %v793, %v849
        %v858 = vmul.f32 %v794, %v850
        %v859 = vmul.f32 %v795, %v851
        %v860 = vpack.c.bf16 %v853, %v852
        %v861 = vpack.c.bf16 %v855, %v854
        %v862 = vpack.c.bf16 %v857, %v856
        %v863 = vpack.c.bf16 %v859, %v858
        %v864 = vld [vmem:[%s8] sm:$0xf]
        %v865 = vld [vmem:[%s8 + $0x4] sm:$0xf]
        %v866 = vld [vmem:[%s8 + $0x8] sm:$0xf]
        %v867 = vld [vmem:[%s8 + $0xc] sm:$0xf]
        %v868 = vld [vmem:[%s9] sm:$0x1]
        %v870 = vlaneseq
        %v871 = vshrl.u32 %v870, 7
        %v872 = vsub.s32 0, %v871
        %v873 = vrot.slane %v868, %v872
        %v879 = vunpack.c.l.b16 %v864
        %v880 = vunpack.c.l.b16 %v865
        %v881 = vunpack.c.l.b16 %v866
        %v882 = vunpack.c.l.b16 %v867
        %v883 = vpack.c.b16 %v880, %v879
        %v884 = vpack.c.b16 %v882, %v881
        %v888 = vsel %vm687, %v860, 0
        %v891 = vsel %vm687, %v861, 0
        %v894 = vsel %vm687, %v862, 0
        %v897 = vsel %vm687, %v863, 0
        %899 = vmatprep.subr.bf16.mxu0 0
        %900 = vmatpush1.bf16.msra.mxu0 0
        %901 = vmatprep.subr.bf16.mxu0 0
        %902 = vmatpush1.bf16.msra.mxu0 0
        %903 = vmatprep.subr.bf16.mxu0 0
        %904 = vmatpush1.bf16.msra.mxu0 0
        %905 = vmatprep.subr.bf16.mxu0 0
        %906 = vmatpush1.bf16.msra.mxu0 0
        %907 = vmatprep.subr.bf16.mxu0 0
        %908 = vmatpush1.bf16.msra.mxu0 0
        %909 = vmatprep.subr.bf16.mxu0 0
        %910 = vmatpush1.bf16.msra.mxu0 0
        %911 = vmatprep.subr.bf16.mxu0 0
        %912 = vmatpush1.bf16.msra.mxu0 %v884
        %913 = vmatprep.subr.bf16.mxu0 0
        %914 = vmatpush1.bf16.msra.mxu0 %v883
        %915 = vmatprep.subr.bf16.mxu0 0
        %916 = vmatpush2.bf16.msra.mxu0 0
        %917 = vmatprep.subr.bf16.mxu0 0
        %918 = vmatpush2.bf16.msra.mxu0 0
        %919 = vmatprep.subr.bf16.mxu0 0
        %920 = vmatpush2.bf16.msra.mxu0 0
        %921 = vmatprep.subr.bf16.mxu0 0
        %922 = vmatpush2.bf16.msra.mxu0 0
        %923 = vmatprep.subr.bf16.mxu0 0
        %924 = vmatpush2.bf16.msra.mxu0 0
        %925 = vmatprep.subr.bf16.mxu0 0
        %926 = vmatpush2.bf16.msra.mxu0 0
        %927 = vmatprep.subr.bf16.mxu0 0
        %928 = vmatpush2.bf16.msra.mxu0 0
        %929 = vmatprep.subr.bf16.mxu0 0
        %930 = vmatpush2.bf16.msra.mxu0 0
        %931 = vmatprep.mubr.bf16.mxu0 0
        %932 = vmatmul.mubr.bf16.gmra.mxu0 %v888
        %v933 = vpop.f32.mrf.mxu0
        %v934 = vadd.f32 %v873, %v933
        %v935 = vpop.f32.mrf.mxu0
        %v936 = vpop.f32.mrf.mxu0
        %v937 = vadd.f32 %v873, %v936
        %v938 = vpop.f32.mrf.mxu0
        %939 = vmatprep.mubr.bf16.mxu0 0
        %940 = vmatmul.mubr.bf16.gmra.mxu0 %v891
        %v941 = vpop.f32.mrf.mxu0
        %v942 = vadd.f32 %v873, %v941
        %v943 = vpop.f32.mrf.mxu0
        %v944 = vpop.f32.mrf.mxu0
        %v945 = vadd.f32 %v873, %v944
        %v946 = vpop.f32.mrf.mxu0
        %947 = vmatprep.mubr.bf16.mxu0 0
        %948 = vmatmul.mubr.bf16.gmra.mxu0 %v894
        %v949 = vpop.f32.mrf.mxu0
        %v950 = vadd.f32 %v873, %v949
        %v951 = vpop.f32.mrf.mxu0
        %v952 = vpop.f32.mrf.mxu0
        %v953 = vadd.f32 %v873, %v952
        %v954 = vpop.f32.mrf.mxu0
        %955 = vmatprep.mubr.bf16.mxu0 0
        %956 = vmatmul.mubr.bf16.gmra.mxu0 %v897
        %v957 = vpop.f32.mrf.mxu0
        %v958 = vadd.f32 %v873, %v957
        %v959 = vpop.f32.mrf.mxu0
        %v960 = vpop.f32.mrf.mxu0
        %v961 = vadd.f32 %v873, %v960
        %v962 = vpop.f32.mrf.mxu0
        %963 = vdwg.mxu0
        %v964 = vpack.c.bf16 %v937, %v934
        %v965 = vpack.c.bf16 %v945, %v942
        %v966 = vpack.c.bf16 %v953, %v950
        %v967 = vpack.c.bf16 %v961, %v958
        %v968 = vpack.c.bf16 %v715, %v715
        %v969 = vld [vmem:[%s6] sm:$0xf]
        %v970 = vld [vmem:[%s6 + $0x4] sm:$0xf]
        %v971 = vld [vmem:[%s6 + $0x8] sm:$0xf]
        %v972 = vld [vmem:[%s6 + $0xc] sm:$0xf]
        %v973 = vld [vmem:[%s7] sm:$0x1]
        %v975 = vlaneseq
        %v976 = vshrl.u32 %v975, 7
        %v977 = vsub.s32 0, %v976
        %v978 = vrot.slane %v973, %v977
        %v984 = vunpack.c.l.b16 %v969
        %v985 = vunpack.c.l.b16 %v970
        %v986 = vunpack.c.l.b16 %v971
        %v987 = vunpack.c.l.b16 %v972
        %v988 = vpack.c.b16 %v985, %v984
        %v989 = vpack.c.b16 %v987, %v986
        %v993 = vsel %vm687, %v968, 0
        %995 = vmatprep.subr.bf16.mxu0 0
        %996 = vmatpush1.bf16.msra.mxu0 0
        %997 = vmatprep.subr.bf16.mxu0 0
        %998 = vmatpush1.bf16.msra.mxu0 0
        %999 = vmatprep.subr.bf16.mxu0 0
        %1000 = vmatpush1.bf16.msra.mxu0 0
        %1001 = vmatprep.subr.bf16.mxu0 0
        %1002 = vmatpush1.bf16.msra.mxu0 0
        %1003 = vmatprep.subr.bf16.mxu0 0
        %1004 = vmatpush1.bf16.msra.mxu0 0
        %1005 = vmatprep.subr.bf16.mxu0 0
        %1006 = vmatpush1.bf16.msra.mxu0 0
        %1007 = vmatprep.subr.bf16.mxu0 0
        %1008 = vmatpush1.bf16.msra.mxu0 %v989
        %1009 = vmatprep.subr.bf16.mxu0 0
        %1010 = vmatpush1.bf16.msra.mxu0 %v988
        %1011 = vmatprep.subr.bf16.mxu0 0
        %1012 = vmatpush2.bf16.msra.mxu0 0
        %1013 = vmatprep.subr.bf16.mxu0 0
        %1014 = vmatpush2.bf16.msra.mxu0 0
        %1015 = vmatprep.subr.bf16.mxu0 0
        %1016 = vmatpush2.bf16.msra.mxu0 0
        %1017 = vmatprep.subr.bf16.mxu0 0
        %1018 = vmatpush2.bf16.msra.mxu0 0
        %1019 = vmatprep.subr.bf16.mxu0 0
        %1020 = vmatpush2.bf16.msra.mxu0 0
        %1021 = vmatprep.subr.bf16.mxu0 0
        %1022 = vmatpush2.bf16.msra.mxu0 0
        %1023 = vmatprep.subr.bf16.mxu0 0
        %1024 = vmatpush2.bf16.msra.mxu0 0
        %1025 = vmatprep.subr.bf16.mxu0 0
        %1026 = vmatpush2.bf16.msra.mxu0 0
        %1027 = vmatprep.mubr.bf16.mxu0 0
        %1028 = vmatmul.mubr.bf16.gmra.mxu0 %v993
        %v1029 = vpop.f32.mrf.mxu0
        %v1030 = vadd.f32 %v978, %v1029
        %v1031 = vpop.f32.mrf.mxu0
        %v1032 = vpop.f32.mrf.mxu0
        %v1033 = vpop.f32.mrf.mxu0
        %1034 = vdwg.mxu0
        %v1035 = vpack.c.bf16 %v1030, %v1030
        %v1037 = vsel %vm687, %v1035, 0
        %v1040 = vsel %vm687, %v964, 0
        %v1043 = vsel %vm687, %v965, 0
        %v1046 = vsel %vm687, %v966, 0
        %v1049 = vsel %vm687, %v967, 0
        %1051 = vmatprep.subr.bf16.mxu0 0
        %1052 = vmatpush1.bf16.xpose.msra.mxu0 0
        %1053 = vmatprep.subr.bf16.mxu0 0
        %1054 = vmatpush1.bf16.xpose.msra.mxu0 0
        %1055 = vmatprep.subr.bf16.mxu0 0
        %1056 = vmatpush1.bf16.xpose.msra.mxu0 0
        %1057 = vmatprep.subr.bf16.mxu0 0
        %1058 = vmatpush1.bf16.xpose.msra.mxu0 0
        %1059 = vmatprep.subr.bf16.mxu0 0
        %1060 = vmatpush1.bf16.xpose.msra.mxu0 %v1049
        %1061 = vmatprep.subr.bf16.mxu0 0
        %1062 = vmatpush1.bf16.xpose.msra.mxu0 %v1046
        %1063 = vmatprep.subr.bf16.mxu0 0
        %1064 = vmatpush1.bf16.xpose.msra.mxu0 %v1043
        %1065 = vmatprep.subr.bf16.mxu0 0
        %1066 = vmatpush1.bf16.xpose.msra.mxu0 %v1040
        %1067 = vmatprep.subr.bf16.mxu0 0
        %1068 = vmatpush2.bf16.xpose.msra.mxu0 0
        %1069 = vmatprep.subr.bf16.mxu0 0
        %1070 = vmatpush2.bf16.xpose.msra.mxu0 0
        %1071 = vmatprep.subr.bf16.mxu0 0
        %1072 = vmatpush2.bf16.xpose.msra.mxu0 0
        %1073 = vmatprep.subr.bf16.mxu0 0
        %1074 = vmatpush2.bf16.xpose.msra.mxu0 0
        %1075 = vmatprep.subr.bf16.mxu0 0
        %1076 = vmatpush2.bf16.xpose.msra.mxu0 0
        %1077 = vmatprep.subr.bf16.mxu0 0
        %1078 = vmatpush2.bf16.xpose.msra.mxu0 0
        %1079 = vmatprep.subr.bf16.mxu0 0
        %1080 = vmatpush2.bf16.xpose.msra.mxu0 0
        %1081 = vmatprep.subr.bf16.mxu0 0
        %1082 = vmatpush2.bf16.xpose.msra.mxu0 0
        %1083 = vmatprep.mubr.bf16.mxu0 0
        %1084 = vmatmul.mubr.bf16.gmra.mxu0 %v1037
        %v1085 = vpop.f32.mrf.mxu0
        %v1086 = vadd.f32 0.0, %v1085
        %v1087 = vpop.f32.mrf.mxu0
        %v1088 = vpop.f32.mrf.mxu0
        %v1089 = vpop.f32.mrf.mxu0
        %1090 = vdwg.mxu0
        %v1091 = vsel %vm632, %v1086, -inf
        %v1092 = vrot.slane %v1091, 4
        %v1093 = vmax.f32 %v1091, %v1092
        %v1094 = vrot.slane %v1093, 2
        %v1095 = vmax.f32 %v1093, %v1094
        %v1096 = vrot.slane %v1095, 1
        %v1097 = vmax.f32 %v1095, %v1096
        %v1098 = vlaneseq
        %v1099 = vshrl.u32 %v1098, 7
        %vm1100 = vcmp.eq.f32.partialorder %v1086, %v1097
        %v1101 = vsel %vm1100, %v1099, 8
        %v1102 = vsel %vm632, %v1101, 2147483647
        %v1103 = vrot.slane %v1102, 4
        %vm1104 = vcmp.lt.s32.totalorder %v1102, %v1103
        %v1105 = vsel %vm1104, %v1102, %v1103
        %v1106 = vrot.slane %v1105, 2
        %vm1107 = vcmp.lt.s32.totalorder %v1105, %v1106
        %v1108 = vsel %vm1107, %v1105, %v1106
        %v1109 = vrot.slane %v1108, 1
        %vm1110 = vcmp.lt.s32.totalorder %v1108, %v1109
        %v1111 = vsel %vm1110, %v1108, %v1109
        %vm1112 = vcmp.eq.s32.totalorder %v1099, %v1111
        %v1113 = vsel %vm1112, 1, 0
        %v1114 = vcvt.s32.f32 %v1113
        %v1115 = vpack.c.bf16 %v1114, %v1114
        %1120 = vrot.lane.b32.xlu0 %v964, 96
        %v1121 = vpop.permute.xlu0 %1120
        %1122 = vrot.lane.b32.xlu0 %v965, 96
        %v1123 = vpop.permute.xlu0 %1122
        %1124 = vrot.lane.b32.xlu0 %v966, 96
        %v1125 = vpop.permute.xlu0 %1124
        %1126 = vrot.lane.b32.xlu0 %v967, 96
        %v1127 = vpop.permute.xlu0 %1126
        %v1133 = vsel %vm632, %v1115, 0
        %1135 = vmatprep.subr.bf16.mxu0 0
        %1136 = vmatpush1.bf16.msra.mxu0 0
        %1137 = vmatprep.subr.bf16.mxu0 0
        %1138 = vmatpush1.bf16.msra.mxu0 0
        %1139 = vmatprep.subr.bf16.mxu0 0
        %1140 = vmatpush1.bf16.msra.mxu0 0
        %1141 = vmatprep.subr.bf16.mxu0 0
        %1142 = vmatpush1.bf16.msra.mxu0 0
        %1143 = vmatprep.subr.bf16.mxu0 0
        %1144 = vmatpush1.bf16.msra.mxu0 %v1127
        %1145 = vmatprep.subr.bf16.mxu0 0
        %1146 = vmatpush1.bf16.msra.mxu0 %v1125
        %1147 = vmatprep.subr.bf16.mxu0 0
        %1148 = vmatpush1.bf16.msra.mxu0 %v1123
        %1149 = vmatprep.subr.bf16.mxu0 0
        %1150 = vmatpush1.bf16.msra.mxu0 %v1121
        %1151 = vmatprep.subr.bf16.mxu0 0
        %1152 = vmatpush2.bf16.msra.mxu0 0
        %1153 = vmatprep.subr.bf16.mxu0 0
        %1154 = vmatpush2.bf16.msra.mxu0 0
        %1155 = vmatprep.subr.bf16.mxu0 0
        %1156 = vmatpush2.bf16.msra.mxu0 0
        %1157 = vmatprep.subr.bf16.mxu0 0
        %1158 = vmatpush2.bf16.msra.mxu0 0
        %1159 = vmatprep.subr.bf16.mxu0 0
        %1160 = vmatpush2.bf16.msra.mxu0 0
        %1161 = vmatprep.subr.bf16.mxu0 0
        %1162 = vmatpush2.bf16.msra.mxu0 0
        %1163 = vmatprep.subr.bf16.mxu0 0
        %1164 = vmatpush2.bf16.msra.mxu0 0
        %1165 = vmatprep.subr.bf16.mxu0 0
        %1166 = vmatpush2.bf16.msra.mxu0 0
        %1167 = vmatprep.mubr.bf16.mxu0 0
        %1168 = vmatmul.mubr.bf16.gmra.mxu0 %v1133
        %v1169 = vpop.f32.mrf.mxu0
        %v1170 = vadd.f32 0.0, %v1169
        %v1171 = vpop.f32.mrf.mxu0
        %v1172 = vpop.f32.mrf.mxu0
        %v1173 = vpop.f32.mrf.mxu0
        %1174 = vdwg.mxu0
        %v1175 = vsel %vm632, %v1114, 0.0
        %1176 = vadd.xlane.f32.xlu0 %v1175
        %v1177 = vpop.xlane.xlu0 %1176
        %v1178 = vadd.f32 %v1177, 1.0
        %v1179 = vrcp.pop %v1178
        %v1180 = vmul.f32 %v1170, %v1179
        %v1181 = vpack.c.bf16 %v1180, %v1180
        %v1182 = vld [vmem:[%s10] sm:$0xf]
        %v1183 = vld [vmem:[%s10 + $0x4] sm:$0xf]
        %v1184 = vld [vmem:[%s10 + $0x8] sm:$0xf]
        %v1185 = vld [vmem:[%s10 + $0xc] sm:$0xf]
        %v1186 = vld [vmem:[%s11] sm:$0x1]
        %v1188 = vlaneseq
        %v1189 = vshrl.u32 %v1188, 7
        %v1190 = vsub.s32 0, %v1189
        %v1191 = vrot.slane %v1186, %v1190
        %v1197 = vunpack.c.l.b16 %v1182
        %v1198 = vunpack.c.l.b16 %v1183
        %v1199 = vunpack.c.l.b16 %v1184
        %v1200 = vunpack.c.l.b16 %v1185
        %v1201 = vpack.c.b16 %v1198, %v1197
        %v1202 = vpack.c.b16 %v1200, %v1199
        %v1206 = vsel %vm687, %v1181, 0
        %1208 = vmatprep.subr.bf16.mxu0 0
        %1209 = vmatpush1.bf16.msra.mxu0 0
        %1210 = vmatprep.subr.bf16.mxu0 0
        %1211 = vmatpush1.bf16.msra.mxu0 0
        %1212 = vmatprep.subr.bf16.mxu0 0
        %1213 = vmatpush1.bf16.msra.mxu0 0
        %1214 = vmatprep.subr.bf16.mxu0 0
        %1215 = vmatpush1.bf16.msra.mxu0 0
        %1216 = vmatprep.subr.bf16.mxu0 0
        %1217 = vmatpush1.bf16.msra.mxu0 0
        %1218 = vmatprep.subr.bf16.mxu0 0
        %1219 = vmatpush1.bf16.msra.mxu0 0
        %1220 = vmatprep.subr.bf16.mxu0 0
        %1221 = vmatpush1.bf16.msra.mxu0 %v1202
        %1222 = vmatprep.subr.bf16.mxu0 0
        %1223 = vmatpush1.bf16.msra.mxu0 %v1201
        %1224 = vmatprep.subr.bf16.mxu0 0
        %1225 = vmatpush2.bf16.msra.mxu0 0
        %1226 = vmatprep.subr.bf16.mxu0 0
        %1227 = vmatpush2.bf16.msra.mxu0 0
        %1228 = vmatprep.subr.bf16.mxu0 0
        %1229 = vmatpush2.bf16.msra.mxu0 0
        %1230 = vmatprep.subr.bf16.mxu0 0
        %1231 = vmatpush2.bf16.msra.mxu0 0
        %1232 = vmatprep.subr.bf16.mxu0 0
        %1233 = vmatpush2.bf16.msra.mxu0 0
        %1234 = vmatprep.subr.bf16.mxu0 0
        %1235 = vmatpush2.bf16.msra.mxu0 0
        %1236 = vmatprep.subr.bf16.mxu0 0
        %1237 = vmatpush2.bf16.msra.mxu0 0
        %1238 = vmatprep.subr.bf16.mxu0 0
        %1239 = vmatpush2.bf16.msra.mxu0 0
        %1240 = vmatprep.mubr.bf16.mxu0 0
        %1241 = vmatmul.mubr.bf16.gmra.mxu0 %v1206
        %v1242 = vpop.f32.mrf.mxu0
        %v1243 = vadd.f32 %v1191, %v1242
        %v1244 = vpop.f32.mrf.mxu0
        %v1245 = vpop.f32.mrf.mxu0
        %v1246 = vpop.f32.mrf.mxu0
        %1247 = vdwg.mxu0
        %v1248 = vadd.f32 %v1243, %v715
        %v1249 = vld [vmem:[%s12] sm:$0x1]
        %v1250 = vld [vmem:[%s13] sm:$0x1]
        %v1251 = vsel %vm687, %v1248, 0.0
        %1252 = vadd.xlane.f32.xlu0 %v1251
        %v1253 = vpop.xlane.xlu0 %1252
        %v1254 = vmul.f32 %v1253, %v691
        %v1255 = vsub.f32 %v1248, %v1254
        %v1256 = vmul.f32 %v1255, %v1255
        %v1257 = vsel %vm687, %v1256, 0.0
        %1258 = vadd.xlane.f32.xlu0 %v1257
        %v1259 = vpop.xlane.xlu0 %1258
        %v1260 = vmul.f32 %v1259, %v691
        %v1261 = vadd.f32 %v1260, 1e-05
        %v1262 = vrsqrt.pop %v1261
        %v1263 = vmul.f32 %v1255, %v1262
        %v1265 = vlaneseq
        %v1266 = vshrl.u32 %v1265, 7
        %v1267 = vsub.s32 0, %v1266
        %v1268 = vrot.slane %v1249, %v1267
        %v1270 = vmul.f32 %v1263, %v1268
        %v1272 = vlaneseq
        %v1273 = vshrl.u32 %v1272, 7
        %v1274 = vsub.s32 0, %v1273
        %v1275 = vrot.slane %v1250, %v1274
        %v1277 = vadd.f32 %v1270, %v1275
        %v1278 = vpack.c.bf16 %v1277, %v1277
        %v1279 = vld [vmem:[%s14] sm:$0xf]
        %v1280 = vld [vmem:[%s14 + $0x4] sm:$0xf]
        %v1281 = vld [vmem:[%s14 + $0x8] sm:$0xf]
        %v1282 = vld [vmem:[%s14 + $0xc] sm:$0xf]
        %v1283 = vld [vmem:[%s15] sm:$0x1]
        %v1285 = vlaneseq
        %v1286 = vshrl.u32 %v1285, 7
        %v1287 = vsub.s32 0, %v1286
        %v1288 = vrot.slane %v1283, %v1287
        %v1294 = vunpack.c.l.b16 %v1279
        %v1295 = vunpack.c.l.b16 %v1280
        %v1296 = vunpack.c.l.b16 %v1281
        %v1297 = vunpack.c.l.b16 %v1282
        %v1298 = vpack.c.b16 %v1295, %v1294
        %v1299 = vpack.c.b16 %v1297, %v1296
        %v1303 = vsel %vm687, %v1278, 0
        %1305 = vmatprep.subr.bf16.mxu0 0
        %1306 = vmatpush1.bf16.msra.mxu0 0
        %1307 = vmatprep.subr.bf16.mxu0 0
        %1308 = vmatpush1.bf16.msra.mxu0 0
        %1309 = vmatprep.subr.bf16.mxu0 0
        %1310 = vmatpush1.bf16.msra.mxu0 0
        %1311 = vmatprep.subr.bf16.mxu0 0
        %1312 = vmatpush1.bf16.msra.mxu0 0
        %1313 = vmatprep.subr.bf16.mxu0 0
        %1314 = vmatpush1.bf16.msra.mxu0 0
        %1315 = vmatprep.subr.bf16.mxu0 0
        %1316 = vmatpush1.bf16.msra.mxu0 0
        %1317 = vmatprep.subr.bf16.mxu0 0
        %1318 = vmatpush1.bf16.msra.mxu0 %v1299
        %1319 = vmatprep.subr.bf16.mxu0 0
        %1320 = vmatpush1.bf16.msra.mxu0 %v1298
        %1321 = vmatprep.subr.bf16.mxu0 0
        %1322 = vmatpush2.bf16.msra.mxu0 0
        %1323 = vmatprep.subr.bf16.mxu0 0
        %1324 = vmatpush2.bf16.msra.mxu0 0
        %1325 = vmatprep.subr.bf16.mxu0 0
        %1326 = vmatpush2.bf16.msra.mxu0 0
        %1327 = vmatprep.subr.bf16.mxu0 0
        %1328 = vmatpush2.bf16.msra.mxu0 0
        %1329 = vmatprep.subr.bf16.mxu0 0
        %1330 = vmatpush2.bf16.msra.mxu0 0
        %1331 = vmatprep.subr.bf16.mxu0 0
        %1332 = vmatpush2.bf16.msra.mxu0 0
        %1333 = vmatprep.subr.bf16.mxu0 0
        %1334 = vmatpush2.bf16.msra.mxu0 0
        %1335 = vmatprep.subr.bf16.mxu0 0
        %1336 = vmatpush2.bf16.msra.mxu0 0
        %1337 = vmatprep.mubr.bf16.mxu0 0
        %1338 = vmatmul.mubr.bf16.gmra.mxu0 %v1303
        %v1339 = vpop.f32.mrf.mxu0
        %v1340 = vadd.f32 %v1288, %v1339
        %v1341 = vpop.f32.mrf.mxu0
        %v1342 = vpop.f32.mrf.mxu0
        %v1343 = vpop.f32.mrf.mxu0
        %1344 = vdwg.mxu0
        %v1345 = vmul.f32 %v1340, 0.5
        %v1346 = vmul.f32 %v1340, %v1340
        %v1347 = vmul.f32 %v1346, %v1340
        %v1348 = vmul.f32 %v1347, 0.044715
        %v1349 = vadd.f32 %v1340, %v1348
        %v1350 = vmul.f32 %v1349, 0.7978846
        %v1351 = vtanh.pop %v1350
        %v1352 = vadd.f32 %v1351, 1.0
        %v1353 = vmul.f32 %v1345, %v1352
        %v1354 = vpack.c.bf16 %v1353, %v1353
        %v1355 = vld [vmem:[%s16] sm:$0xf]
        %v1356 = vld [vmem:[%s16 + $0x4] sm:$0xf]
        %v1357 = vld [vmem:[%s16 + $0x8] sm:$0xf]
        %v1358 = vld [vmem:[%s16 + $0xc] sm:$0xf]
        %v1359 = vld [vmem:[%s16 + $0x10] sm:$0xf]
        %v1360 = vld [vmem:[%s16 + $0x14] sm:$0xf]
        %v1361 = vld [vmem:[%s16 + $0x18] sm:$0xf]
        %v1362 = vld [vmem:[%s16 + $0x1c] sm:$0xf]
        %v1363 = vld [vmem:[%s16 + $0x20] sm:$0xf]
        %v1364 = vld [vmem:[%s16 + $0x24] sm:$0xf]
        %v1365 = vld [vmem:[%s16 + $0x28] sm:$0xf]
        %v1366 = vld [vmem:[%s16 + $0x2c] sm:$0xf]
        %v1367 = vld [vmem:[%s16 + $0x30] sm:$0xf]
        %v1368 = vld [vmem:[%s16 + $0x34] sm:$0xf]
        %v1369 = vld [vmem:[%s16 + $0x38] sm:$0xf]
        %v1370 = vld [vmem:[%s16 + $0x3c] sm:$0xf]
        %v1371 = vld [vmem:[%s17] sm:$0x1]
        %v1373 = vlaneseq
        %v1374 = vshrl.u32 %v1373, 7
        %v1375 = vsub.s32 0, %v1374
        %v1376 = vrot.slane %v1371, %v1375
        %v1394 = vunpack.c.l.b16 %v1355
        %v1395 = vunpack.c.l.b16 %v1356
        %v1396 = vunpack.c.l.b16 %v1357
        %v1397 = vunpack.c.l.b16 %v1358
        %v1398 = vunpack.c.l.b16 %v1359
        %v1399 = vunpack.c.l.b16 %v1360
        %v1400 = vunpack.c.l.b16 %v1361
        %v1401 = vunpack.c.l.b16 %v1362
        %v1402 = vunpack.c.l.b16 %v1363
        %v1403 = vunpack.c.l.b16 %v1364
        %v1404 = vunpack.c.l.b16 %v1365
        %v1405 = vunpack.c.l.b16 %v1366
        %v1406 = vunpack.c.l.b16 %v1367
        %v1407 = vunpack.c.l.b16 %v1368
        %v1408 = vunpack.c.l.b16 %v1369
        %v1409 = vunpack.c.l.b16 %v1370
        %v1410 = vpack.c.b16 %v1395, %v1394
        %v1411 = vpack.c.b16 %v1397, %v1396
        %v1412 = vpack.c.b16 %v1399, %v1398
        %v1413 = vpack.c.b16 %v1401, %v1400
        %v1414 = vpack.c.b16 %v1403, %v1402
        %v1415 = vpack.c.b16 %v1405, %v1404
        %v1416 = vpack.c.b16 %v1407, %v1406
        %v1417 = vpack.c.b16 %v1409, %v1408
        %1426 = vmatprep.subr.bf16.mxu0 0
        %1427 = vmatpush1.bf16.msra.mxu0 %v1417
        %1428 = vmatprep.subr.bf16.mxu0 0
        %1429 = vmatpush1.bf16.msra.mxu0 %v1416
        %1430 = vmatprep.subr.bf16.mxu0 0
        %1431 = vmatpush1.bf16.msra.mxu0 %v1415
        %1432 = vmatprep.subr.bf16.mxu0 0
        %1433 = vmatpush1.bf16.msra.mxu0 %v1414
        %1434 = vmatprep.subr.bf16.mxu0 0
        %1435 = vmatpush1.bf16.msra.mxu0 %v1413
        %1436 = vmatprep.subr.bf16.mxu0 0
        %1437 = vmatpush1.bf16.msra.mxu0 %v1412
        %1438 = vmatprep.subr.bf16.mxu0 0
        %1439 = vmatpush1.bf16.msra.mxu0 %v1411
        %1440 = vmatprep.subr.bf16.mxu0 0
        %1441 = vmatpush1.bf16.msra.mxu0 %v1410
        %1442 = vmatprep.subr.bf16.mxu0 0
        %1443 = vmatpush2.bf16.msra.mxu0 0
        %1444 = vmatprep.subr.bf16.mxu0 0
        %1445 = vmatpush2.bf16.msra.mxu0 0
        %1446 = vmatprep.subr.bf16.mxu0 0
        %1447 = vmatpush2.bf16.msra.mxu0 0
        %1448 = vmatprep.subr.bf16.mxu0 0
        %1449 = vmatpush2.bf16.msra.mxu0 0
        %1450 = vmatprep.subr.bf16.mxu0 0
        %1451 = vmatpush2.bf16.msra.mxu0 0
        %1452 = vmatprep.subr.bf16.mxu0 0
        %1453 = vmatpush2.bf16.msra.mxu0 0
        %1454 = vmatprep.subr.bf16.mxu0 0
        %1455 = vmatpush2.bf16.msra.mxu0 0
        %1456 = vmatprep.subr.bf16.mxu0 0
        %1457 = vmatpush2.bf16.msra.mxu0 0
        %1458 = vmatprep.mubr.bf16.mxu0 0
        %1459 = vmatmul.mubr.bf16.gmra.mxu0 %v1354
        %v1460 = vpop.f32.mrf.mxu0
        %v1461 = vadd.f32 %v1376, %v1460
        %v1462 = vpop.f32.mrf.mxu0
        %v1463 = vpop.f32.mrf.mxu0
        %v1464 = vpop.f32.mrf.mxu0
        %1465 = vdwg.mxu0
        %v1466 = vadd.f32 %v1248, %v1461
        %1467 = vst.msk [vmem:[%s581] sm:$0xff] %vm687, %v1466
        %s1468 = sand.u32 %s428, 1
        %s1469 = scalar_lea.sflag [#allocation3], %s1468
        %s1470 = sand.u32 %s428, 1
        %s1471 = smul.addr %s1470, 8
        %s1472 = scalar_lea.vmem [#allocation2], %s1471
        // Predicated region
        $region93: #{tpu_custom_call.1} parent=91 // pred_check
          %p1473 = pneg %p438
        $region94: #{tpu_custom_call.1} parent=91 // pred_check_branch
          %1475 = sbr.rel (%p1473) target = $region96
        $region95: #{tpu_custom_call.1} parent=91 // pred_region
          %s1477 = ssub.s32 128, 128
          %1478 = vsyncadd %s1469, %s1477
          %s1479 = smul.addr %s32, 128
          %s1480 = scalar_lea.hbm %s18, %s1479
          %s1482 = sshll.u32 %s1472, 4
          %s1483 = int_to_ptr.vmem [resolvable:$true] %s1482
          %1485 = dma.vmem_to_hbm [thread:$0]  %s1483, 128, %s1480, %s1469
        $region96: #{tpu_custom_call.1} parent=91 // pred_fallthru
          _
      $region92: #{tpu_custom_call.1} parent=5 // pred_fallthru
        _
      %p1486 = scmp.le.s32.totalorder 2, %s27
      // Predicated region
      $region97: #{tpu_custom_call.1} parent=5 // pred_check
        %p1487 = pneg %p1486
      $region98: #{tpu_custom_call.1} parent=5 // pred_check_branch
        %1489 = sbr.rel (%p1487) target = $region100
      $region99: #{tpu_custom_call.1} parent=5 // pred_region
        %s1490 = ssub.s32 %s27, 2
        // Predicated region
        $region101: #{tpu_custom_call.1} parent=99 // pred_check
          %p1491 = pneg %p444
        $region102: #{tpu_custom_call.1} parent=99 // pred_check_branch
          %1493 = sbr.rel (%p1491) target = $region104
        $region103: #{tpu_custom_call.1} parent=99 // pred_region
          %s1494 = sand.u32 %s429, 1
          %s1495 = scalar_lea.sflag [#allocation3], %s1494
          %s1496 = sand.u32 %s429, 1
          %s1497 = smul.addr %s1496, 8
          %s1498 = scalar_lea.vmem [#allocation2], %s1497
          %1499 = dma.done %s1495, 128
        $region104: #{tpu_custom_call.1} parent=99 // pred_fallthru
          _
      $region100: #{tpu_custom_call.1} parent=5 // pred_fallthru
        _
    $region6: #{tpu_custom_call.1} parent=1 // loop_footer
      %s31 = sadd.s32 1, %s27
    $region7: #{tpu_custom_call.1} parent=1 // loop_footer_branch
      %26 = sbr.rel target = $region3
    $region8: #{tpu_custom_call.1} parent=1 // loop_exit
      _
    %1500 = vsyncpa [#allocation3], 1
    %s1501 = scalar_lea.sflag [#allocation3], 1
    %1502 = vsyncpa %s1501, 1

// kernel: tpu_custom_call.1
$region0: #{tpu_custom_call.1}
  #allocation0 [shape = 'u32[]', space=smem, size = 0x4, offset = 0x4, fixed_abs, tag = 'smem constant byte address 0x4 - core index']
  #allocation1 [shape = 'u32[144,128]{1,0:T(1,128)}', space=vmem, size = 0x12000, scoped, tag = 'internal scratch']
  %s0 = inlined_call_operand.vmem [shape: bf16[2,8,64], index: 0, kind: input, shape index: {}]
  %s1 = inlined_call_operand.vmem [shape: bf16[2,32,64], index: 1, kind: input, shape index: {}]
  %s2 = inlined_call_operand.vmem [shape: bf16[64,32], index: 2, kind: input, shape index: {}]
  %s3 = inlined_call_operand.vmem [shape: f32[1,32], index: 3, kind: input, shape index: {}]
  %s4 = inlined_call_operand.vmem [shape: f32[1,32], index: 4, kind: input, shape index: {}]
  %s5 = inlined_call_operand.vmem [shape: f32[1,32], index: 5, kind: input, shape index: {}]
  %s6 = inlined_call_operand.vmem [shape: bf16[32,32], index: 6, kind: input, shape index: {}]
  %s7 = inlined_call_operand.vmem [shape: f32[1,32], index: 7, kind: input, shape index: {}]
  %s8 = inlined_call_operand.vmem [shape: bf16[32,64], index: 8, kind: input, shape index: {}]
  %s9 = inlined_call_operand.vmem [shape: f32[1,64], index: 9, kind: input, shape index: {}]
  %s10 = inlined_call_operand.vmem [shape: bf16[32,32], index: 10, kind: input, shape index: {}]
  %s11 = inlined_call_operand.vmem [shape: f32[1,32], index: 11, kind: input, shape index: {}]
  %s12 = inlined_call_operand.vmem [shape: f32[1,32], index: 12, kind: input, shape index: {}]
  %s13 = inlined_call_operand.vmem [shape: f32[1,32], index: 13, kind: input, shape index: {}]
  %s14 = inlined_call_operand.vmem [shape: bf16[32,128], index: 14, kind: input, shape index: {}]
  %s15 = inlined_call_operand.vmem [shape: f32[1,128], index: 15, kind: input, shape index: {}]
  %s16 = inlined_call_operand.vmem [shape: bf16[128,32], index: 16, kind: input, shape index: {}]
  %s17 = inlined_call_operand.vmem [shape: f32[1,32], index: 17, kind: input, shape index: {}]
  %s18 = inlined_call_operand.hbm [shape: f32[16,32], index: 18, kind: output, shape index: {}]
  %s19 = sld [smem:[#allocation0]]
  $region105: #{tpu_custom_call.1} parent=0
    _
  %s21 = ssub.s32 1, %s19
  %s22 = scalar_select 0, %s21, %s19
  $region1: #{tpu_custom_call.1} parent=0
    #allocation2 [shape = 'u8[8192]{0}', space=vmem, size = 0x2000, scoped, tag = 'output window, operand 0']
    #allocation3 [shape = 's32[2]{0}', space=sflag, size = 0x8, scoped, tag = 'scoped memory for tpu_custom_call.1']
    %23 = vsyncpa [#allocation3], 0
    %s24 = scalar_lea.sflag [#allocation3], 1
    %25 = vsyncpa %s24, 0
    loop: start=0, step=1, limit=4
    $region2: #{tpu_custom_call.1} parent=1 // loop_pre_header
      _
    $region3: #{tpu_custom_call.1} parent=1 // loop_header
      %s27 = sphi 0, %s31
      %p28 = scmp.ge.s32.totalorder %s27, 4
      %s37 = sphi 0, %s39
      %s40 = sphi 0, %s37
      %s41 = sphi 0, %s40
      %s57 = sphi 0, %s41
      %s63 = sphi 0, %s65
      %s66 = sphi 0, %s63
      %s67 = sphi 0, %s66
      %s83 = sphi 0, %s67
      %s87 = sphi 0, %s87
      %s89 = sphi 0, %s87
      %s90 = sphi 0, %s89
      %s104 = sphi 0, %s90
      %s108 = sphi 0, %s108
      %s110 = sphi 0, %s108
      %s111 = sphi 0, %s110
      %s125 = sphi 0, %s111
      %s129 = sphi 0, %s129
      %s131 = sphi 0, %s129
      %s132 = sphi 0, %s131
      %s146 = sphi 0, %s132
      %s150 = sphi 0, %s150
      %s152 = sphi 0, %s150
      %s153 = sphi 0, %s152
      %s167 = sphi 0, %s153
      %s171 = sphi 0, %s171
      %s173 = sphi 0, %s171
      %s174 = sphi 0, %s173
      %s188 = sphi 0, %s174
      %s192 = sphi 0, %s192
      %s194 = sphi 0, %s192
      %s195 = sphi 0, %s194
      %s209 = sphi 0, %s195
      %s213 = sphi 0, %s213
      %s215 = sphi 0, %s213
      %s216 = sphi 0, %s215
      %s230 = sphi 0, %s216
      %s234 = sphi 0, %s234
      %s236 = sphi 0, %s234
      %s237 = sphi 0, %s236
      %s251 = sphi 0, %s237
      %s255 = sphi 0, %s255
      %s257 = sphi 0, %s255
      %s258 = sphi 0, %s257
      %s272 = sphi 0, %s258
      %s276 = sphi 0, %s276
      %s278 = sphi 0, %s276
      %s279 = sphi 0, %s278
      %s293 = sphi 0, %s279
      %s297 = sphi 0, %s297
      %s299 = sphi 0, %s297
      %s300 = sphi 0, %s299
      %s314 = sphi 0, %s300
      %s318 = sphi 0, %s318
      %s320 = sphi 0, %s318
      %s321 = sphi 0, %s320
      %s335 = sphi 0, %s321
      %s339 = sphi 0, %s339
      %s341 = sphi 0, %s339
      %s342 = sphi 0, %s341
      %s356 = sphi 0, %s342
      %s360 = sphi 0, %s360
      %s362 = sphi 0, %s360
      %s363 = sphi 0, %s362
      %s377 = sphi 0, %s363
      %s381 = sphi 0, %s381
      %s383 = sphi 0, %s381
      %s384 = sphi 0, %s383
      %s398 = sphi 0, %s384
      %s402 = sphi 0, %s402
      %s404 = sphi 0, %s402
      %s405 = sphi 0, %s404
      %s419 = sphi 0, %s405
      %s425 = sphi 0, %s427
      %s428 = sphi 0, %s425
      %s429 = sphi 0, %s428
      %s445 = sphi 0, %s429
    $region4: #{tpu_custom_call.1} parent=1 // loop_header_branch
      %30 = sbr.rel (%p28) target = $region8
    $region5: #{tpu_custom_call.1} parent=1 // loop_body
      %s32 = ssub.s32 %s27, 1
      %s33 = ssub.s32 %s27, 2
      %s34 = sadd.s32 %s27, 1
      %s35 = ssub.s32 %s27, %s34
      %p36 = scmp.eq.s32.totalorder %s35, 0
      %s38 = sadd.s32 %s37, 1
      %s39 = scalar_select %p36, %s37, %s38
      %p42 = pneg %p36
      %p43 = scmp.eq.s32.totalorder %s27, 1
      %p44 = por %p42, %p43
      %p45 = scmp.ne.s32.totalorder %s37, %s40
      %p46 = scmp.eq.s32.totalorder %s27, 0
      %p47 = por %p45, %p46
      %p48 = scmp.ne.s32.totalorder %s37, %s40
      %p49 = scmp.eq.s32.totalorder %s32, 1
      %p50 = por %p48, %p49
      %p51 = scmp.ne.s32.totalorder %s40, %s41
      %p52 = scmp.eq.s32.totalorder %s32, 0
      %p53 = por %p51, %p52
      %p54 = scmp.ne.s32.totalorder %s40, %s41
      %p55 = scmp.eq.s32.totalorder %s33, 1
      %p56 = por %p54, %p55
      %p58 = scmp.ne.s32.totalorder %s41, %s57
      %p59 = scmp.eq.s32.totalorder %s33, 0
      %p60 = por %p58, %p59
      %s61 = ssub.s32 %s27, %s34
      %p62 = scmp.eq.s32.totalorder %s61, 0
      %s64 = sadd.s32 %s63, 1
      %s65 = scalar_select %p62, %s63, %s64
      %p68 = pneg %p62
      %p69 = scmp.eq.s32.totalorder %s27, 1
      %p70 = por %p68, %p69
      %p71 = scmp.ne.s32.totalorder %s63, %s66
      %p72 = scmp.eq.s32.totalorder %s27, 0
      %p73 = por %p71, %p72
      %p74 = scmp.ne.s32.totalorder %s63, %s66
      %p75 = scmp.eq.s32.totalorder %s32, 1
      %p76 = por %p74, %p75
      %p77 = scmp.ne.s32.totalorder %s66, %s67
      %p78 = scmp.eq.s32.totalorder %s32, 0
      %p79 = por %p77, %p78
      %p80 = scmp.ne.s32.totalorder %s66, %s67
      %p81 = scmp.eq.s32.totalorder %s33, 1
      %p82 = por %p80, %p81
      %p84 = scmp.ne.s32.totalorder %s67, %s83
      %p85 = scmp.eq.s32.totalorder %s33, 0
      %p86 = por %p84, %p85
      %s88 = sadd.s32 %s87, 1
      %p91 = scmp.eq.s32.totalorder %s27, 1
      %p92 = scmp.ne.s32.totalorder %s87, %s89
      %p93 = scmp.eq.s32.totalorder %s27, 0
      %p94 = por %p92, %p93
      %p95 = scmp.ne.s32.totalorder %s87, %s89
      %p96 = scmp.eq.s32.totalorder %s32, 1
      %p97 = por %p95, %p96
      %p98 = scmp.ne.s32.totalorder %s89, %s90
      %p99 = scmp.eq.s32.totalorder %s32, 0
      %p100 = por %p98, %p99
      %p101 = scmp.ne.s32.totalorder %s89, %s90
      %p102 = scmp.eq.s32.totalorder %s33, 1
      %p103 = por %p101, %p102
      %p105 = scmp.ne.s32.totalorder %s90, %s104
      %p106 = scmp.eq.s32.totalorder %s33, 0
      %p107 = por %p105, %p106
      %s109 = sadd.s32 %s108, 1
      %p112 = scmp.eq.s32.totalorder %s27, 1
      %p113 = scmp.ne.s32.totalorder %s108, %s110
      %p114 = scmp.eq.s32.totalorder %s27, 0
      %p115 = por %p113, %p114
      %p116 = scmp.ne.s32.totalorder %s108, %s110
      %p117 = scmp.eq.s32.totalorder %s32, 1
      %p118 = por %p116, %p117
      %p119 = scmp.ne.s32.totalorder %s110, %s111
      %p120 = scmp.eq.s32.totalorder %s32, 0
      %p121 = por %p119, %p120
      %p122 = scmp.ne.s32.totalorder %s110, %s111
      %p123 = scmp.eq.s32.totalorder %s33, 1
      %p124 = por %p122, %p123
      %p126 = scmp.ne.s32.totalorder %s111, %s125
      %p127 = scmp.eq.s32.totalorder %s33, 0
      %p128 = por %p126, %p127
      %s130 = sadd.s32 %s129, 1
      %p133 = scmp.eq.s32.totalorder %s27, 1
      %p134 = scmp.ne.s32.totalorder %s129, %s131
      %p135 = scmp.eq.s32.totalorder %s27, 0
      %p136 = por %p134, %p135
      %p137 = scmp.ne.s32.totalorder %s129, %s131
      %p138 = scmp.eq.s32.totalorder %s32, 1
      %p139 = por %p137, %p138
      %p140 = scmp.ne.s32.totalorder %s131, %s132
      %p141 = scmp.eq.s32.totalorder %s32, 0
      %p142 = por %p140, %p141
      %p143 = scmp.ne.s32.totalorder %s131, %s132
      %p144 = scmp.eq.s32.totalorder %s33, 1
      %p145 = por %p143, %p144
      %p147 = scmp.ne.s32.totalorder %s132, %s146
      %p148 = scmp.eq.s32.totalorder %s33, 0
      %p149 = por %p147, %p148
      %s151 = sadd.s32 %s150, 1
      %p154 = scmp.eq.s32.totalorder %s27, 1
      %p155 = scmp.ne.s32.totalorder %s150, %s152
      %p156 = scmp.eq.s32.totalorder %s27, 0
      %p157 = por %p155, %p156
      %p158 = scmp.ne.s32.totalorder %s150, %s152
      %p159 = scmp.eq.s32.totalorder %s32, 1
      %p160 = por %p158, %p159
      %p161 = scmp.ne.s32.totalorder %s152, %s153
      %p162 = scmp.eq.s32.totalorder %s32, 0
      %p163 = por %p161, %p162
      %p164 = scmp.ne.s32.totalorder %s152, %s153
      %p165 = scmp.eq.s32.totalorder %s33, 1
      %p166 = por %p164, %p165
      %p168 = scmp.ne.s32.totalorder %s153, %s167
      %p169 = scmp.eq.s32.totalorder %s33, 0
      %p170 = por %p168, %p169
      %s172 = sadd.s32 %s171, 1
      %p175 = scmp.eq.s32.totalorder %s27, 1
      %p176 = scmp.ne.s32.totalorder %s171, %s173
      %p177 = scmp.eq.s32.totalorder %s27, 0
      %p178 = por %p176, %p177
      %p179 = scmp.ne.s32.totalorder %s171, %s173
      %p180 = scmp.eq.s32.totalorder %s32, 1
      %p181 = por %p179, %p180
      %p182 = scmp.ne.s32.totalorder %s173, %s174
      %p183 = scmp.eq.s32.totalorder %s32, 0
      %p184 = por %p182, %p183
      %p185 = scmp.ne.s32.totalorder %s173, %s174
      %p186 = scmp.eq.s32.totalorder %s33, 1
      %p187 = por %p185, %p186
      %p189 = scmp.ne.s32.totalorder %s174, %s188
      %p190 = scmp.eq.s32.totalorder %s33, 0
      %p191 = por %p189, %p190
      %s193 = sadd.s32 %s192, 1
      %p196 = scmp.eq.s32.totalorder %s27, 1
      %p197 = scmp.ne.s32.totalorder %s192, %s194
      %p198 = scmp.eq.s32.totalorder %s27, 0
      %p199 = por %p197, %p198
      %p200 = scmp.ne.s32.totalorder %s192, %s194
      %p201 = scmp.eq.s32.totalorder %s32, 1
      %p202 = por %p200, %p201
      %p203 = scmp.ne.s32.totalorder %s194, %s195
      %p204 = scmp.eq.s32.totalorder %s32, 0
      %p205 = por %p203, %p204
      %p206 = scmp.ne.s32.totalorder %s194, %s195
      %p207 = scmp.eq.s32.totalorder %s33, 1
      %p208 = por %p206, %p207
      %p210 = scmp.ne.s32.totalorder %s195, %s209
      %p211 = scmp.eq.s32.totalorder %s33, 0
      %p212 = por %p210, %p211
      %s214 = sadd.s32 %s213, 1
      %p217 = scmp.eq.s32.totalorder %s27, 1
      %p218 = scmp.ne.s32.totalorder %s213, %s215
      %p219 = scmp.eq.s32.totalorder %s27, 0
      %p220 = por %p218, %p219
      %p221 = scmp.ne.s32.totalorder %s213, %s215
      %p222 = scmp.eq.s32.totalorder %s32, 1
      %p223 = por %p221, %p222
      %p224 = scmp.ne.s32.totalorder %s215, %s216
      %p225 = scmp.eq.s32.totalorder %s32, 0
      %p226 = por %p224, %p225
      %p227 = scmp.ne.s32.totalorder %s215, %s216
      %p228 = scmp.eq.s32.totalorder %s33, 1
      %p229 = por %p227, %p228
      %p231 = scmp.ne.s32.totalorder %s216, %s230
      %p232 = scmp.eq.s32.totalorder %s33, 0
      %p233 = por %p231, %p232
      %s235 = sadd.s32 %s234, 1
      %p238 = scmp.eq.s32.totalorder %s27, 1
      %p239 = scmp.ne.s32.totalorder %s234, %s236
      %p240 = scmp.eq.s32.totalorder %s27, 0
      %p241 = por %p239, %p240
      %p242 = scmp.ne.s32.totalorder %s234, %s236
      %p243 = scmp.eq.s32.totalorder %s32, 1
      %p244 = por %p242, %p243
      %p245 = scmp.ne.s32.totalorder %s236, %s237
      %p246 = scmp.eq.s32.totalorder %s32, 0
      %p247 = por %p245, %p246
      %p248 = scmp.ne.s32.totalorder %s236, %s237
      %p249 = scmp.eq.s32.totalorder %s33, 1
      %p250 = por %p248, %p249
      %p252 = scmp.ne.s32.totalorder %s237, %s251
      %p253 = scmp.eq.s32.totalorder %s33, 0
      %p254 = por %p252, %p253
      %s256 = sadd.s32 %s255, 1
      %p259 = scmp.eq.s32.totalorder %s27, 1
      %p260 = scmp.ne.s32.totalorder %s255, %s257
      %p261 = scmp.eq.s32.totalorder %s27, 0
      %p262 = por %p260, %p261
      %p263 = scmp.ne.s32.totalorder %s255, %s257
      %p264 = scmp.eq.s32.totalorder %s32, 1
      %p265 = por %p263, %p264
      %p266 = scmp.ne.s32.totalorder %s257, %s258
      %p267 = scmp.eq.s32.totalorder %s32, 0
      %p268 = por %p266, %p267
      %p269 = scmp.ne.s32.totalorder %s257, %s258
      %p270 = scmp.eq.s32.totalorder %s33, 1
      %p271 = por %p269, %p270
      %p273 = scmp.ne.s32.totalorder %s258, %s272
      %p274 = scmp.eq.s32.totalorder %s33, 0
      %p275 = por %p273, %p274
      %s277 = sadd.s32 %s276, 1
      %p280 = scmp.eq.s32.totalorder %s27, 1
      %p281 = scmp.ne.s32.totalorder %s276, %s278
      %p282 = scmp.eq.s32.totalorder %s27, 0
      %p283 = por %p281, %p282
      %p284 = scmp.ne.s32.totalorder %s276, %s278
      %p285 = scmp.eq.s32.totalorder %s32, 1
      %p286 = por %p284, %p285
      %p287 = scmp.ne.s32.totalorder %s278, %s279
      %p288 = scmp.eq.s32.totalorder %s32, 0
      %p289 = por %p287, %p288
      %p290 = scmp.ne.s32.totalorder %s278, %s279
      %p291 = scmp.eq.s32.totalorder %s33, 1
      %p292 = por %p290, %p291
      %p294 = scmp.ne.s32.totalorder %s279, %s293
      %p295 = scmp.eq.s32.totalorder %s33, 0
      %p296 = por %p294, %p295
      %s298 = sadd.s32 %s297, 1
      %p301 = scmp.eq.s32.totalorder %s27, 1
      %p302 = scmp.ne.s32.totalorder %s297, %s299
      %p303 = scmp.eq.s32.totalorder %s27, 0
      %p304 = por %p302, %p303
      %p305 = scmp.ne.s32.totalorder %s297, %s299
      %p306 = scmp.eq.s32.totalorder %s32, 1
      %p307 = por %p305, %p306
      %p308 = scmp.ne.s32.totalorder %s299, %s300
      %p309 = scmp.eq.s32.totalorder %s32, 0
      %p310 = por %p308, %p309
      %p311 = scmp.ne.s32.totalorder %s299, %s300
      %p312 = scmp.eq.s32.totalorder %s33, 1
      %p313 = por %p311, %p312
      %p315 = scmp.ne.s32.totalorder %s300, %s314
      %p316 = scmp.eq.s32.totalorder %s33, 0
      %p317 = por %p315, %p316
      %s319 = sadd.s32 %s318, 1
      %p322 = scmp.eq.s32.totalorder %s27, 1
      %p323 = scmp.ne.s32.totalorder %s318, %s320
      %p324 = scmp.eq.s32.totalorder %s27, 0
      %p325 = por %p323, %p324
      %p326 = scmp.ne.s32.totalorder %s318, %s320
      %p327 = scmp.eq.s32.totalorder %s32, 1
      %p328 = por %p326, %p327
      %p329 = scmp.ne.s32.totalorder %s320, %s321
      %p330 = scmp.eq.s32.totalorder %s32, 0
      %p331 = por %p329, %p330
      %p332 = scmp.ne.s32.totalorder %s320, %s321
      %p333 = scmp.eq.s32.totalorder %s33, 1
      %p334 = por %p332, %p333
      %p336 = scmp.ne.s32.totalorder %s321, %s335
      %p337 = scmp.eq.s32.totalorder %s33, 0
      %p338 = por %p336, %p337
      %s340 = sadd.s32 %s339, 1
      %p343 = scmp.eq.s32.totalorder %s27, 1
      %p344 = scmp.ne.s32.totalorder %s339, %s341
      %p345 = scmp.eq.s32.totalorder %s27, 0
      %p346 = por %p344, %p345
      %p347 = scmp.ne.s32.totalorder %s339, %s341
      %p348 = scmp.eq.s32.totalorder %s32, 1
      %p349 = por %p347, %p348
      %p350 = scmp.ne.s32.totalorder %s341, %s342
      %p351 = scmp.eq.s32.totalorder %s32, 0
      %p352 = por %p350, %p351
      %p353 = scmp.ne.s32.totalorder %s341, %s342
      %p354 = scmp.eq.s32.totalorder %s33, 1
      %p355 = por %p353, %p354
      %p357 = scmp.ne.s32.totalorder %s342, %s356
      %p358 = scmp.eq.s32.totalorder %s33, 0
      %p359 = por %p357, %p358
      %s361 = sadd.s32 %s360, 1
      %p364 = scmp.eq.s32.totalorder %s27, 1
      %p365 = scmp.ne.s32.totalorder %s360, %s362
      %p366 = scmp.eq.s32.totalorder %s27, 0
      %p367 = por %p365, %p366
      %p368 = scmp.ne.s32.totalorder %s360, %s362
      %p369 = scmp.eq.s32.totalorder %s32, 1
      %p370 = por %p368, %p369
      %p371 = scmp.ne.s32.totalorder %s362, %s363
      %p372 = scmp.eq.s32.totalorder %s32, 0
      %p373 = por %p371, %p372
      %p374 = scmp.ne.s32.totalorder %s362, %s363
      %p375 = scmp.eq.s32.totalorder %s33, 1
      %p376 = por %p374, %p375
      %p378 = scmp.ne.s32.totalorder %s363, %s377
      %p379 = scmp.eq.s32.totalorder %s33, 0
      %p380 = por %p378, %p379
      %s382 = sadd.s32 %s381, 1
      %p385 = scmp.eq.s32.totalorder %s27, 1
      %p386 = scmp.ne.s32.totalorder %s381, %s383
      %p387 = scmp.eq.s32.totalorder %s27, 0
      %p388 = por %p386, %p387
      %p389 = scmp.ne.s32.totalorder %s381, %s383
      %p390 = scmp.eq.s32.totalorder %s32, 1
      %p391 = por %p389, %p390
      %p392 = scmp.ne.s32.totalorder %s383, %s384
      %p393 = scmp.eq.s32.totalorder %s32, 0
      %p394 = por %p392, %p393
      %p395 = scmp.ne.s32.totalorder %s383, %s384
      %p396 = scmp.eq.s32.totalorder %s33, 1
      %p397 = por %p395, %p396
      %p399 = scmp.ne.s32.totalorder %s384, %s398
      %p400 = scmp.eq.s32.totalorder %s33, 0
      %p401 = por %p399, %p400
      %s403 = sadd.s32 %s402, 1
      %p406 = scmp.eq.s32.totalorder %s27, 1
      %p407 = scmp.ne.s32.totalorder %s402, %s404
      %p408 = scmp.eq.s32.totalorder %s27, 0
      %p409 = por %p407, %p408
      %p410 = scmp.ne.s32.totalorder %s402, %s404
      %p411 = scmp.eq.s32.totalorder %s32, 1
      %p412 = por %p410, %p411
      %p413 = scmp.ne.s32.totalorder %s404, %s405
      %p414 = scmp.eq.s32.totalorder %s32, 0
      %p415 = por %p413, %p414
      %p416 = scmp.ne.s32.totalorder %s404, %s405
      %p417 = scmp.eq.s32.totalorder %s33, 1
      %p418 = por %p416, %p417
      %p420 = scmp.ne.s32.totalorder %s405, %s419
      %p421 = scmp.eq.s32.totalorder %s33, 0
      %p422 = por %p420, %p421
      %s423 = ssub.s32 %s27, %s34
      %p424 = scmp.eq.s32.totalorder %s423, 0
      %s426 = sadd.s32 %s425, 1
      %s427 = scalar_select %p424, %s425, %s426
      %p430 = pneg %p424
      %p431 = scmp.eq.s32.totalorder %s27, 1
      %p432 = por %p430, %p431
      %p433 = scmp.ne.s32.totalorder %s425, %s428
      %p434 = scmp.eq.s32.totalorder %s27, 0
      %p435 = por %p433, %p434
      %p436 = scmp.ne.s32.totalorder %s425, %s428
      %p437 = scmp.eq.s32.totalorder %s32, 1
      %p438 = por %p436, %p437
      %p439 = scmp.ne.s32.totalorder %s428, %s429
      %p440 = scmp.eq.s32.totalorder %s32, 0
      %p441 = por %p439, %p440
      %p442 = scmp.ne.s32.totalorder %s428, %s429
      %p443 = scmp.eq.s32.totalorder %s33, 1
      %p444 = por %p442, %p443
      %p446 = scmp.ne.s32.totalorder %s429, %s445
      %p447 = scmp.eq.s32.totalorder %s33, 0
      %p448 = por %p446, %p447
      %p449 = scmp.le.s32.totalorder 1, %s27
      %p450 = scmp.lt.s32.totalorder %s27, 3
      %p451 = pnand %p449, %p450
      %p452 = pneg %p451
      // Predicated region
      $region9: #{tpu_custom_call.1} parent=5 // pred_check
        _
      $region10: #{tpu_custom_call.1} parent=5 // pred_check_branch
        %454 = sbr.rel (%p451) target = $region12
      $region11: #{tpu_custom_call.1} parent=5 // pred_region
        %s455 = ssub.s32 %s27, 1
        // Predicated region
        $region13: #{tpu_custom_call.1} parent=11 // pred_check
          %p456 = pneg %p100
        $region14: #{tpu_custom_call.1} parent=11 // pred_check_branch
          %458 = sbr.rel (%p456) target = $region16
        $region15: #{tpu_custom_call.1} parent=11 // pred_region
          _
        $region16: #{tpu_custom_call.1} parent=11 // pred_fallthru
          _
        // Predicated region
        $region17: #{tpu_custom_call.1} parent=11 // pred_check
          %p459 = pneg %p121
        $region18: #{tpu_custom_call.1} parent=11 // pred_check_branch
          %461 = sbr.rel (%p459) target = $region20
        $region19: #{tpu_custom_call.1} parent=11 // pred_region
          _
        $region20: #{tpu_custom_call.1} parent=11 // pred_fallthru
          _
        // Predicated region
        $region21: #{tpu_custom_call.1} parent=11 // pred_check
          %p462 = pneg %p142
        $region22: #{tpu_custom_call.1} parent=11 // pred_check_branch
          %464 = sbr.rel (%p462) target = $region24
        $region23: #{tpu_custom_call.1} parent=11 // pred_region
          _
        $region24: #{tpu_custom_call.1} parent=11 // pred_fallthru
          _
        // Predicated region
        $region25: #{tpu_custom_call.1} parent=11 // pred_check
          %p465 = pneg %p163
        $region26: #{tpu_custom_call.1} parent=11 // pred_check_branch
          %467 = sbr.rel (%p465) target = $region28
        $region27: #{tpu_custom_call.1} parent=11 // pred_region
          _
        $region28: #{tpu_custom_call.1} parent=11 // pred_fallthru
          _
        // Predicated region
        $region29: #{tpu_custom_call.1} parent=11 // pred_check
          %p468 = pneg %p184
        $region30: #{tpu_custom_call.1} parent=11 // pred_check_branch
          %470 = sbr.rel (%p468) target = $region32
        $region31: #{tpu_custom_call.1} parent=11 // pred_region
          _
        $region32: #{tpu_custom_call.1} parent=11 // pred_fallthru
          _
        // Predicated region
        $region33: #{tpu_custom_call.1} parent=11 // pred_check
          %p471 = pneg %p205
        $region34: #{tpu_custom_call.1} parent=11 // pred_check_branch
          %473 = sbr.rel (%p471) target = $region36
        $region35: #{tpu_custom_call.1} parent=11 // pred_region
          _
        $region36: #{tpu_custom_call.1} parent=11 // pred_fallthru
          _
        // Predicated region
        $region37: #{tpu_custom_call.1} parent=11 // pred_check
          %p474 = pneg %p226
        $region38: #{tpu_custom_call.1} parent=11 // pred_check_branch
          %476 = sbr.rel (%p474) target = $region40
        $region39: #{tpu_custom_call.1} parent=11 // pred_region
          _
        $region40: #{tpu_custom_call.1} parent=11 // pred_fallthru
          _
        // Predicated region
        $region41: #{tpu_custom_call.1} parent=11 // pred_check
          %p477 = pneg %p247
        $region42: #{tpu_custom_call.1} parent=11 // pred_check_branch
          %479 = sbr.rel (%p477) target = $region44
        $region43: #{tpu_custom_call.1} parent=11 // pred_region
          _
        $region44: #{tpu_custom_call.1} parent=11 // pred_fallthru
          _
        // Predicated region
        $region45: #{tpu_custom_call.1} parent=11 // pred_check
          %p480 = pneg %p268
        $region46: #{tpu_custom_call.1} parent=11 // pred_check_branch
          %482 = sbr.rel (%p480) target = $region48
        $region47: #{tpu_custom_call.1} parent=11 // pred_region
          _
        $region48: #{tpu_custom_call.1} parent=11 // pred_fallthru
          _
        // Predicated region
        $region49: #{tpu_custom_call.1} parent=11 // pred_check
          %p483 = pneg %p289
        $region50: #{tpu_custom_call.1} parent=11 // pred_check_branch
          %485 = sbr.rel (%p483) target = $region52
        $region51: #{tpu_custom_call.1} parent=11 // pred_region
          _
        $region52: #{tpu_custom_call.1} parent=11 // pred_fallthru
          _
        // Predicated region
        $region53: #{tpu_custom_call.1} parent=11 // pred_check
          %p486 = pneg %p310
        $region54: #{tpu_custom_call.1} parent=11 // pred_check_branch
          %488 = sbr.rel (%p486) target = $region56
        $region55: #{tpu_custom_call.1} parent=11 // pred_region
          _
        $region56: #{tpu_custom_call.1} parent=11 // pred_fallthru
          _
        // Predicated region
        $region57: #{tpu_custom_call.1} parent=11 // pred_check
          %p489 = pneg %p331
        $region58: #{tpu_custom_call.1} parent=11 // pred_check_branch
          %491 = sbr.rel (%p489) target = $region60
        $region59: #{tpu_custom_call.1} parent=11 // pred_region
          _
        $region60: #{tpu_custom_call.1} parent=11 // pred_fallthru
          _
        // Predicated region
        $region61: #{tpu_custom_call.1} parent=11 // pred_check
          %p492 = pneg %p352
        $region62: #{tpu_custom_call.1} parent=11 // pred_check_branch
          %494 = sbr.rel (%p492) target = $region64
        $region63: #{tpu_custom_call.1} parent=11 // pred_region
          _
        $region64: #{tpu_custom_call.1} parent=11 // pred_fallthru
          _
        // Predicated region
        $region65: #{tpu_custom_call.1} parent=11 // pred_check
          %p495 = pneg %p373
        $region66: #{tpu_custom_call.1} parent=11 // pred_check_branch
          %497 = sbr.rel (%p495) target = $region68
        $region67: #{tpu_custom_call.1} parent=11 // pred_region
          _
        $region68: #{tpu_custom_call.1} parent=11 // pred_fallthru
          _
        // Predicated region
        $region69: #{tpu_custom_call.1} parent=11 // pred_check
          %p498 = pneg %p394
        $region70: #{tpu_custom_call.1} parent=11 // pred_check_branch
          %500 = sbr.rel (%p498) target = $region72
        $region71: #{tpu_custom_call.1} parent=11 // pred_region
          _
        $region72: #{tpu_custom_call.1} parent=11 // pred_fallthru
          _
        // Predicated region
        $region73: #{tpu_custom_call.1} parent=11 // pred_check
          %p501 = pneg %p415
        $region74: #{tpu_custom_call.1} parent=11 // pred_check_branch
          %503 = sbr.rel (%p501) target = $region76
        $region75: #{tpu_custom_call.1} parent=11 // pred_region
          _
        $region76: #{tpu_custom_call.1} parent=11 // pred_fallthru
          _
      $region12: #{tpu_custom_call.1} parent=5 // pred_fallthru
        _
      %p504 = scmp.lt.s32.totalorder %s27, 2
      // Predicated region
      $region77: #{tpu_custom_call.1} parent=5 // pred_check
        %p505 = pneg %p504
      $region78: #{tpu_custom_call.1} parent=5 // pred_check_branch
        %507 = sbr.rel (%p505) target = $region80
      $region79: #{tpu_custom_call.1} parent=5 // pred_region
        // Predicated region
        $region81: #{tpu_custom_call.1} parent=79 // pred_check
          %p508 = pneg %p47
        $region82: #{tpu_custom_call.1} parent=79 // pred_check_branch
          %510 = sbr.rel (%p508) target = $region84
        $region83: #{tpu_custom_call.1} parent=79 // pred_region
          %p511 = scmp.lt.s32.totalorder %s27, 1
          %s512 = scalar_select %p511, %s27, 1
          %s513 = smul.addr %s512, 4
          %s514 = scalar_lea.vmem %s0, %s513
        $region84: #{tpu_custom_call.1} parent=79 // pred_fallthru
          _
        // Predicated region
        $region85: #{tpu_custom_call.1} parent=79 // pred_check
          %p515 = pneg %p73
        $region86: #{tpu_custom_call.1} parent=79 // pred_check_branch
          %517 = sbr.rel (%p515) target = $region88
        $region87: #{tpu_custom_call.1} parent=79 // pred_region
          %p518 = scmp.lt.s32.totalorder %s27, 1
          %s519 = scalar_select %p518, %s27, 1
          %s520 = smul.addr %s519, 4
          %s521 = smul.addr %s520, 4
          %s522 = scalar_lea.vmem %s1, %s521
        $region88: #{tpu_custom_call.1} parent=79 // pred_fallthru
          _
      $region80: #{tpu_custom_call.1} parent=5 // pred_fallthru
        _
      %p523 = scmp.le.s32.totalorder 1, %s27
      %p524 = scmp.lt.s32.totalorder %s27, 3
      %p525 = pnand %p523, %p524
      %p526 = pneg %p525
      // Predicated region
      $region89: #{tpu_custom_call.1} parent=5 // pred_check
        _
      $region90: #{tpu_custom_call.1} parent=5 // pred_check_branch
        %528 = sbr.rel (%p525) target = $region92
      $region91: #{tpu_custom_call.1} parent=5 // pred_region
        %s529 = ssub.s32 %s27, 1
        %p530 = scmp.lt.s32.totalorder %s32, 1
        %s531 = scalar_select %p530, %s32, 1
        %s532 = smul.addr %s531, 4
        %s533 = scalar_lea.vmem %s0, %s532
        %p534 = pneg %p53
        %p535 = pneg %p50
        %p536 = scmp.lt.s32.totalorder %s32, 1
        %s537 = scalar_select %p536, %s32, 1
        %s538 = smul.addr %s537, 4
        %s539 = smul.addr %s538, 4
        %s540 = scalar_lea.vmem %s1, %s539
        %p541 = pneg %p79
        %p542 = pneg %p76
        %p543 = pneg %p100
        %p544 = pneg %p97
        %p545 = pneg %p121
        %p546 = pneg %p118
        %p547 = pneg %p142
        %p548 = pneg %p139
        %p549 = pneg %p163
        %p550 = pneg %p160
        %p551 = pneg %p184
        %p552 = pneg %p181
        %p553 = pneg %p205
        %p554 = pneg %p202
        %p555 = pneg %p226
        %p556 = pneg %p223
        %p557 = pneg %p247
        %p558 = pneg %p244
        %p559 = pneg %p268
        %p560 = pneg %p265
        %p561 = pneg %p289
        %p562 = pneg %p286
        %p563 = pneg %p310
        %p564 = pneg %p307
        %p565 = pneg %p331
        %p566 = pneg %p328
        %p567 = pneg %p352
        %p568 = pneg %p349
        %p569 = pneg %p373
        %p570 = pneg %p370
        %p571 = pneg %p394
        %p572 = pneg %p391
        %p573 = pneg %p415
        %p574 = pneg %p412
        %p575 = pneg %p441
        %p576 = pneg %p438
        %s577 = sand.u32 %s428, 1
        %s578 = scalar_lea.sflag [#allocation3], %s577
        %s579 = sand.u32 %s428, 1
        %s580 = smul.addr %s579, 8
        %s581 = scalar_lea.vmem [#allocation2], %s580
        %p582 = scmp.lt.s32.totalorder %s32, 1
        %s583 = scalar_select %p582, %s32, 1
        %s584 = smul.addr %s583, 4
        %s585 = scalar_lea.vmem %s0, %s584
        %p586 = scmp.lt.s32.totalorder %s32, 1
        %s587 = scalar_select %p586, %s32, 1
        %s588 = smul.addr %s587, 4
        %s589 = smul.addr %s588, 4
        %s590 = scalar_lea.vmem %s1, %s589
        %v592 = vld [vmem:[%s585] sm:$0xf]
        %v593 = vld [vmem:[%s2] sm:$0xf]
        %v594 = vld [vmem:[%s2 + $0x4] sm:$0xf]
        %v595 = vld [vmem:[%s2 + $0x8] sm:$0xf]
        %v596 = vld [vmem:[%s2 + $0xc] sm:$0xf]
        %v597 = vld [vmem:[%s2 + $0x10] sm:$0xf]
        %v598 = vld [vmem:[%s2 + $0x14] sm:$0xf]
        %v599 = vld [vmem:[%s2 + $0x18] sm:$0xf]
        %v600 = vld [vmem:[%s2 + $0x1c] sm:$0xf]
        %v601 = vld [vmem:[%s3] sm:$0x1]
        %v603 = vlaneseq
        %v604 = vshrl.u32 %v603, 7
        %v605 = vsub.s32 0, %v604
        %v606 = vrot.slane %v601, %v605
        %v616 = vunpack.c.l.b16 %v593
        %v617 = vunpack.c.l.b16 %v594
        %v618 = vunpack.c.l.b16 %v595
        %v619 = vunpack.c.l.b16 %v596
        %v620 = vunpack.c.l.b16 %v597
        %v621 = vunpack.c.l.b16 %v598
        %v622 = vunpack.c.l.b16 %v599
        %v623 = vunpack.c.l.b16 %v600
        %v624 = vpack.c.b16 %v617, %v616
        %v625 = vpack.c.b16 %v619, %v618
        %v626 = vpack.c.b16 %v621, %v620
        %v627 = vpack.c.b16 %v623, %v622
        %vm632 = vcmask 523264
        %v634 = vsel %vm632, %v592, 0
        %636 = vmatprep.subr.bf16.mxu0 0
        %637 = vmatpush1.bf16.msra.mxu0 0
        %638 = vmatprep.subr.bf16.mxu0 0
        %639 = vmatpush1.bf16.msra.mxu0 0
        %640 = vmatprep.subr.bf16.mxu0 0
        %641 = vmatpush1.bf16.msra.mxu0 0
        %642 = vmatprep.subr.bf16.mxu0 0
        %643 = vmatpush1.bf16.msra.mxu0 0
        %644 = vmatprep.subr.bf16.mxu0 0
        %645 = vmatpush1.bf16.msra.mxu0 %v627
        %646 = vmatprep.subr.bf16.mxu0 0
        %647 = vmatpush1.bf16.msra.mxu0 %v626
        %648 = vmatprep.subr.bf16.mxu0 0
        %649 = vmatpush1.bf16.msra.mxu0 %v625
        %650 = vmatprep.subr.bf16.mxu0 0
        %651 = vmatpush1.bf16.msra.mxu0 %v624
        %652 = vmatprep.subr.bf16.mxu0 0
        %653 = vmatpush2.bf16.msra.mxu0 0
        %654 = vmatprep.subr.bf16.mxu0 0
        %655 = vmatpush2.bf16.msra.mxu0 0
        %656 = vmatprep.subr.bf16.mxu0 0
        %657 = vmatpush2.bf16.msra.mxu0 0
        %658 = vmatprep.subr.bf16.mxu0 0
        %659 = vmatpush2.bf16.msra.mxu0 0
        %660 = vmatprep.subr.bf16.mxu0 0
        %661 = vmatpush2.bf16.msra.mxu0 0
        %662 = vmatprep.subr.bf16.mxu0 0
        %663 = vmatpush2.bf16.msra.mxu0 0
        %664 = vmatprep.subr.bf16.mxu0 0
        %665 = vmatpush2.bf16.msra.mxu0 0
        %666 = vmatprep.subr.bf16.mxu0 0
        %667 = vmatpush2.bf16.msra.mxu0 0
        %668 = vmatprep.mubr.bf16.mxu0 0
        %669 = vmatmul.mubr.bf16.gmra.mxu0 %v634
        %v670 = vpop.f32.mrf.mxu0
        %v671 = vadd.f32 %v606, %v670
        %v672 = vpop.f32.mrf.mxu0
        %v673 = vpop.f32.mrf.mxu0
        %v674 = vpop.f32.mrf.mxu0
        %675 = vdwg.mxu0
        %v676 = vmul.f32 %v671, 0.5
        %v677 = vmul.f32 %v671, %v671
        %v678 = vmul.f32 %v677, %v671
        %v679 = vmul.f32 %v678, 0.044715
        %v680 = vadd.f32 %v671, %v679
        %v681 = vmul.f32 %v680, 0.7978846
        %v682 = vtanh.pop %v681
        %v683 = vadd.f32 %v682, 1.0
        %v684 = vmul.f32 %v676, %v683
        %v685 = vld [vmem:[%s4] sm:$0x1]
        %v686 = vld [vmem:[%s5] sm:$0x1]
        %vm687 = vcmask 261120
        %v688 = vsel %vm687, %v684, 0.0
        %689 = vadd.xlane.f32.xlu0 %v688
        %v690 = vpop.xlane.xlu0 %689
        %v691 = vrcp.pop 32.0
        %v692 = vmul.f32 %v690, %v691
        %v693 = vsub.f32 %v684, %v692
        %v694 = vmul.f32 %v693, %v693
        %v695 = vsel %vm687, %v694, 0.0
        %696 = vadd.xlane.f32.xlu0 %v695
        %v697 = vpop.xlane.xlu0 %696
        %v698 = vmul.f32 %v697, %v691
        %v699 = vadd.f32 %v698, 1e-05
        %v700 = vrsqrt.pop %v699
        %v701 = vmul.f32 %v693, %v700
        %v703 = vlaneseq
        %v704 = vshrl.u32 %v703, 7
        %v705 = vsub.s32 0, %v704
        %v706 = vrot.slane %v685, %v705
        %v708 = vmul.f32 %v701, %v706
        %v710 = vlaneseq
        %v711 = vshrl.u32 %v710, 7
        %v712 = vsub.s32 0, %v711
        %v713 = vrot.slane %v686, %v712
        %v715 = vadd.f32 %v708, %v713
        %v716 = vld [vmem:[%s590] sm:$0xf]
        %v717 = vld [vmem:[%s590 + $0x4] sm:$0xf]
        %v718 = vld [vmem:[%s590 + $0x8] sm:$0xf]
        %v719 = vld [vmem:[%s590 + $0xc] sm:$0xf]
        %v720 = vunpack.c.l.bf16 %v716
        %v721 = vunpack.c.l.bf16 %v717
        %v722 = vunpack.c.l.bf16 %v718
        %v723 = vunpack.c.l.bf16 %v719
        %724 = vxpose.xlu0.b32.start [1/16] %v720, 128
        %725 = vxpose.xlu0.b32.cont [2/16] %v721, 128
        %726 = vxpose.xlu0.b32.cont [3/16] %v722, 128
        %727 = vxpose.xlu0.b32.cont [4/16] %v723, 128
        %728 = vxpose.xlu0.b32.cont [5/16] 0.0, 128
        %729 = vxpose.xlu0.b32.cont [6/16] 0.0, 128
        %730 = vxpose.xlu0.b32.cont [7/16] 0.0, 128
        %731 = vxpose.xlu0.b32.cont [8/16] 0.0, 128
        %732 = vxpose.xlu0.b32.cont [9/16] 0.0, 128
        %733 = vxpose.xlu0.b32.cont [10/16] 0.0, 128
        %734 = vxpose.xlu0.b32.cont [11/16] 0.0, 128
        %735 = vxpose.xlu0.b32.cont [12/16] 0.0, 128
        %736 = vxpose.xlu0.b32.cont [13/16] 0.0, 128
        %737 = vxpose.xlu0.b32.cont [14/16] 0.0, 128
        %738 = vxpose.xlu0.b32.cont [15/16] 0.0, 128
        %739 = vxpose.xlu0.b32.end [16/16] 0.0, 128
        %v740 = vpop.trf.xlu0
        %v741 = vpop.trf.xlu0
        %v742 = vpop.trf.xlu0
        %v743 = vpop.trf.xlu0
        %v744 = vpop.trf.xlu0
        %v745 = vpop.trf.xlu0
        %v746 = vpop.trf.xlu0
        %v747 = vpop.trf.xlu0
        %v748 = vpop.trf.xlu0
        %v749 = vpop.trf.xlu0
        %v750 = vpop.trf.xlu0
        %v751 = vpop.trf.xlu0
        %v752 = vpop.trf.xlu0
        %v753 = vpop.trf.xlu0
        %v754 = vpop.trf.xlu0
        %v755 = vpop.trf.xlu0
        %v756 = vsel %vm687, %v740, 0.0
        %757 = vadd.xlane.f32.xlu0 %v756
        %v758 = vpop.xlane.xlu0 %757
        %v759 = vsel %vm687, %v741, 0.0
        %760 = vadd.xlane.f32.xlu0 %v759
        %v761 = vpop.xlane.xlu0 %760
        %v762 = vsel %vm687, %v742, 0.0
        %763 = vadd.xlane.f32.xlu0 %v762
        %v764 = vpop.xlane.xlu0 %763
        %v765 = vsel %vm687, %v743, 0.0
        %766 = vadd.xlane.f32.xlu0 %v765
        %v767 = vpop.xlane.xlu0 %766
        %v768 = vsel %vm687, %v744, 0.0
        %769 = vadd.xlane.f32.xlu0 %v768
        %v770 = vpop.xlane.xlu0 %769
        %v771 = vsel %vm687, %v745, 0.0
        %772 = vadd.xlane.f32.xlu0 %v771
        %v773 = vpop.xlane.xlu0 %772
        %v774 = vsel %vm687, %v746, 0.0
        %775 = vadd.xlane.f32.xlu0 %v774
        %v776 = vpop.xlane.xlu0 %775
        %v777 = vsel %vm687, %v747, 0.0
        %778 = vadd.xlane.f32.xlu0 %v777
        %v779 = vpop.xlane.xlu0 %778
        %v780 = vmul.f32 %v758, %v691
        %v781 = vmul.f32 %v761, %v691
        %v782 = vmul.f32 %v764, %v691
        %v783 = vmul.f32 %v767, %v691
        %v784 = vmul.f32 %v770, %v691
        %v785 = vmul.f32 %v773, %v691
        %v786 = vmul.f32 %v776, %v691
        %v787 = vmul.f32 %v779, %v691
        %v788 = vsub.f32 %v740, %v780
        %v789 = vsub.f32 %v741, %v781
        %v790 = vsub.f32 %v742, %v782
        %v791 = vsub.f32 %v743, %v783
        %v792 = vsub.f32 %v744, %v784
        %v793 = vsub.f32 %v745, %v785
        %v794 = vsub.f32 %v746, %v786
        %v795 = vsub.f32 %v747, %v787
        %v796 = vmul.f32 %v788, %v788
        %v797 = vmul.f32 %v789, %v789
        %v798 = vmul.f32 %v790, %v790
        %v799 = vmul.f32 %v791, %v791
        %v800 = vmul.f32 %v792, %v792
        %v801 = vmul.f32 %v793, %v793
        %v802 = vmul.f32 %v794, %v794
        %v803 = vmul.f32 %v795, %v795
        %v804 = vsel %vm687, %v796, 0.0
        %805 = vadd.xlane.f32.xlu0 %v804
        %v806 = vpop.xlane.xlu0 %805
        %v807 = vsel %vm687, %v797, 0.0
        %808 = vadd.xlane.f32.xlu0 %v807
        %v809 = vpop.xlane.xlu0 %808
        %v810 = vsel %vm687, %v798, 0.0
        %811 = vadd.xlane.f32.xlu0 %v810
        %v812 = vpop.xlane.xlu0 %811
        %v813 = vsel %vm687, %v799, 0.0
        %814 = vadd.xlane.f32.xlu0 %v813
        %v815 = vpop.xlane.xlu0 %814
        %v816 = vsel %vm687, %v800, 0.0
        %817 = vadd.xlane.f32.xlu0 %v816
        %v818 = vpop.xlane.xlu0 %817
        %v819 = vsel %vm687, %v801, 0.0
        %820 = vadd.xlane.f32.xlu0 %v819
        %v821 = vpop.xlane.xlu0 %820
        %v822 = vsel %vm687, %v802, 0.0
        %823 = vadd.xlane.f32.xlu0 %v822
        %v824 = vpop.xlane.xlu0 %823
        %v825 = vsel %vm687, %v803, 0.0
        %826 = vadd.xlane.f32.xlu0 %v825
        %v827 = vpop.xlane.xlu0 %826
        %v828 = vmul.f32 %v806, %v691
        %v829 = vmul.f32 %v809, %v691
        %v830 = vmul.f32 %v812, %v691
        %v831 = vmul.f32 %v815, %v691
        %v832 = vmul.f32 %v818, %v691
        %v833 = vmul.f32 %v821, %v691
        %v834 = vmul.f32 %v824, %v691
        %v835 = vmul.f32 %v827, %v691
        %v836 = vadd.f32 %v828, 1e-05
        %v837 = vadd.f32 %v829, 1e-05
        %v838 = vadd.f32 %v830, 1e-05
        %v839 = vadd.f32 %v831, 1e-05
        %v840 = vadd.f32 %v832, 1e-05
        %v841 = vadd.f32 %v833, 1e-05
        %v842 = vadd.f32 %v834, 1e-05
        %v843 = vadd.f32 %v835, 1e-05
        %v844 = vrsqrt.pop %v836
        %v845 = vrsqrt.pop %v837
        %v846 = vrsqrt.pop %v838
        %v847 = vrsqrt.pop %v839
        %v848 = vrsqrt.pop %v840
        %v849 = vrsqrt.pop %v841
        %v850 = vrsqrt.pop %v842
        %v851 = vrsqrt.pop %v843
        %v852 = vmul.f32 %v788, %v844
        %v853 = vmul.f32 %v789, %v845
        %v854 = vmul.f32 %v790, %v846
        %v855 = vmul.f32 %v791, %v847
        %v856 = vmul.f32 %v792, %v848
        %v857 = vmul.f32 %v793, %v849
        %v858 = vmul.f32 %v794, %v850
        %v859 = vmul.f32 %v795, %v851
        %v860 = vpack.c.bf16 %v853, %v852
        %v861 = vpack.c.bf16 %v855, %v854
        %v862 = vpack.c.bf16 %v857, %v856
        %v863 = vpack.c.bf16 %v859, %v858
        %v864 = vld [vmem:[%s8] sm:$0xf]
        %v865 = vld [vmem:[%s8 + $0x4] sm:$0xf]
        %v866 = vld [vmem:[%s8 + $0x8] sm:$0xf]
        %v867 = vld [vmem:[%s8 + $0xc] sm:$0xf]
        %v868 = vld [vmem:[%s9] sm:$0x1]
        %v870 = vlaneseq
        %v871 = vshrl.u32 %v870, 7
        %v872 = vsub.s32 0, %v871
        %v873 = vrot.slane %v868, %v872
        %v879 = vunpack.c.l.b16 %v864
        %v880 = vunpack.c.l.b16 %v865
        %v881 = vunpack.c.l.b16 %v866
        %v882 = vunpack.c.l.b16 %v867
        %v883 = vpack.c.b16 %v880, %v879
        %v884 = vpack.c.b16 %v882, %v881
        %v888 = vsel %vm687, %v860, 0
        %v891 = vsel %vm687, %v861, 0
        %v894 = vsel %vm687, %v862, 0
        %v897 = vsel %vm687, %v863, 0
        %899 = vmatprep.subr.bf16.mxu0 0
        %900 = vmatpush1.bf16.msra.mxu0 0
        %901 = vmatprep.subr.bf16.mxu0 0
        %902 = vmatpush1.bf16.msra.mxu0 0
        %903 = vmatprep.subr.bf16.mxu0 0
        %904 = vmatpush1.bf16.msra.mxu0 0
        %905 = vmatprep.subr.bf16.mxu0 0
        %906 = vmatpush1.bf16.msra.mxu0 0
        %907 = vmatprep.subr.bf16.mxu0 0
        %908 = vmatpush1.bf16.msra.mxu0 0
        %909 = vmatprep.subr.bf16.mxu0 0
        %910 = vmatpush1.bf16.msra.mxu0 0
        %911 = vmatprep.subr.bf16.mxu0 0
        %912 = vmatpush1.bf16.msra.mxu0 %v884
        %913 = vmatprep.subr.bf16.mxu0 0
        %914 = vmatpush1.bf16.msra.mxu0 %v883
        %915 = vmatprep.subr.bf16.mxu0 0
        %916 = vmatpush2.bf16.msra.mxu0 0
        %917 = vmatprep.subr.bf16.mxu0 0
        %918 = vmatpush2.bf16.msra.mxu0 0
        %919 = vmatprep.subr.bf16.mxu0 0
        %920 = vmatpush2.bf16.msra.mxu0 0
        %921 = vmatprep.subr.bf16.mxu0 0
        %922 = vmatpush2.bf16.msra.mxu0 0
        %923 = vmatprep.subr.bf16.mxu0 0
        %924 = vmatpush2.bf16.msra.mxu0 0
        %925 = vmatprep.subr.bf16.mxu0 0
        %926 = vmatpush2.bf16.msra.mxu0 0
        %927 = vmatprep.subr.bf16.mxu0 0
        %928 = vmatpush2.bf16.msra.mxu0 0
        %929 = vmatprep.subr.bf16.mxu0 0
        %930 = vmatpush2.bf16.msra.mxu0 0
        %931 = vmatprep.mubr.bf16.mxu0 0
        %932 = vmatmul.mubr.bf16.gmra.mxu0 %v888
        %v933 = vpop.f32.mrf.mxu0
        %v934 = vadd.f32 %v873, %v933
        %v935 = vpop.f32.mrf.mxu0
        %v936 = vpop.f32.mrf.mxu0
        %v937 = vadd.f32 %v873, %v936
        %v938 = vpop.f32.mrf.mxu0
        %939 = vmatprep.mubr.bf16.mxu0 0
        %940 = vmatmul.mubr.bf16.gmra.mxu0 %v891
        %v941 = vpop.f32.mrf.mxu0
        %v942 = vadd.f32 %v873, %v941
        %v943 = vpop.f32.mrf.mxu0
        %v944 = vpop.f32.mrf.mxu0
        %v945 = vadd.f32 %v873, %v944
        %v946 = vpop.f32.mrf.mxu0
        %947 = vmatprep.mubr.bf16.mxu0 0
        %948 = vmatmul.mubr.bf16.gmra.mxu0 %v894
        %v949 = vpop.f32.mrf.mxu0
        %v950 = vadd.f32 %v873, %v949
        %v951 = vpop.f32.mrf.mxu0
        %v952 = vpop.f32.mrf.mxu0
        %v953 = vadd.f32 %v873, %v952
        %v954 = vpop.f32.mrf.mxu0
        %955 = vmatprep.mubr.bf16.mxu0 0
        %956 = vmatmul.mubr.bf16.gmra.mxu0 %v897
        %v957 = vpop.f32.mrf.mxu0
        %v958 = vadd.f32 %v873, %v957
        %v959 = vpop.f32.mrf.mxu0
        %v960 = vpop.f32.mrf.mxu0
        %v961 = vadd.f32 %v873, %v960
        %v962 = vpop.f32.mrf.mxu0
        %963 = vdwg.mxu0
        %v964 = vpack.c.bf16 %v937, %v934
        %v965 = vpack.c.bf16 %v945, %v942
        %v966 = vpack.c.bf16 %v953, %v950
        %v967 = vpack.c.bf16 %v961, %v958
        %v968 = vpack.c.bf16 %v715, %v715
        %v969 = vld [vmem:[%s6] sm:$0xf]
        %v970 = vld [vmem:[%s6 + $0x4] sm:$0xf]
        %v971 = vld [vmem:[%s6 + $0x8] sm:$0xf]
        %v972 = vld [vmem:[%s6 + $0xc] sm:$0xf]
        %v973 = vld [vmem:[%s7] sm:$0x1]
        %v975 = vlaneseq
        %v976 = vshrl.u32 %v975, 7
        %v977 = vsub.s32 0, %v976
        %v978 = vrot.slane %v973, %v977
        %v984 = vunpack.c.l.b16 %v969
        %v985 = vunpack.c.l.b16 %v970
        %v986 = vunpack.c.l.b16 %v971
        %v987 = vunpack.c.l.b16 %v972
        %v988 = vpack.c.b16 %v985, %v984
        %v989 = vpack.c.b16 %v987, %v986
        %v993 = vsel %vm687, %v968, 0
        %995 = vmatprep.subr.bf16.mxu0 0
        %996 = vmatpush1.bf16.msra.mxu0 0
        %997 = vmatprep.subr.bf16.mxu0 0
        %998 = vmatpush1.bf16.msra.mxu0 0
        %999 = vmatprep.subr.bf16.mxu0 0
        %1000 = vmatpush1.bf16.msra.mxu0 0
        %1001 = vmatprep.subr.bf16.mxu0 0
        %1002 = vmatpush1.bf16.msra.mxu0 0
        %1003 = vmatprep.subr.bf16.mxu0 0
        %1004 = vmatpush1.bf16.msra.mxu0 0
        %1005 = vmatprep.subr.bf16.mxu0 0
        %1006 = vmatpush1.bf16.msra.mxu0 0
        %1007 = vmatprep.subr.bf16.mxu0 0
        %1008 = vmatpush1.bf16.msra.mxu0 %v989
        %1009 = vmatprep.subr.bf16.mxu0 0
        %1010 = vmatpush1.bf16.msra.mxu0 %v988
        %1011 = vmatprep.subr.bf16.mxu0 0
        %1012 = vmatpush2.bf16.msra.mxu0 0
        %1013 = vmatprep.subr.bf16.mxu0 0
        %1014 = vmatpush2.bf16.msra.mxu0 0
        %1015 = vmatprep.subr.bf16.mxu0 0
        %1016 = vmatpush2.bf16.msra.mxu0 0
        %1017 = vmatprep.subr.bf16.mxu0 0
        %1018 = vmatpush2.bf16.msra.mxu0 0
        %1019 = vmatprep.subr.bf16.mxu0 0
        %1020 = vmatpush2.bf16.msra.mxu0 0
        %1021 = vmatprep.subr.bf16.mxu0 0
        %1022 = vmatpush2.bf16.msra.mxu0 0
        %1023 = vmatprep.subr.bf16.mxu0 0
        %1024 = vmatpush2.bf16.msra.mxu0 0
        %1025 = vmatprep.subr.bf16.mxu0 0
        %1026 = vmatpush2.bf16.msra.mxu0 0
        %1027 = vmatprep.mubr.bf16.mxu0 0
        %1028 = vmatmul.mubr.bf16.gmra.mxu0 %v993
        %v1029 = vpop.f32.mrf.mxu0
        %v1030 = vadd.f32 %v978, %v1029
        %v1031 = vpop.f32.mrf.mxu0
        %v1032 = vpop.f32.mrf.mxu0
        %v1033 = vpop.f32.mrf.mxu0
        %1034 = vdwg.mxu0
        %v1035 = vpack.c.bf16 %v1030, %v1030
        %v1037 = vsel %vm687, %v1035, 0
        %v1040 = vsel %vm687, %v964, 0
        %v1043 = vsel %vm687, %v965, 0
        %v1046 = vsel %vm687, %v966, 0
        %v1049 = vsel %vm687, %v967, 0
        %1051 = vmatprep.subr.bf16.mxu0 0
        %1052 = vmatpush1.bf16.xpose.msra.mxu0 0
        %1053 = vmatprep.subr.bf16.mxu0 0
        %1054 = vmatpush1.bf16.xpose.msra.mxu0 0
        %1055 = vmatprep.subr.bf16.mxu0 0
        %1056 = vmatpush1.bf16.xpose.msra.mxu0 0
        %1057 = vmatprep.subr.bf16.mxu0 0
        %1058 = vmatpush1.bf16.xpose.msra.mxu0 0
        %1059 = vmatprep.subr.bf16.mxu0 0
        %1060 = vmatpush1.bf16.xpose.msra.mxu0 %v1049
        %1061 = vmatprep.subr.bf16.mxu0 0
        %1062 = vmatpush1.bf16.xpose.msra.mxu0 %v1046
        %1063 = vmatprep.subr.bf16.mxu0 0
        %1064 = vmatpush1.bf16.xpose.msra.mxu0 %v1043
        %1065 = vmatprep.subr.bf16.mxu0 0
        %1066 = vmatpush1.bf16.xpose.msra.mxu0 %v1040
        %1067 = vmatprep.subr.bf16.mxu0 0
        %1068 = vmatpush2.bf16.xpose.msra.mxu0 0
        %1069 = vmatprep.subr.bf16.mxu0 0
        %1070 = vmatpush2.bf16.xpose.msra.mxu0 0
        %1071 = vmatprep.subr.bf16.mxu0 0
        %1072 = vmatpush2.bf16.xpose.msra.mxu0 0
        %1073 = vmatprep.subr.bf16.mxu0 0
        %1074 = vmatpush2.bf16.xpose.msra.mxu0 0
        %1075 = vmatprep.subr.bf16.mxu0 0
        %1076 = vmatpush2.bf16.xpose.msra.mxu0 0
        %1077 = vmatprep.subr.bf16.mxu0 0
        %1078 = vmatpush2.bf16.xpose.msra.mxu0 0
        %1079 = vmatprep.subr.bf16.mxu0 0
        %1080 = vmatpush2.bf16.xpose.msra.mxu0 0
        %1081 = vmatprep.subr.bf16.mxu0 0
        %1082 = vmatpush2.bf16.xpose.msra.mxu0 0
        %1083 = vmatprep.mubr.bf16.mxu0 0
        %1084 = vmatmul.mubr.bf16.gmra.mxu0 %v1037
        %v1085 = vpop.f32.mrf.mxu0
        %v1086 = vadd.f32 0.0, %v1085
        %v1087 = vpop.f32.mrf.mxu0
        %v1088 = vpop.f32.mrf.mxu0
        %v1089 = vpop.f32.mrf.mxu0
        %1090 = vdwg.mxu0
        %v1091 = vsel %vm632, %v1086, -inf
        %v1092 = vrot.slane %v1091, 4
        %v1093 = vmax.f32 %v1091, %v1092
        %v1094 = vrot.slane %v1093, 2
        %v1095 = vmax.f32 %v1093, %v1094
        %v1096 = vrot.slane %v1095, 1
        %v1097 = vmax.f32 %v1095, %v1096
        %v1098 = vlaneseq
        %v1099 = vshrl.u32 %v1098, 7
        %vm1100 = vcmp.eq.f32.partialorder %v1086, %v1097
        %v1101 = vsel %vm1100, %v1099, 8
        %v1102 = vsel %vm632, %v1101, 2147483647
        %v1103 = vrot.slane %v1102, 4
        %vm1104 = vcmp.lt.s32.totalorder %v1102, %v1103
        %v1105 = vsel %vm1104, %v1102, %v1103
        %v1106 = vrot.slane %v1105, 2
        %vm1107 = vcmp.lt.s32.totalorder %v1105, %v1106
        %v1108 = vsel %vm1107, %v1105, %v1106
        %v1109 = vrot.slane %v1108, 1
        %vm1110 = vcmp.lt.s32.totalorder %v1108, %v1109
        %v1111 = vsel %vm1110, %v1108, %v1109
        %vm1112 = vcmp.eq.s32.totalorder %v1099, %v1111
        %v1113 = vsel %vm1112, 1, 0
        %v1114 = vcvt.s32.f32 %v1113
        %v1115 = vpack.c.bf16 %v1114, %v1114
        %1120 = vrot.lane.b32.xlu0 %v964, 96
        %v1121 = vpop.permute.xlu0 %1120
        %1122 = vrot.lane.b32.xlu0 %v965, 96
        %v1123 = vpop.permute.xlu0 %1122
        %1124 = vrot.lane.b32.xlu0 %v966, 96
        %v1125 = vpop.permute.xlu0 %1124
        %1126 = vrot.lane.b32.xlu0 %v967, 96
        %v1127 = vpop.permute.xlu0 %1126
        %v1133 = vsel %vm632, %v1115, 0
        %1135 = vmatprep.subr.bf16.mxu0 0
        %1136 = vmatpush1.bf16.msra.mxu0 0
        %1137 = vmatprep.subr.bf16.mxu0 0
        %1138 = vmatpush1.bf16.msra.mxu0 0
        %1139 = vmatprep.subr.bf16.mxu0 0
        %1140 = vmatpush1.bf16.msra.mxu0 0
        %1141 = vmatprep.subr.bf16.mxu0 0
        %1142 = vmatpush1.bf16.msra.mxu0 0
        %1143 = vmatprep.subr.bf16.mxu0 0
        %1144 = vmatpush1.bf16.msra.mxu0 %v1127
        %1145 = vmatprep.subr.bf16.mxu0 0
        %1146 = vmatpush1.bf16.msra.mxu0 %v1125
        %1147 = vmatprep.subr.bf16.mxu0 0
        %1148 = vmatpush1.bf16.msra.mxu0 %v1123
        %1149 = vmatprep.subr.bf16.mxu0 0
        %1150 = vmatpush1.bf16.msra.mxu0 %v1121
        %1151 = vmatprep.subr.bf16.mxu0 0
        %1152 = vmatpush2.bf16.msra.mxu0 0
        %1153 = vmatprep.subr.bf16.mxu0 0
        %1154 = vmatpush2.bf16.msra.mxu0 0
        %1155 = vmatprep.subr.bf16.mxu0 0
        %1156 = vmatpush2.bf16.msra.mxu0 0
        %1157 = vmatprep.subr.bf16.mxu0 0
        %1158 = vmatpush2.bf16.msra.mxu0 0
        %1159 = vmatprep.subr.bf16.mxu0 0
        %1160 = vmatpush2.bf16.msra.mxu0 0
        %1161 = vmatprep.subr.bf16.mxu0 0
        %1162 = vmatpush2.bf16.msra.mxu0 0
        %1163 = vmatprep.subr.bf16.mxu0 0
        %1164 = vmatpush2.bf16.msra.mxu0 0
        %1165 = vmatprep.subr.bf16.mxu0 0
        %1166 = vmatpush2.bf16.msra.mxu0 0
        %1167 = vmatprep.mubr.bf16.mxu0 0
        %1168 = vmatmul.mubr.bf16.gmra.mxu0 %v1133
        %v1169 = vpop.f32.mrf.mxu0
        %v1170 = vadd.f32 0.0, %v1169
        %v1171 = vpop.f32.mrf.mxu0
        %v1172 = vpop.f32.mrf.mxu0
        %v1173 = vpop.f32.mrf.mxu0
        %1174 = vdwg.mxu0
        %v1175 = vsel %vm632, %v1114, 0.0
        %1176 = vadd.xlane.f32.xlu0 %v1175
        %v1177 = vpop.xlane.xlu0 %1176
        %v1178 = vadd.f32 %v1177, 1.0
        %v1179 = vrcp.pop %v1178
        %v1180 = vmul.f32 %v1170, %v1179
        %v1181 = vpack.c.bf16 %v1180, %v1180
        %v1182 = vld [vmem:[%s10] sm:$0xf]
        %v1183 = vld [vmem:[%s10 + $0x4] sm:$0xf]
        %v1184 = vld [vmem:[%s10 + $0x8] sm:$0xf]
        %v1185 = vld [vmem:[%s10 + $0xc] sm:$0xf]
        %v1186 = vld [vmem:[%s11] sm:$0x1]
        %v1188 = vlaneseq
        %v1189 = vshrl.u32 %v1188, 7
        %v1190 = vsub.s32 0, %v1189
        %v1191 = vrot.slane %v1186, %v1190
        %v1197 = vunpack.c.l.b16 %v1182
        %v1198 = vunpack.c.l.b16 %v1183
        %v1199 = vunpack.c.l.b16 %v1184
        %v1200 = vunpack.c.l.b16 %v1185
        %v1201 = vpack.c.b16 %v1198, %v1197
        %v1202 = vpack.c.b16 %v1200, %v1199
        %v1206 = vsel %vm687, %v1181, 0
        %1208 = vmatprep.subr.bf16.mxu0 0
        %1209 = vmatpush1.bf16.msra.mxu0 0
        %1210 = vmatprep.subr.bf16.mxu0 0
        %1211 = vmatpush1.bf16.msra.mxu0 0
        %1212 = vmatprep.subr.bf16.mxu0 0
        %1213 = vmatpush1.bf16.msra.mxu0 0
        %1214 = vmatprep.subr.bf16.mxu0 0
        %1215 = vmatpush1.bf16.msra.mxu0 0
        %1216 = vmatprep.subr.bf16.mxu0 0
        %1217 = vmatpush1.bf16.msra.mxu0 0
        %1218 = vmatprep.subr.bf16.mxu0 0
        %1219 = vmatpush1.bf16.msra.mxu0 0
        %1220 = vmatprep.subr.bf16.mxu0 0
        %1221 = vmatpush1.bf16.msra.mxu0 %v1202
        %1222 = vmatprep.subr.bf16.mxu0 0
        %1223 = vmatpush1.bf16.msra.mxu0 %v1201
        %1224 = vmatprep.subr.bf16.mxu0 0
        %1225 = vmatpush2.bf16.msra.mxu0 0
        %1226 = vmatprep.subr.bf16.mxu0 0
        %1227 = vmatpush2.bf16.msra.mxu0 0
        %1228 = vmatprep.subr.bf16.mxu0 0
        %1229 = vmatpush2.bf16.msra.mxu0 0
        %1230 = vmatprep.subr.bf16.mxu0 0
        %1231 = vmatpush2.bf16.msra.mxu0 0
        %1232 = vmatprep.subr.bf16.mxu0 0
        %1233 = vmatpush2.bf16.msra.mxu0 0
        %1234 = vmatprep.subr.bf16.mxu0 0
        %1235 = vmatpush2.bf16.msra.mxu0 0
        %1236 = vmatprep.subr.bf16.mxu0 0
        %1237 = vmatpush2.bf16.msra.mxu0 0
        %1238 = vmatprep.subr.bf16.mxu0 0
        %1239 = vmatpush2.bf16.msra.mxu0 0
        %1240 = vmatprep.mubr.bf16.mxu0 0
        %1241 = vmatmul.mubr.bf16.gmra.mxu0 %v1206
        %v1242 = vpop.f32.mrf.mxu0
        %v1243 = vadd.f32 %v1191, %v1242
        %v1244 = vpop.f32.mrf.mxu0
        %v1245 = vpop.f32.mrf.mxu0
        %v1246 = vpop.f32.mrf.mxu0
        %1247 = vdwg.mxu0
        %v1248 = vadd.f32 %v1243, %v715
        %v1249 = vld [vmem:[%s12] sm:$0x1]
        %v1250 = vld [vmem:[%s13] sm:$0x1]
        %v1251 = vsel %vm687, %v1248, 0.0
        %1252 = vadd.xlane.f32.xlu0 %v1251
        %v1253 = vpop.xlane.xlu0 %1252
        %v1254 = vmul.f32 %v1253, %v691
        %v1255 = vsub.f32 %v1248, %v1254
        %v1256 = vmul.f32 %v1255, %v1255
        %v1257 = vsel %vm687, %v1256, 0.0
        %1258 = vadd.xlane.f32.xlu0 %v1257
        %v1259 = vpop.xlane.xlu0 %1258
        %v1260 = vmul.f32 %v1259, %v691
        %v1261 = vadd.f32 %v1260, 1e-05
        %v1262 = vrsqrt.pop %v1261
        %v1263 = vmul.f32 %v1255, %v1262
        %v1265 = vlaneseq
        %v1266 = vshrl.u32 %v1265, 7
        %v1267 = vsub.s32 0, %v1266
        %v1268 = vrot.slane %v1249, %v1267
        %v1270 = vmul.f32 %v1263, %v1268
        %v1272 = vlaneseq
        %v1273 = vshrl.u32 %v1272, 7
        %v1274 = vsub.s32 0, %v1273
        %v1275 = vrot.slane %v1250, %v1274
        %v1277 = vadd.f32 %v1270, %v1275
        %v1278 = vpack.c.bf16 %v1277, %v1277
        %v1279 = vld [vmem:[%s14] sm:$0xf]
        %v1280 = vld [vmem:[%s14 + $0x4] sm:$0xf]
        %v1281 = vld [vmem:[%s14 + $0x8] sm:$0xf]
        %v1282 = vld [vmem:[%s14 + $0xc] sm:$0xf]
        %v1283 = vld [vmem:[%s15] sm:$0x1]
        %v1285 = vlaneseq
        %v1286 = vshrl.u32 %v1285, 7
        %v1287 = vsub.s32 0, %v1286
        %v1288 = vrot.slane %v1283, %v1287
        %v1294 = vunpack.c.l.b16 %v1279
        %v1295 = vunpack.c.l.b16 %v1280
        %v1296 = vunpack.c.l.b16 %v1281
        %v1297 = vunpack.c.l.b16 %v1282
        %v1298 = vpack.c.b16 %v1295, %v1294
        %v1299 = vpack.c.b16 %v1297, %v1296
        %v1303 = vsel %vm687, %v1278, 0
        %1305 = vmatprep.subr.bf16.mxu0 0
        %1306 = vmatpush1.bf16.msra.mxu0 0
        %1307 = vmatprep.subr.bf16.mxu0 0
        %1308 = vmatpush1.bf16.msra.mxu0 0
        %1309 = vmatprep.subr.bf16.mxu0 0
        %1310 = vmatpush1.bf16.msra.mxu0 0
        %1311 = vmatprep.subr.bf16.mxu0 0
        %1312 = vmatpush1.bf16.msra.mxu0 0
        %1313 = vmatprep.subr.bf16.mxu0 0
        %1314 = vmatpush1.bf16.msra.mxu0 0
        %1315 = vmatprep.subr.bf16.mxu0 0
        %1316 = vmatpush1.bf16.msra.mxu0 0
        %1317 = vmatprep.subr.bf16.mxu0 0
        %1318 = vmatpush1.bf16.msra.mxu0 %v1299
        %1319 = vmatprep.subr.bf16.mxu0 0
        %1320 = vmatpush1.bf16.msra.mxu0 %v1298
        %1321 = vmatprep.subr.bf16.mxu0 0
        %1322 = vmatpush2.bf16.msra.mxu0 0
        %1323 = vmatprep.subr.bf16.mxu0 0
        %1324 = vmatpush2.bf16.msra.mxu0 0
        %1325 = vmatprep.subr.bf16.mxu0 0
        %1326 = vmatpush2.bf16.msra.mxu0 0
        %1327 = vmatprep.subr.bf16.mxu0 0
        %1328 = vmatpush2.bf16.msra.mxu0 0
        %1329 = vmatprep.subr.bf16.mxu0 0
        %1330 = vmatpush2.bf16.msra.mxu0 0
        %1331 = vmatprep.subr.bf16.mxu0 0
        %1332 = vmatpush2.bf16.msra.mxu0 0
        %1333 = vmatprep.subr.bf16.mxu0 0
        %1334 = vmatpush2.bf16.msra.mxu0 0
        %1335 = vmatprep.subr.bf16.mxu0 0
        %1336 = vmatpush2.bf16.msra.mxu0 0
        %1337 = vmatprep.mubr.bf16.mxu0 0
        %1338 = vmatmul.mubr.bf16.gmra.mxu0 %v1303
        %v1339 = vpop.f32.mrf.mxu0
        %v1340 = vadd.f32 %v1288, %v1339
        %v1341 = vpop.f32.mrf.mxu0
        %v1342 = vpop.f32.mrf.mxu0
        %v1343 = vpop.f32.mrf.mxu0
        %1344 = vdwg.mxu0
        %v1345 = vmul.f32 %v1340, 0.5
        %v1346 = vmul.f32 %v1340, %v1340
        %v1347 = vmul.f32 %v1346, %v1340
        %v1348 = vmul.f32 %v1347, 0.044715
        %v1349 = vadd.f32 %v1340, %v1348
        %v1350 = vmul.f32 %v1349, 0.7978846
        %v1351 = vtanh.pop %v1350
        %v1352 = vadd.f32 %v1351, 1.0
        %v1353 = vmul.f32 %v1345, %v1352
        %v1354 = vpack.c.bf16 %v1353, %v1353
        %v1355 = vld [vmem:[%s16] sm:$0xf]
        %v1356 = vld [vmem:[%s16 + $0x4] sm:$0xf]
        %v1357 = vld [vmem:[%s16 + $0x8] sm:$0xf]
        %v1358 = vld [vmem:[%s16 + $0xc] sm:$0xf]
        %v1359 = vld [vmem:[%s16 + $0x10] sm:$0xf]
        %v1360 = vld [vmem:[%s16 + $0x14] sm:$0xf]
        %v1361 = vld [vmem:[%s16 + $0x18] sm:$0xf]
        %v1362 = vld [vmem:[%s16 + $0x1c] sm:$0xf]
        %v1363 = vld [vmem:[%s16 + $0x20] sm:$0xf]
        %v1364 = vld [vmem:[%s16 + $0x24] sm:$0xf]
        %v1365 = vld [vmem:[%s16 + $0x28] sm:$0xf]
        %v1366 = vld [vmem:[%s16 + $0x2c] sm:$0xf]
        %v1367 = vld [vmem:[%s16 + $0x30] sm:$0xf]
        %v1368 = vld [vmem:[%s16 + $0x34] sm:$0xf]
        %v1369 = vld [vmem:[%s16 + $0x38] sm:$0xf]
        %v1370 = vld [vmem:[%s16 + $0x3c] sm:$0xf]
        %v1371 = vld [vmem:[%s17] sm:$0x1]
        %v1373 = vlaneseq
        %v1374 = vshrl.u32 %v1373, 7
        %v1375 = vsub.s32 0, %v1374
        %v1376 = vrot.slane %v1371, %v1375
        %v1394 = vunpack.c.l.b16 %v1355
        %v1395 = vunpack.c.l.b16 %v1356
        %v1396 = vunpack.c.l.b16 %v1357
        %v1397 = vunpack.c.l.b16 %v1358
        %v1398 = vunpack.c.l.b16 %v1359
        %v1399 = vunpack.c.l.b16 %v1360
        %v1400 = vunpack.c.l.b16 %v1361
        %v1401 = vunpack.c.l.b16 %v1362
        %v1402 = vunpack.c.l.b16 %v1363
        %v1403 = vunpack.c.l.b16 %v1364
        %v1404 = vunpack.c.l.b16 %v1365
        %v1405 = vunpack.c.l.b16 %v1366
        %v1406 = vunpack.c.l.b16 %v1367
        %v1407 = vunpack.c.l.b16 %v1368
        %v1408 = vunpack.c.l.b16 %v1369
        %v1409 = vunpack.c.l.b16 %v1370
        %v1410 = vpack.c.b16 %v1395, %v1394
        %v1411 = vpack.c.b16 %v1397, %v1396
        %v1412 = vpack.c.b16 %v1399, %v1398
        %v1413 = vpack.c.b16 %v1401, %v1400
        %v1414 = vpack.c.b16 %v1403, %v1402
        %v1415 = vpack.c.b16 %v1405, %v1404
        %v1416 = vpack.c.b16 %v1407, %v1406
        %v1417 = vpack.c.b16 %v1409, %v1408
        %1426 = vmatprep.subr.bf16.mxu0 0
        %1427 = vmatpush1.bf16.msra.mxu0 %v1417
        %1428 = vmatprep.subr.bf16.mxu0 0
        %1429 = vmatpush1.bf16.msra.mxu0 %v1416
        %1430 = vmatprep.subr.bf16.mxu0 0
        %1431 = vmatpush1.bf16.msra.mxu0 %v1415
        %1432 = vmatprep.subr.bf16.mxu0 0
        %1433 = vmatpush1.bf16.msra.mxu0 %v1414
        %1434 = vmatprep.subr.bf16.mxu0 0
        %1435 = vmatpush1.bf16.msra.mxu0 %v1413
        %1436 = vmatprep.subr.bf16.mxu0 0
        %1437 = vmatpush1.bf16.msra.mxu0 %v1412
        %1438 = vmatprep.subr.bf16.mxu0 0
        %1439 = vmatpush1.bf16.msra.mxu0 %v1411
        %1440 = vmatprep.subr.bf16.mxu0 0
        %1441 = vmatpush1.bf16.msra.mxu0 %v1410
        %1442 = vmatprep.subr.bf16.mxu0 0
        %1443 = vmatpush2.bf16.msra.mxu0 0
        %1444 = vmatprep.subr.bf16.mxu0 0
        %1445 = vmatpush2.bf16.msra.mxu0 0
        %1446 = vmatprep.subr.bf16.mxu0 0
        %1447 = vmatpush2.bf16.msra.mxu0 0
        %1448 = vmatprep.subr.bf16.mxu0 0
        %1449 = vmatpush2.bf16.msra.mxu0 0
        %1450 = vmatprep.subr.bf16.mxu0 0
        %1451 = vmatpush2.bf16.msra.mxu0 0
        %1452 = vmatprep.subr.bf16.mxu0 0
        %1453 = vmatpush2.bf16.msra.mxu0 0
        %1454 = vmatprep.subr.bf16.mxu0 0
        %1455 = vmatpush2.bf16.msra.mxu0 0
        %1456 = vmatprep.subr.bf16.mxu0 0
        %1457 = vmatpush2.bf16.msra.mxu0 0
        %1458 = vmatprep.mubr.bf16.mxu0 0
        %1459 = vmatmul.mubr.bf16.gmra.mxu0 %v1354
        %v1460 = vpop.f32.mrf.mxu0
        %v1461 = vadd.f32 %v1376, %v1460
        %v1462 = vpop.f32.mrf.mxu0
        %v1463 = vpop.f32.mrf.mxu0
        %v1464 = vpop.f32.mrf.mxu0
        %1465 = vdwg.mxu0
        %v1466 = vadd.f32 %v1248, %v1461
        %1467 = vst.msk [vmem:[%s581] sm:$0xff] %vm687, %v1466
        %s1468 = sand.u32 %s428, 1
        %s1469 = scalar_lea.sflag [#allocation3], %s1468
        %s1470 = sand.u32 %s428, 1
        %s1471 = smul.addr %s1470, 8
        %s1472 = scalar_lea.vmem [#allocation2], %s1471
        // Predicated region
        $region93: #{tpu_custom_call.1} parent=91 // pred_check
          %p1473 = pneg %p438
        $region94: #{tpu_custom_call.1} parent=91 // pred_check_branch
          %1475 = sbr.rel (%p1473) target = $region96
        $region95: #{tpu_custom_call.1} parent=91 // pred_region
          %s1477 = ssub.s32 128, 128
          %1478 = vsyncadd %s1469, %s1477
          %s1479 = smul.addr %s32, 128
          %s1480 = scalar_lea.hbm %s18, %s1479
          %s1482 = sshll.u32 %s1472, 4
          %s1483 = int_to_ptr.vmem [resolvable:$true] %s1482
          %1485 = dma.vmem_to_hbm [thread:$0]  %s1483, 128, %s1480, %s1469
        $region96: #{tpu_custom_call.1} parent=91 // pred_fallthru
          _
      $region92: #{tpu_custom_call.1} parent=5 // pred_fallthru
        _
      %p1486 = scmp.le.s32.totalorder 2, %s27
      // Predicated region
      $region97: #{tpu_custom_call.1} parent=5 // pred_check
        %p1487 = pneg %p1486
      $region98: #{tpu_custom_call.1} parent=5 // pred_check_branch
        %1489 = sbr.rel (%p1487) target = $region100
      $region99: #{tpu_custom_call.1} parent=5 // pred_region
        %s1490 = ssub.s32 %s27, 2
        // Predicated region
        $region101: #{tpu_custom_call.1} parent=99 // pred_check
          %p1491 = pneg %p444
        $region102: #{tpu_custom_call.1} parent=99 // pred_check_branch
          %1493 = sbr.rel (%p1491) target = $region104
        $region103: #{tpu_custom_call.1} parent=99 // pred_region
          %s1494 = sand.u32 %s429, 1
          %s1495 = scalar_lea.sflag [#allocation3], %s1494
          %s1496 = sand.u32 %s429, 1
          %s1497 = smul.addr %s1496, 8
          %s1498 = scalar_lea.vmem [#allocation2], %s1497
          %1499 = dma.done %s1495, 128
        $region104: #{tpu_custom_call.1} parent=99 // pred_fallthru
          _
      $region100: #{tpu_custom_call.1} parent=5 // pred_fallthru
        _
    $region6: #{tpu_custom_call.1} parent=1 // loop_footer
      %s31 = sadd.s32 1, %s27
    $region7: #{tpu_custom_call.1} parent=1 // loop_footer_branch
      %26 = sbr.rel target = $region3
    $region8: #{tpu_custom_call.1} parent=1 // loop_exit
      _
    %1500 = vsyncpa [#allocation3], 1
    %s1501 = scalar_lea.sflag [#allocation3], 1
    %1502 = vsyncpa %s1501, 1

</llo_original>
